<compile_context>
chip_gen: v6e
topology: v6e:2x2x1
jax: 0.10.0
libtpu: 0.0.40
codegen_flags: <defaults>
</compile_context>

<pallas_src>
import functools

import jax
import jax.numpy as jnp
from jax import lax
from jax.experimental import pallas as pl
from jax.experimental.pallas import tpu as pltpu

# ---- module constants (from gpt.py) ----
N_EMBD = 384
BLOCK_SIZE = 256   # max context; we only require T <= BLOCK_SIZE
Q_CHUNK = 128      # query-row chunk (limits live (qc, kT) score tile)


# ---------------------------------------------------------------------------
# Fused kernel: one batch row per grid step.
#   x:      (1, T, C)        bf16
#   w_qkv:  (C, 3*H*hs)      bf16  [Q(all heads) | K | V], 1/sqrt(hs) folded into Q
#   w_proj: (H*hs, C)        bf16  projection weight (already transposed)
#   b_proj: (1, C)           f32
#   o:      (1, T, C)        f32
#   head_cat_ref: (QC, H*hs) bf16 VMEM scratch (per-chunk concat of head outputs)
# ---------------------------------------------------------------------------
def _mha_fused_kernel(x_ref, w_qkv_ref, w_proj_ref, b_proj_ref, o_ref,
                      head_cat_ref, *, num_heads, head_size):
    H, hs = num_heads, head_size
    Hhs = H * hs
    T = x_ref.shape[1]

    x = x_ref[0]                                                          # (T, C) bf16
    # One wide bf16 MXU matmul for all heads' Q|K|V (f32 accumulate), cast once to
    # bf16 so every downstream matmul also runs at bf16 MXU rate.
    qkv = jnp.dot(x, w_qkv_ref[...],
                  preferred_element_type=jnp.float32).astype(jnp.bfloat16)  # (T, 3*Hhs)
    bias = b_proj_ref[...]                                                # (1, C) f32

    neg_inf = jnp.float32(-jnp.inf)

    q_start = 0
    while q_start < T:                       # static (trace-time) loop over query chunks
        qc = min(Q_CHUNK, T - q_start)
        kT = q_start + qc                    # causal key extent for this chunk

        row = lax.broadcasted_iota(jnp.int32, (qc, kT), 0) + q_start
        col = lax.broadcasted_iota(jnp.int32, (qc, kT), 1)
        causal = col <= row                  # diagonal always unmasked -> finite softmax

        for h in range(H):                   # static loop over heads
            q = qkv[q_start:q_start + qc, h * hs:(h + 1) * hs]            # (qc, hs)
            k = qkv[:kT, Hhs + h * hs:Hhs + (h + 1) * hs]                 # (kT, hs)
            v = qkv[:kT, 2 * Hhs + h * hs:2 * Hhs + (h + 1) * hs]         # (kT, hs)

            # Contract last dims directly (no .T -> no XLU relayout).
            s = lax.dot_general(q, k,
                                dimension_numbers=(((1,), (1,)), ((), ())),
                                preferred_element_type=jnp.float32)       # (qc, kT) f32
            s = jnp.where(causal, s, neg_inf)
            s = s - jnp.max(s, axis=-1, keepdims=True)
            p = jnp.exp(s)
            denom = jnp.sum(p, axis=-1, keepdims=True)                    # (qc, 1)
            p = p * pl.reciprocal(denom, approx=True)   # EUP vrcp + broadcast multiply

            head_o = jnp.dot(p.astype(jnp.bfloat16), v,
                             preferred_element_type=jnp.float32)          # (qc, hs) f32
            # Single write per head into the concat scratch; keeps only the score
            # tile live in vregs across the head loop (no (qc,C) accumulator).
            head_cat_ref[0:qc, h * hs:(h + 1) * hs] = head_o.astype(jnp.bfloat16)

        # Fused output projection, ONCE per chunk: (qc, Hhs) @ (Hhs, C) + bias.
        out = jnp.dot(head_cat_ref[0:qc, :], w_proj_ref[...],
                      preferred_element_type=jnp.float32) + bias          # (qc, C) f32

        if qc == T:
            o_ref[0] = out.astype(o_ref.dtype)
        else:
            o_ref[0, pl.ds(q_start, qc), :] = out.astype(o_ref.dtype)
        q_start += qc


def multi_head_attention(x, wq, wk, wv, w_proj_t, b_proj, *, num_heads, head_size):
    """Pallas MultiHeadAttention forward (eval mode).

    x        : (B, T, C)            float32
    wq/wk/wv : (H, C, head_size)    stacked per-head Linear weights (already W.T)
    w_proj_t : (H*head_size, C)     projection weight transposed
    b_proj   : (C,)                 projection bias
    returns  : (B, T, C) float32
    """
    B, T, C = x.shape
    H, hs = num_heads, head_size
    assert C == N_EMBD and T <= BLOCK_SIZE
    assert wq.shape == (H, C, hs) and wk.shape == (H, C, hs) and wv.shape == (H, C, hs)
    assert w_proj_t.shape == (H * hs, C)

    scale = hs ** (-0.5)

    # Stack per-head weights into one (C, H*hs) slab per Q/K/V, concatenated along
    # the last dim into (C, 3*H*hs). Attention scale folded into Q weights.
    def _stack(w):
        return jnp.transpose(w, (1, 0, 2)).reshape(C, H * hs)

    w_qkv = jnp.concatenate([_stack(wq * scale), _stack(wk), _stack(wv)],
                            axis=-1).astype(jnp.bfloat16)
    w_proj_bf = w_proj_t.astype(jnp.bfloat16)
    x_bf = x.astype(jnp.bfloat16)
    b_proj_2d = b_proj.reshape(1, C).astype(jnp.float32)

    QC = min(Q_CHUNK, T)
    kernel = functools.partial(_mha_fused_kernel, num_heads=H, head_size=hs)

    return pl.pallas_call(
        kernel,
        out_shape=jax.ShapeDtypeStruct((B, T, C), jnp.float32),
        grid_spec=pltpu.PrefetchScalarGridSpec(
            num_scalar_prefetch=0,
            grid=(B,),
            in_specs=[
                pl.BlockSpec((1, T, C), lambda b: (b, 0, 0)),
                pl.BlockSpec((C, 3 * H * hs), lambda b: (0, 0)),   # VMEM-resident
                pl.BlockSpec((H * hs, C), lambda b: (0, 0)),       # VMEM-resident
                pl.BlockSpec((1, C), lambda b: (0, 0)),            # VMEM-resident
            ],
            out_specs=pl.BlockSpec((1, T, C), lambda b: (b, 0, 0)),
            scratch_shapes=[pltpu.VMEM((QC, H * hs), jnp.bfloat16)],
        ),
        compiler_params=pltpu.CompilerParams(
            dimension_semantics=("parallel",)),
    )(x_bf, w_qkv, w_proj_bf, b_proj_2d)


# ---------------------------------------------------------------------------
# Pure-JAX reference (mirrors the PyTorch forward, dropout = identity), f32.
# ---------------------------------------------------------------------------
def reference_mha(x, wq, wk, wv, w_proj_t, b_proj, *, num_heads, head_size):
    B, T, C = x.shape
    outs = []
    for h in range(num_heads):
        q = x @ wq[h]
        k = x @ wk[h]
        v = x @ wv[h]
        wei = (q @ jnp.swapaxes(k, -2, -1)) * head_size ** (-0.5)
        mask = jnp.tril(jnp.ones((T, T), dtype=bool))
        wei = jnp.where(mask, wei, -jnp.inf)
        wei = jax.nn.softmax(wei, axis=-1)
        outs.append(wei @ v)
    cat = jnp.concatenate(outs, axis=-1)
    return cat @ w_proj_t + b_proj


if __name__ == "__main__":
    # Small-but-consistent shapes: n_embd fixed at 384 by the module.
    B, T = 2, 8
    num_heads, head_size = 6, 64             # 6 * 64 = 384 = n_embd
    C = N_EMBD

    key = jax.random.PRNGKey(0)
    kx, kq, kk, kv, kp, kb = jax.random.split(key, 6)

    x = jax.random.normal(kx, (B, T, C), dtype=jnp.float32)

    # Deterministic parameter init (uniform, Linear-style fan-in scaling).
    lin_scale = 1.0 / (C ** 0.5)
    wq = jax.random.uniform(kq, (num_heads, C, head_size), jnp.float32,
                            -lin_scale, lin_scale)
    wk = jax.random.uniform(kk, (num_heads, C, head_size), jnp.float32,
                            -lin_scale, lin_scale)
    wv = jax.random.uniform(kv, (num_heads, C, head_size), jnp.float32,
                            -lin_scale, lin_scale)
    proj_scale = 1.0 / ((num_heads * head_size) ** 0.5)
    w_proj_t = jax.random.uniform(kp, (num_heads * head_size, C), jnp.float32,
                                  -proj_scale, proj_scale)
    b_proj = jax.random.uniform(kb, (C,), jnp.float32, -proj_scale, proj_scale)

    out = multi_head_attention(x, wq, wk, wv, w_proj_t, b_proj,
                               num_heads=num_heads, head_size=head_size)
    out = jax.block_until_ready(out)

    ref = reference_mha(x, wq, wk, wv, w_proj_t, b_proj,
                        num_heads=num_heads, head_size=head_size)
    assert out.shape == (B, T, C)
    # bf16 MXU operands + approx reciprocal -> loosened tolerance vs f32 reference.
    assert jnp.allclose(out, ref, atol=3e-2, rtol=3e-2), "mismatch vs reference"

    print("KERNEL_OK")
</pallas_src>

<mosaic_0001>
module attributes {stable_mosaic.version = 11 : i64} {
  func.func @_mha_fused_kernel(%arg0: i32, %arg1: memref<1x8x384xbf16, #tpu.memory_space<vmem>>, %arg2: memref<384x1152xbf16, #tpu.memory_space<vmem>>, %arg3: memref<384x384xbf16, #tpu.memory_space<vmem>>, %arg4: memref<1x384xf32, #tpu.memory_space<vmem>>, %arg5: memref<1x8x384xf32, #tpu.memory_space<vmem>>, %arg6: memref<8x384xbf16, #tpu.memory_space<vmem>>) attributes {dimension_semantics = [#tpu.dimension_semantics<parallel>], iteration_bounds = array<i64: 2>, scalar_prefetch = 0 : i64, scratch_operands = 1 : i64, tpu.core_type = #tpu.core_type<tc>, window_params = [{transform_indices = @transform_0, window_bounds = array<i64: 1, 8, 384>}, {pipeline_mode = #tpu.pipeline_mode<synchronous>, transform_indices = @transform_1, window_bounds = array<i64: 384, 1152>}, {pipeline_mode = #tpu.pipeline_mode<synchronous>, transform_indices = @transform_2, window_bounds = array<i64: 384, 384>}, {pipeline_mode = #tpu.pipeline_mode<synchronous>, transform_indices = @transform_3, window_bounds = array<i64: 1, 384>}, {transform_indices = @transform_4, window_bounds = array<i64: 1, 8, 384>}]} {
    %c0 = arith.constant 0 : index
    %c0_0 = arith.constant 0 : index
    %c0_1 = arith.constant 0 : index
    %0 = vector.load %arg1[%c0, %c0_0, %c0_1] : memref<1x8x384xbf16, #tpu.memory_space<vmem>>, vector<1x8x384xbf16>
    %1 = vector.shape_cast %0 : vector<1x8x384xbf16> to vector<8x384xbf16>
    %c0_2 = arith.constant 0 : index
    %c0_3 = arith.constant 0 : index
    %2 = vector.load %arg2[%c0_2, %c0_3] : memref<384x1152xbf16, #tpu.memory_space<vmem>>, vector<384x1152xbf16>
    %cst = arith.constant dense<0.000000e+00> : vector<8x1152xf32>
    %3 = tpu.matmul %1, %2, %cst {dimension_numbers = #tpu.dot_dimension_numbers<[1], [0], [0], [1], [0, 0, 1, 1], [], []>} : vector<8x384xbf16>, vector<384x1152xbf16>, vector<8x1152xf32> -> vector<8x1152xf32>
    %4 = arith.truncf %3 : vector<8x1152xf32> to vector<8x1152xbf16>
    %c0_4 = arith.constant 0 : index
    %c0_5 = arith.constant 0 : index
    %5 = vector.load %arg4[%c0_4, %c0_5] : memref<1x384xf32, #tpu.memory_space<vmem>>, vector<1x384xf32>
    %6 = tpu.iota {dimensions = array<i32: 0>} : vector<8x8xi32>
    %c0_i32 = arith.constant 0 : i32
    %7 = vector.broadcast %c0_i32 : i32 to vector<8x8xi32>
    %8 = arith.addi %6, %7 : vector<8x8xi32>
    %9 = tpu.iota {dimensions = array<i32: 1>} : vector<8x8xi32>
    %10 = arith.cmpi sle, %9, %8 : vector<8x8xi32>
    %11 = vector.extract_strided_slice %4 {offsets = [0, 0], sizes = [8, 64], strides = [1, 1]} : vector<8x1152xbf16> to vector<8x64xbf16>
    %12 = vector.extract_strided_slice %4 {offsets = [0, 384], sizes = [8, 64], strides = [1, 1]} : vector<8x1152xbf16> to vector<8x64xbf16>
    %13 = vector.extract_strided_slice %4 {offsets = [0, 768], sizes = [8, 64], strides = [1, 1]} : vector<8x1152xbf16> to vector<8x64xbf16>
    %cst_6 = arith.constant dense<0.000000e+00> : vector<8x8xf32>
    %14 = tpu.matmul %11, %12, %cst_6 {dimension_numbers = #tpu.dot_dimension_numbers<[1], [1], [0], [0], [0, 0, 1, 0], [], []>} : vector<8x64xbf16>, vector<8x64xbf16>, vector<8x8xf32> -> vector<8x8xf32>
    %cst_7 = arith.constant 0xFF800000 : f32
    %15 = vector.broadcast %cst_7 : f32 to vector<8x8xf32>
    %16 = arith.select %10, %14, %15 : vector<8x8xi1>, vector<8x8xf32>
    %cst_8 = arith.constant dense<0xFF800000> : vector<8xf32>
    %17 = vector.multi_reduction <maximumf>, %16, %cst_8 [1] : vector<8x8xf32> to vector<8xf32>
    %18 = vector.shape_cast %17 : vector<8xf32> to vector<8x1xf32>
    %19 = vector.broadcast %18 : vector<8x1xf32> to vector<8x8xf32>
    %20 = arith.subf %16, %19 : vector<8x8xf32>
    %21 = math.exp %20 : vector<8x8xf32>
    %cst_9 = arith.constant dense<0.000000e+00> : vector<8xf32>
    %22 = vector.multi_reduction <add>, %21, %cst_9 [1] : vector<8x8xf32> to vector<8xf32>
    %23 = vector.shape_cast %22 : vector<8xf32> to vector<8x1xf32>
    %24 = tpu.reciprocal %23 {approx = true} : vector<8x1xf32> -> vector<8x1xf32>
    %25 = vector.broadcast %24 : vector<8x1xf32> to vector<8x8xf32>
    %26 = arith.mulf %21, %25 : vector<8x8xf32>
    %27 = arith.truncf %26 : vector<8x8xf32> to vector<8x8xbf16>
    %cst_10 = arith.constant dense<0.000000e+00> : vector<8x64xf32>
    %28 = tpu.matmul %27, %13, %cst_10 {dimension_numbers = #tpu.dot_dimension_numbers<[1], [0], [0], [1], [0, 0, 1, 1], [], []>} : vector<8x8xbf16>, vector<8x64xbf16>, vector<8x64xf32> -> vector<8x64xf32>
    %29 = arith.truncf %28 : vector<8x64xf32> to vector<8x64xbf16>
    %c0_11 = arith.constant 0 : index
    %c0_12 = arith.constant 0 : index
    %30 = vector.load %arg6[%c0_11, %c0_12] : memref<8x384xbf16, #tpu.memory_space<vmem>>, vector<8x64xbf16>
    tpu.vector_store %arg6[%c0_11, %c0_12], %29 {strides = array<i32>} : memref<8x384xbf16, #tpu.memory_space<vmem>>, vector<8x64xbf16>,
    %31 = vector.extract_strided_slice %4 {offsets = [0, 64], sizes = [8, 64], strides = [1, 1]} : vector<8x1152xbf16> to vector<8x64xbf16>
    %32 = vector.extract_strided_slice %4 {offsets = [0, 448], sizes = [8, 64], strides = [1, 1]} : vector<8x1152xbf16> to vector<8x64xbf16>
    %33 = vector.extract_strided_slice %4 {offsets = [0, 832], sizes = [8, 64], strides = [1, 1]} : vector<8x1152xbf16> to vector<8x64xbf16>
    %cst_13 = arith.constant dense<0.000000e+00> : vector<8x8xf32>
    %34 = tpu.matmul %31, %32, %cst_13 {dimension_numbers = #tpu.dot_dimension_numbers<[1], [1], [0], [0], [0, 0, 1, 0], [], []>} : vector<8x64xbf16>, vector<8x64xbf16>, vector<8x8xf32> -> vector<8x8xf32>
    %cst_14 = arith.constant 0xFF800000 : f32
    %35 = vector.broadcast %cst_14 : f32 to vector<8x8xf32>
    %36 = arith.select %10, %34, %35 : vector<8x8xi1>, vector<8x8xf32>
    %cst_15 = arith.constant dense<0xFF800000> : vector<8xf32>
    %37 = vector.multi_reduction <maximumf>, %36, %cst_15 [1] : vector<8x8xf32> to vector<8xf32>
    %38 = vector.shape_cast %37 : vector<8xf32> to vector<8x1xf32>
    %39 = vector.broadcast %38 : vector<8x1xf32> to vector<8x8xf32>
    %40 = arith.subf %36, %39 : vector<8x8xf32>
    %41 = math.exp %40 : vector<8x8xf32>
    %cst_16 = arith.constant dense<0.000000e+00> : vector<8xf32>
    %42 = vector.multi_reduction <add>, %41, %cst_16 [1] : vector<8x8xf32> to vector<8xf32>
    %43 = vector.shape_cast %42 : vector<8xf32> to vector<8x1xf32>
    %44 = tpu.reciprocal %43 {approx = true} : vector<8x1xf32> -> vector<8x1xf32>
    %45 = vector.broadcast %44 : vector<8x1xf32> to vector<8x8xf32>
    %46 = arith.mulf %41, %45 : vector<8x8xf32>
    %47 = arith.truncf %46 : vector<8x8xf32> to vector<8x8xbf16>
    %cst_17 = arith.constant dense<0.000000e+00> : vector<8x64xf32>
    %48 = tpu.matmul %47, %33, %cst_17 {dimension_numbers = #tpu.dot_dimension_numbers<[1], [0], [0], [1], [0, 0, 1, 1], [], []>} : vector<8x8xbf16>, vector<8x64xbf16>, vector<8x64xf32> -> vector<8x64xf32>
    %49 = arith.truncf %48 : vector<8x64xf32> to vector<8x64xbf16>
    %c0_18 = arith.constant 0 : index
    %c64 = arith.constant 64 : index
    %50 = vector.load %arg6[%c0_18, %c64] : memref<8x384xbf16, #tpu.memory_space<vmem>>, vector<8x64xbf16>
    tpu.vector_store %arg6[%c0_18, %c64], %49 {strides = array<i32>} : memref<8x384xbf16, #tpu.memory_space<vmem>>, vector<8x64xbf16>,
    %51 = vector.extract_strided_slice %4 {offsets = [0, 128], sizes = [8, 64], strides = [1, 1]} : vector<8x1152xbf16> to vector<8x64xbf16>
    %52 = vector.extract_strided_slice %4 {offsets = [0, 512], sizes = [8, 64], strides = [1, 1]} : vector<8x1152xbf16> to vector<8x64xbf16>
    %53 = vector.extract_strided_slice %4 {offsets = [0, 896], sizes = [8, 64], strides = [1, 1]} : vector<8x1152xbf16> to vector<8x64xbf16>
    %cst_19 = arith.constant dense<0.000000e+00> : vector<8x8xf32>
    %54 = tpu.matmul %51, %52, %cst_19 {dimension_numbers = #tpu.dot_dimension_numbers<[1], [1], [0], [0], [0, 0, 1, 0], [], []>} : vector<8x64xbf16>, vector<8x64xbf16>, vector<8x8xf32> -> vector<8x8xf32>
    %cst_20 = arith.constant 0xFF800000 : f32
    %55 = vector.broadcast %cst_20 : f32 to vector<8x8xf32>
    %56 = arith.select %10, %54, %55 : vector<8x8xi1>, vector<8x8xf32>
    %cst_21 = arith.constant dense<0xFF800000> : vector<8xf32>
    %57 = vector.multi_reduction <maximumf>, %56, %cst_21 [1] : vector<8x8xf32> to vector<8xf32>
    %58 = vector.shape_cast %57 : vector<8xf32> to vector<8x1xf32>
    %59 = vector.broadcast %58 : vector<8x1xf32> to vector<8x8xf32>
    %60 = arith.subf %56, %59 : vector<8x8xf32>
    %61 = math.exp %60 : vector<8x8xf32>
    %cst_22 = arith.constant dense<0.000000e+00> : vector<8xf32>
    %62 = vector.multi_reduction <add>, %61, %cst_22 [1] : vector<8x8xf32> to vector<8xf32>
    %63 = vector.shape_cast %62 : vector<8xf32> to vector<8x1xf32>
    %64 = tpu.reciprocal %63 {approx = true} : vector<8x1xf32> -> vector<8x1xf32>
    %65 = vector.broadcast %64 : vector<8x1xf32> to vector<8x8xf32>
    %66 = arith.mulf %61, %65 : vector<8x8xf32>
    %67 = arith.truncf %66 : vector<8x8xf32> to vector<8x8xbf16>
    %cst_23 = arith.constant dense<0.000000e+00> : vector<8x64xf32>
    %68 = tpu.matmul %67, %53, %cst_23 {dimension_numbers = #tpu.dot_dimension_numbers<[1], [0], [0], [1], [0, 0, 1, 1], [], []>} : vector<8x8xbf16>, vector<8x64xbf16>, vector<8x64xf32> -> vector<8x64xf32>
    %69 = arith.truncf %68 : vector<8x64xf32> to vector<8x64xbf16>
    %c0_24 = arith.constant 0 : index
    %c128 = arith.constant 128 : index
    %70 = vector.load %arg6[%c0_24, %c128] : memref<8x384xbf16, #tpu.memory_space<vmem>>, vector<8x64xbf16>
    tpu.vector_store %arg6[%c0_24, %c128], %69 {strides = array<i32>} : memref<8x384xbf16, #tpu.memory_space<vmem>>, vector<8x64xbf16>,
    %71 = vector.extract_strided_slice %4 {offsets = [0, 192], sizes = [8, 64], strides = [1, 1]} : vector<8x1152xbf16> to vector<8x64xbf16>
    %72 = vector.extract_strided_slice %4 {offsets = [0, 576], sizes = [8, 64], strides = [1, 1]} : vector<8x1152xbf16> to vector<8x64xbf16>
    %73 = vector.extract_strided_slice %4 {offsets = [0, 960], sizes = [8, 64], strides = [1, 1]} : vector<8x1152xbf16> to vector<8x64xbf16>
    %cst_25 = arith.constant dense<0.000000e+00> : vector<8x8xf32>
    %74 = tpu.matmul %71, %72, %cst_25 {dimension_numbers = #tpu.dot_dimension_numbers<[1], [1], [0], [0], [0, 0, 1, 0], [], []>} : vector<8x64xbf16>, vector<8x64xbf16>, vector<8x8xf32> -> vector<8x8xf32>
    %cst_26 = arith.constant 0xFF800000 : f32
    %75 = vector.broadcast %cst_26 : f32 to vector<8x8xf32>
    %76 = arith.select %10, %74, %75 : vector<8x8xi1>, vector<8x8xf32>
    %cst_27 = arith.constant dense<0xFF800000> : vector<8xf32>
    %77 = vector.multi_reduction <maximumf>, %76, %cst_27 [1] : vector<8x8xf32> to vector<8xf32>
    %78 = vector.shape_cast %77 : vector<8xf32> to vector<8x1xf32>
    %79 = vector.broadcast %78 : vector<8x1xf32> to vector<8x8xf32>
    %80 = arith.subf %76, %79 : vector<8x8xf32>
    %81 = math.exp %80 : vector<8x8xf32>
    %cst_28 = arith.constant dense<0.000000e+00> : vector<8xf32>
    %82 = vector.multi_reduction <add>, %81, %cst_28 [1] : vector<8x8xf32> to vector<8xf32>
    %83 = vector.shape_cast %82 : vector<8xf32> to vector<8x1xf32>
    %84 = tpu.reciprocal %83 {approx = true} : vector<8x1xf32> -> vector<8x1xf32>
    %85 = vector.broadcast %84 : vector<8x1xf32> to vector<8x8xf32>
    %86 = arith.mulf %81, %85 : vector<8x8xf32>
    %87 = arith.truncf %86 : vector<8x8xf32> to vector<8x8xbf16>
    %cst_29 = arith.constant dense<0.000000e+00> : vector<8x64xf32>
    %88 = tpu.matmul %87, %73, %cst_29 {dimension_numbers = #tpu.dot_dimension_numbers<[1], [0], [0], [1], [0, 0, 1, 1], [], []>} : vector<8x8xbf16>, vector<8x64xbf16>, vector<8x64xf32> -> vector<8x64xf32>
    %89 = arith.truncf %88 : vector<8x64xf32> to vector<8x64xbf16>
    %c0_30 = arith.constant 0 : index
    %c192 = arith.constant 192 : index
    %90 = vector.load %arg6[%c0_30, %c192] : memref<8x384xbf16, #tpu.memory_space<vmem>>, vector<8x64xbf16>
    tpu.vector_store %arg6[%c0_30, %c192], %89 {strides = array<i32>} : memref<8x384xbf16, #tpu.memory_space<vmem>>, vector<8x64xbf16>,
    %91 = vector.extract_strided_slice %4 {offsets = [0, 256], sizes = [8, 64], strides = [1, 1]} : vector<8x1152xbf16> to vector<8x64xbf16>
    %92 = vector.extract_strided_slice %4 {offsets = [0, 640], sizes = [8, 64], strides = [1, 1]} : vector<8x1152xbf16> to vector<8x64xbf16>
    %93 = vector.extract_strided_slice %4 {offsets = [0, 1024], sizes = [8, 64], strides = [1, 1]} : vector<8x1152xbf16> to vector<8x64xbf16>
    %cst_31 = arith.constant dense<0.000000e+00> : vector<8x8xf32>
    %94 = tpu.matmul %91, %92, %cst_31 {dimension_numbers = #tpu.dot_dimension_numbers<[1], [1], [0], [0], [0, 0, 1, 0], [], []>} : vector<8x64xbf16>, vector<8x64xbf16>, vector<8x8xf32> -> vector<8x8xf32>
    %cst_32 = arith.constant 0xFF800000 : f32
    %95 = vector.broadcast %cst_32 : f32 to vector<8x8xf32>
    %96 = arith.select %10, %94, %95 : vector<8x8xi1>, vector<8x8xf32>
    %cst_33 = arith.constant dense<0xFF800000> : vector<8xf32>
    %97 = vector.multi_reduction <maximumf>, %96, %cst_33 [1] : vector<8x8xf32> to vector<8xf32>
    %98 = vector.shape_cast %97 : vector<8xf32> to vector<8x1xf32>
    %99 = vector.broadcast %98 : vector<8x1xf32> to vector<8x8xf32>
    %100 = arith.subf %96, %99 : vector<8x8xf32>
    %101 = math.exp %100 : vector<8x8xf32>
    %cst_34 = arith.constant dense<0.000000e+00> : vector<8xf32>
    %102 = vector.multi_reduction <add>, %101, %cst_34 [1] : vector<8x8xf32> to vector<8xf32>
    %103 = vector.shape_cast %102 : vector<8xf32> to vector<8x1xf32>
    %104 = tpu.reciprocal %103 {approx = true} : vector<8x1xf32> -> vector<8x1xf32>
    %105 = vector.broadcast %104 : vector<8x1xf32> to vector<8x8xf32>
    %106 = arith.mulf %101, %105 : vector<8x8xf32>
    %107 = arith.truncf %106 : vector<8x8xf32> to vector<8x8xbf16>
    %cst_35 = arith.constant dense<0.000000e+00> : vector<8x64xf32>
    %108 = tpu.matmul %107, %93, %cst_35 {dimension_numbers = #tpu.dot_dimension_numbers<[1], [0], [0], [1], [0, 0, 1, 1], [], []>} : vector<8x8xbf16>, vector<8x64xbf16>, vector<8x64xf32> -> vector<8x64xf32>
    %109 = arith.truncf %108 : vector<8x64xf32> to vector<8x64xbf16>
    %c0_36 = arith.constant 0 : index
    %c256 = arith.constant 256 : index
    %110 = vector.load %arg6[%c0_36, %c256] : memref<8x384xbf16, #tpu.memory_space<vmem>>, vector<8x64xbf16>
    tpu.vector_store %arg6[%c0_36, %c256], %109 {strides = array<i32>} : memref<8x384xbf16, #tpu.memory_space<vmem>>, vector<8x64xbf16>,
    %111 = vector.extract_strided_slice %4 {offsets = [0, 320], sizes = [8, 64], strides = [1, 1]} : vector<8x1152xbf16> to vector<8x64xbf16>
    %112 = vector.extract_strided_slice %4 {offsets = [0, 704], sizes = [8, 64], strides = [1, 1]} : vector<8x1152xbf16> to vector<8x64xbf16>
    %113 = vector.extract_strided_slice %4 {offsets = [0, 1088], sizes = [8, 64], strides = [1, 1]} : vector<8x1152xbf16> to vector<8x64xbf16>
    %cst_37 = arith.constant dense<0.000000e+00> : vector<8x8xf32>
    %114 = tpu.matmul %111, %112, %cst_37 {dimension_numbers = #tpu.dot_dimension_numbers<[1], [1], [0], [0], [0, 0, 1, 0], [], []>} : vector<8x64xbf16>, vector<8x64xbf16>, vector<8x8xf32> -> vector<8x8xf32>
    %cst_38 = arith.constant 0xFF800000 : f32
    %115 = vector.broadcast %cst_38 : f32 to vector<8x8xf32>
    %116 = arith.select %10, %114, %115 : vector<8x8xi1>, vector<8x8xf32>
    %cst_39 = arith.constant dense<0xFF800000> : vector<8xf32>
    %117 = vector.multi_reduction <maximumf>, %116, %cst_39 [1] : vector<8x8xf32> to vector<8xf32>
    %118 = vector.shape_cast %117 : vector<8xf32> to vector<8x1xf32>
    %119 = vector.broadcast %118 : vector<8x1xf32> to vector<8x8xf32>
    %120 = arith.subf %116, %119 : vector<8x8xf32>
    %121 = math.exp %120 : vector<8x8xf32>
    %cst_40 = arith.constant dense<0.000000e+00> : vector<8xf32>
    %122 = vector.multi_reduction <add>, %121, %cst_40 [1] : vector<8x8xf32> to vector<8xf32>
    %123 = vector.shape_cast %122 : vector<8xf32> to vector<8x1xf32>
    %124 = tpu.reciprocal %123 {approx = true} : vector<8x1xf32> -> vector<8x1xf32>
    %125 = vector.broadcast %124 : vector<8x1xf32> to vector<8x8xf32>
    %126 = arith.mulf %121, %125 : vector<8x8xf32>
    %127 = arith.truncf %126 : vector<8x8xf32> to vector<8x8xbf16>
    %cst_41 = arith.constant dense<0.000000e+00> : vector<8x64xf32>
    %128 = tpu.matmul %127, %113, %cst_41 {dimension_numbers = #tpu.dot_dimension_numbers<[1], [0], [0], [1], [0, 0, 1, 1], [], []>} : vector<8x8xbf16>, vector<8x64xbf16>, vector<8x64xf32> -> vector<8x64xf32>
    %129 = arith.truncf %128 : vector<8x64xf32> to vector<8x64xbf16>
    %c0_42 = arith.constant 0 : index
    %c320 = arith.constant 320 : index
    %130 = vector.load %arg6[%c0_42, %c320] : memref<8x384xbf16, #tpu.memory_space<vmem>>, vector<8x64xbf16>
    tpu.vector_store %arg6[%c0_42, %c320], %129 {strides = array<i32>} : memref<8x384xbf16, #tpu.memory_space<vmem>>, vector<8x64xbf16>,
    %c0_43 = arith.constant 0 : index
    %c0_44 = arith.constant 0 : index
    %131 = vector.load %arg6[%c0_43, %c0_44] : memref<8x384xbf16, #tpu.memory_space<vmem>>, vector<8x384xbf16>
    %c0_45 = arith.constant 0 : index
    %c0_46 = arith.constant 0 : index
    %132 = vector.load %arg3[%c0_45, %c0_46] : memref<384x384xbf16, #tpu.memory_space<vmem>>, vector<384x384xbf16>
    %cst_47 = arith.constant dense<0.000000e+00> : vector<8x384xf32>
    %133 = tpu.matmul %131, %132, %cst_47 {dimension_numbers = #tpu.dot_dimension_numbers<[1], [0], [0], [1], [0, 0, 1, 1], [], []>} : vector<8x384xbf16>, vector<384x384xbf16>, vector<8x384xf32> -> vector<8x384xf32>
    %134 = vector.broadcast %5 : vector<1x384xf32> to vector<8x384xf32>
    %135 = arith.addf %133, %134 : vector<8x384xf32>
    %c0_48 = arith.constant 0 : index
    %c0_49 = arith.constant 0 : index
    %c0_50 = arith.constant 0 : index
    %136 = vector.load %arg5[%c0_48, %c0_49, %c0_50] : memref<1x8x384xf32, #tpu.memory_space<vmem>>, vector<1x8x384xf32>
    %137 = vector.shape_cast %136 : vector<1x8x384xf32> to vector<8x384xf32>
    %138 = vector.shape_cast %135 : vector<8x384xf32> to vector<1x8x384xf32>
    tpu.vector_store %arg5[%c0_48, %c0_49, %c0_50], %138 {strides = array<i32>} : memref<1x8x384xf32, #tpu.memory_space<vmem>>, vector<1x8x384xf32>,
    return
  }
  func.func @transform_0(%arg0: i32) -> (i32, i32, i32) {
    %c0_i32 = arith.constant 0 : i32
    %c0_i32_0 = arith.constant 0 : i32
    %c0_i32_1 = arith.constant 0 : i32
    return %arg0, %c0_i32, %c0_i32_0 : i32, i32, i32
  }
  func.func @transform_1(%arg0: i32) -> (i32, i32) {
    %c0_i32 = arith.constant 0 : i32
    %c0_i32_0 = arith.constant 0 : i32
    %c0_i32_1 = arith.constant 0 : i32
    return %c0_i32, %c0_i32_0 : i32, i32
  }
  func.func @transform_2(%arg0: i32) -> (i32, i32) {
    %c0_i32 = arith.constant 0 : i32
    %c0_i32_0 = arith.constant 0 : i32
    %c0_i32_1 = arith.constant 0 : i32
    return %c0_i32, %c0_i32_0 : i32, i32
  }
  func.func @transform_3(%arg0: i32) -> (i32, i32) {
    %c0_i32 = arith.constant 0 : i32
    %c0_i32_0 = arith.constant 0 : i32
    %c0_i32_1 = arith.constant 0 : i32
    return %c0_i32, %c0_i32_0 : i32, i32
  }
  func.func @transform_4(%arg0: i32) -> (i32, i32, i32) {
    %c0_i32 = arith.constant 0 : i32
    %c0_i32_0 = arith.constant 0 : i32
    %c0_i32_1 = arith.constant 0 : i32
    return %arg0, %c0_i32, %c0_i32_0 : i32, i32, i32
  }
}

</mosaic_0001>

<llo_original>
// kernel: tpu_custom_call.1
$region0: #{tpu_custom_call.1}
  #allocation0 [shape = 'u32[]', space=smem, size = 0x4, offset = 0x4, fixed_abs, tag = 'smem constant byte address 0x4 - core index']
  #allocation1 [shape = 'u32[144,128]{1,0:T(1,128)}', space=vmem, size = 0x12000, scoped, tag = 'internal scratch']
  #allocation2 [shape = 'bf16[8,384]{1,0:T(8,128)(2,1)}', space=vmem, size = 0x1800, scoped, tag = 'scratch operand']
  %s0 = inlined_call_operand.hbm [shape: bf16[2,8,384], index: 0, kind: input, shape index: {}]
  %s1 = inlined_call_operand.hbm [shape: bf16[384,1152], index: 1, kind: input, shape index: {}]
  %s2 = inlined_call_operand.hbm [shape: bf16[384,384], index: 2, kind: input, shape index: {}]
  %s3 = inlined_call_operand.vmem [shape: f32[1,384], index: 3, kind: input, shape index: {}]
  %s4 = inlined_call_operand.hbm [shape: f32[2,8,384], index: 4, kind: output, shape index: {}]
  %s5 = sld [smem:[#allocation0]]
  $region61: #{tpu_custom_call.1} parent=0
    _
  %s7 = ssub.s32 1, %s5
  %s8 = scalar_select 0, %s7, %s5
  $region1: #{tpu_custom_call.1} parent=0
    #allocation3 [shape = 'u8[12288]{0}', space=vmem, size = 0x3000, scoped, tag = 'input window, operand 0']
    #allocation4 [shape = 's32[2]{0}', space=sflag, size = 0x8, scoped, tag = 'scoped memory for tpu_custom_call.1']
    #allocation5 [shape = 's32[2]{0}', space=sflag, size = 0x8, scoped, tag = 'scoped memory for tpu_custom_call.1']
    #allocation6 [shape = 'u8[884736]{0}', space=vmem, size = 0xd8000, scoped, tag = 'input window, operand 1, single buffered']
    #allocation7 [shape = 's32[1]{0}', space=sflag, size = 0x4, scoped, tag = 'scoped memory for tpu_custom_call.1']
    #allocation8 [shape = 'u8[294912]{0}', space=vmem, size = 0x48000, scoped, tag = 'input window, operand 2, single buffered']
    #allocation9 [shape = 'u8[24576]{0}', space=vmem, size = 0x6000, scoped, tag = 'output window, operand 0']
    %9 = vsyncpa [#allocation4], 0
    %s10 = scalar_lea.sflag [#allocation4], 1
    %11 = vsyncpa %s10, 0
    %12 = vsyncpa [#allocation7], 0
    %13 = vsyncpa [#allocation5], 0
    %s14 = scalar_lea.sflag [#allocation5], 1
    %15 = vsyncpa %s14, 0
    loop: start=0, step=1, limit=4
    $region2: #{tpu_custom_call.1} parent=1 // loop_pre_header
      _
    $region3: #{tpu_custom_call.1} parent=1 // loop_header
      %s17 = sphi 0, %s21
      %p18 = scmp.ge.s32.totalorder %s17, 4
      %s27 = sphi 0, %s29
      %s30 = sphi 0, %s27
      %s31 = sphi 0, %s30
      %s47 = sphi 0, %s31
      %s51 = sphi 0, %s51
      %s53 = sphi 0, %s51
      %s54 = sphi 0, %s53
      %s68 = sphi 0, %s54
      %s72 = sphi 0, %s72
      %s74 = sphi 0, %s72
      %s75 = sphi 0, %s74
      %s89 = sphi 0, %s75
      %s93 = sphi 0, %s93
      %s95 = sphi 0, %s93
      %s96 = sphi 0, %s95
      %s110 = sphi 0, %s96
      %s116 = sphi 0, %s118
      %s119 = sphi 0, %s116
      %s120 = sphi 0, %s119
      %s136 = sphi 0, %s120
    $region4: #{tpu_custom_call.1} parent=1 // loop_header_branch
      %20 = sbr.rel (%p18) target = $region8
    $region5: #{tpu_custom_call.1} parent=1 // loop_body
      %s22 = ssub.s32 %s17, 1
      %s23 = ssub.s32 %s17, 2
      %s24 = sadd.s32 %s17, 1
      %s25 = ssub.s32 %s17, %s24
      %p26 = scmp.eq.s32.totalorder %s25, 0
      %s28 = sadd.s32 %s27, 1
      %s29 = scalar_select %p26, %s27, %s28
      %p32 = pneg %p26
      %p33 = scmp.eq.s32.totalorder %s17, 1
      %p34 = por %p32, %p33
      %p35 = scmp.ne.s32.totalorder %s27, %s30
      %p36 = scmp.eq.s32.totalorder %s17, 0
      %p37 = por %p35, %p36
      %p38 = scmp.ne.s32.totalorder %s27, %s30
      %p39 = scmp.eq.s32.totalorder %s22, 1
      %p40 = por %p38, %p39
      %p41 = scmp.ne.s32.totalorder %s30, %s31
      %p42 = scmp.eq.s32.totalorder %s22, 0
      %p43 = por %p41, %p42
      %p44 = scmp.ne.s32.totalorder %s30, %s31
      %p45 = scmp.eq.s32.totalorder %s23, 1
      %p46 = por %p44, %p45
      %p48 = scmp.ne.s32.totalorder %s31, %s47
      %p49 = scmp.eq.s32.totalorder %s23, 0
      %p50 = por %p48, %p49
      %s52 = sadd.s32 %s51, 1
      %p55 = scmp.eq.s32.totalorder %s17, 1
      %p56 = scmp.ne.s32.totalorder %s51, %s53
      %p57 = scmp.eq.s32.totalorder %s17, 0
      %p58 = por %p56, %p57
      %p59 = scmp.ne.s32.totalorder %s51, %s53
      %p60 = scmp.eq.s32.totalorder %s22, 1
      %p61 = por %p59, %p60
      %p62 = scmp.ne.s32.totalorder %s53, %s54
      %p63 = scmp.eq.s32.totalorder %s22, 0
      %p64 = por %p62, %p63
      %p65 = scmp.ne.s32.totalorder %s53, %s54
      %p66 = scmp.eq.s32.totalorder %s23, 1
      %p67 = por %p65, %p66
      %p69 = scmp.ne.s32.totalorder %s54, %s68
      %p70 = scmp.eq.s32.totalorder %s23, 0
      %p71 = por %p69, %p70
      %s73 = sadd.s32 %s72, 1
      %p76 = scmp.eq.s32.totalorder %s17, 1
      %p77 = scmp.ne.s32.totalorder %s72, %s74
      %p78 = scmp.eq.s32.totalorder %s17, 0
      %p79 = por %p77, %p78
      %p80 = scmp.ne.s32.totalorder %s72, %s74
      %p81 = scmp.eq.s32.totalorder %s22, 1
      %p82 = por %p80, %p81
      %p83 = scmp.ne.s32.totalorder %s74, %s75
      %p84 = scmp.eq.s32.totalorder %s22, 0
      %p85 = por %p83, %p84
      %p86 = scmp.ne.s32.totalorder %s74, %s75
      %p87 = scmp.eq.s32.totalorder %s23, 1
      %p88 = por %p86, %p87
      %p90 = scmp.ne.s32.totalorder %s75, %s89
      %p91 = scmp.eq.s32.totalorder %s23, 0
      %p92 = por %p90, %p91
      %s94 = sadd.s32 %s93, 1
      %p97 = scmp.eq.s32.totalorder %s17, 1
      %p98 = scmp.ne.s32.totalorder %s93, %s95
      %p99 = scmp.eq.s32.totalorder %s17, 0
      %p100 = por %p98, %p99
      %p101 = scmp.ne.s32.totalorder %s93, %s95
      %p102 = scmp.eq.s32.totalorder %s22, 1
      %p103 = por %p101, %p102
      %p104 = scmp.ne.s32.totalorder %s95, %s96
      %p105 = scmp.eq.s32.totalorder %s22, 0
      %p106 = por %p104, %p105
      %p107 = scmp.ne.s32.totalorder %s95, %s96
      %p108 = scmp.eq.s32.totalorder %s23, 1
      %p109 = por %p107, %p108
      %p111 = scmp.ne.s32.totalorder %s96, %s110
      %p112 = scmp.eq.s32.totalorder %s23, 0
      %p113 = por %p111, %p112
      %s114 = ssub.s32 %s17, %s24
      %p115 = scmp.eq.s32.totalorder %s114, 0
      %s117 = sadd.s32 %s116, 1
      %s118 = scalar_select %p115, %s116, %s117
      %p121 = pneg %p115
      %p122 = scmp.eq.s32.totalorder %s17, 1
      %p123 = por %p121, %p122
      %p124 = scmp.ne.s32.totalorder %s116, %s119
      %p125 = scmp.eq.s32.totalorder %s17, 0
      %p126 = por %p124, %p125
      %p127 = scmp.ne.s32.totalorder %s116, %s119
      %p128 = scmp.eq.s32.totalorder %s22, 1
      %p129 = por %p127, %p128
      %p130 = scmp.ne.s32.totalorder %s119, %s120
      %p131 = scmp.eq.s32.totalorder %s22, 0
      %p132 = por %p130, %p131
      %p133 = scmp.ne.s32.totalorder %s119, %s120
      %p134 = scmp.eq.s32.totalorder %s23, 1
      %p135 = por %p133, %p134
      %p137 = scmp.ne.s32.totalorder %s120, %s136
      %p138 = scmp.eq.s32.totalorder %s23, 0
      %p139 = por %p137, %p138
      %p140 = scmp.le.s32.totalorder 1, %s17
      %p141 = scmp.lt.s32.totalorder %s17, 3
      %p142 = pnand %p140, %p141
      %p143 = pneg %p142
      // Predicated region
      $region9: #{tpu_custom_call.1} parent=5 // pred_check
        _
      $region10: #{tpu_custom_call.1} parent=5 // pred_check_branch
        %145 = sbr.rel (%p142) target = $region12
      $region11: #{tpu_custom_call.1} parent=5 // pred_region
        %s146 = ssub.s32 %s17, 1
        // Predicated region
        $region13: #{tpu_custom_call.1} parent=11 // pred_check
          %p147 = pneg %p64
        $region14: #{tpu_custom_call.1} parent=11 // pred_check_branch
          %149 = sbr.rel (%p147) target = $region16
        $region15: #{tpu_custom_call.1} parent=11 // pred_region
          %s151 = ssub.s32 27648, 27648
          %152 = vsyncadd [#allocation7], %s151
          %s153 = sshll.u32 [#allocation6], 4
          %s154 = int_to_ptr.vmem [resolvable:$true] %s153
          %159 = dma.hbm_to_vmem [thread:$0]  %s1, 27648, %s154, [#allocation7], 576, 576, 36
        $region16: #{tpu_custom_call.1} parent=11 // pred_fallthru
          _
        // Predicated region
        $region17: #{tpu_custom_call.1} parent=11 // pred_check
          %p160 = pneg %p85
        $region18: #{tpu_custom_call.1} parent=11 // pred_check_branch
          %162 = sbr.rel (%p160) target = $region20
        $region19: #{tpu_custom_call.1} parent=11 // pred_region
          %s164 = ssub.s32 9216, 9216
          %165 = vsyncadd [#allocation7], %s164
          %s166 = sshll.u32 [#allocation8], 4
          %s167 = int_to_ptr.vmem [resolvable:$true] %s166
          %172 = dma.hbm_to_vmem [thread:$0]  %s2, 9216, %s167, [#allocation7], 192, 192, 12
        $region20: #{tpu_custom_call.1} parent=11 // pred_fallthru
          _
        // Predicated region
        $region21: #{tpu_custom_call.1} parent=11 // pred_check
          %p173 = pneg %p106
        $region22: #{tpu_custom_call.1} parent=11 // pred_check_branch
          %175 = sbr.rel (%p173) target = $region24
        $region23: #{tpu_custom_call.1} parent=11 // pred_region
          _
        $region24: #{tpu_custom_call.1} parent=11 // pred_fallthru
          _
      $region12: #{tpu_custom_call.1} parent=5 // pred_fallthru
        _
      %p176 = scmp.lt.s32.totalorder %s17, 2
      // Predicated region
      $region25: #{tpu_custom_call.1} parent=5 // pred_check
        %p177 = pneg %p176
      $region26: #{tpu_custom_call.1} parent=5 // pred_check_branch
        %179 = sbr.rel (%p177) target = $region28
      $region27: #{tpu_custom_call.1} parent=5 // pred_region
        // Predicated region
        $region29: #{tpu_custom_call.1} parent=27 // pred_check
          %p180 = pneg %p37
        $region30: #{tpu_custom_call.1} parent=27 // pred_check_branch
          %182 = sbr.rel (%p180) target = $region32
        $region31: #{tpu_custom_call.1} parent=27 // pred_region
          %s183 = sand.u32 %s27, 1
          %s184 = scalar_lea.sflag [#allocation4], %s183
          %s185 = sand.u32 %s27, 1
          %s186 = smul.addr %s185, 12
          %s187 = scalar_lea.vmem [#allocation3], %s186
          %s189 = ssub.s32 192, 192
          %190 = vsyncadd %s184, %s189
          %s191 = smul.addr %s17, 3
          %s192 = smul.addr %s191, 64
          %s193 = scalar_lea.hbm %s0, %s192
          %s195 = sshll.u32 %s187, 4
          %s196 = int_to_ptr.vmem [resolvable:$true] %s195
          %198 = dma.hbm_to_vmem [thread:$0]  %s193, 192, %s196, %s184
        $region32: #{tpu_custom_call.1} parent=27 // pred_fallthru
          _
      $region28: #{tpu_custom_call.1} parent=5 // pred_fallthru
        _
      %p199 = scmp.le.s32.totalorder 1, %s17
      %p200 = scmp.lt.s32.totalorder %s17, 3
      %p201 = pnand %p199, %p200
      %p202 = pneg %p201
      // Predicated region
      $region33: #{tpu_custom_call.1} parent=5 // pred_check
        _
      $region34: #{tpu_custom_call.1} parent=5 // pred_check_branch
        %204 = sbr.rel (%p201) target = $region36
      $region35: #{tpu_custom_call.1} parent=5 // pred_region
        %s205 = ssub.s32 %s17, 1
        %s206 = sand.u32 %s30, 1
        %s207 = scalar_lea.sflag [#allocation4], %s206
        %s208 = sand.u32 %s30, 1
        %s209 = smul.addr %s208, 12
        %s210 = scalar_lea.vmem [#allocation3], %s209
        // Predicated region
        $region37: #{tpu_custom_call.1} parent=35 // pred_check
          %p211 = pneg %p43
        $region38: #{tpu_custom_call.1} parent=35 // pred_check_branch
          %213 = sbr.rel (%p211) target = $region40
        $region39: #{tpu_custom_call.1} parent=35 // pred_region
          %214 = dma.done %s207, 192
        $region40: #{tpu_custom_call.1} parent=35 // pred_fallthru
          _
        // Predicated region
        $region41: #{tpu_custom_call.1} parent=35 // pred_check
          %p215 = pneg %p64
        $region42: #{tpu_custom_call.1} parent=35 // pred_check_branch
          %217 = sbr.rel (%p215) target = $region44
        $region43: #{tpu_custom_call.1} parent=35 // pred_region
          %218 = dma.done [#allocation7], 27648
        $region44: #{tpu_custom_call.1} parent=35 // pred_fallthru
          _
        // Predicated region
        $region45: #{tpu_custom_call.1} parent=35 // pred_check
          %p219 = pneg %p85
        $region46: #{tpu_custom_call.1} parent=35 // pred_check_branch
          %221 = sbr.rel (%p219) target = $region48
        $region47: #{tpu_custom_call.1} parent=35 // pred_region
          %222 = dma.done [#allocation7], 9216
        $region48: #{tpu_custom_call.1} parent=35 // pred_fallthru
          _
        %s223 = sand.u32 %s30, 1
        %s224 = scalar_lea.sflag [#allocation4], %s223
        %s225 = sand.u32 %s30, 1
        %s226 = smul.addr %s225, 12
        %s227 = scalar_lea.vmem [#allocation3], %s226
        %p228 = pneg %p43
        %p229 = pneg %p40
        %p230 = pneg %p64
        %p231 = pneg %p61
        %p232 = pneg %p85
        %p233 = pneg %p82
        %p234 = pneg %p106
        %p235 = pneg %p103
        %p236 = pneg %p132
        %p237 = pneg %p129
        %s238 = sand.u32 %s119, 1
        %s239 = scalar_lea.sflag [#allocation5], %s238
        %s240 = sand.u32 %s119, 1
        %s241 = smul.addr %s240, 24
        %s242 = scalar_lea.vmem [#allocation9], %s241
        %v244 = vld [vmem:[%s210] sm:$0xff]
        %v245 = vld [vmem:[%s210 + $0x8] sm:$0xf]
        %v246 = vld [vmem:[#allocation6] sm:$0xff]
        %v247 = vld [vmem:[#allocation6 + $0x8] sm:$0xff]
        %v248 = vld [vmem:[#allocation6 + $0x10] sm:$0xff]
        %v249 = vld [vmem:[#allocation6 + $0x18] sm:$0xff]
        %v250 = vld [vmem:[#allocation6 + $0x20] sm:$0xf]
        %v251 = vld [vmem:[#allocation6 + $0x24] sm:$0xff]
        %v252 = vld [vmem:[#allocation6 + $0x2c] sm:$0xff]
        %v253 = vld [vmem:[#allocation6 + $0x34] sm:$0xff]
        %v254 = vld [vmem:[#allocation6 + $0x3c] sm:$0xff]
        %v255 = vld [vmem:[#allocation6 + $0x44] sm:$0xf]
        %v256 = vld [vmem:[#allocation6 + $0x48] sm:$0xff]
        %v257 = vld [vmem:[#allocation6 + $0x50] sm:$0xff]
        %v258 = vld [vmem:[#allocation6 + $0x58] sm:$0xff]
        %v259 = vld [vmem:[#allocation6 + $0x60] sm:$0xff]
        %v260 = vld [vmem:[#allocation6 + $0x68] sm:$0xf]
        %v261 = vld [vmem:[#allocation6 + $0x6c] sm:$0xff]
        %v262 = vld [vmem:[#allocation6 + $0x74] sm:$0xff]
        %v263 = vld [vmem:[#allocation6 + $0x7c] sm:$0xff]
        %v264 = vld [vmem:[#allocation6 + $0x84] sm:$0xff]
        %v265 = vld [vmem:[#allocation6 + $0x8c] sm:$0xf]
        %v266 = vld [vmem:[#allocation6 + $0x90] sm:$0xff]
        %v267 = vld [vmem:[#allocation6 + $0x98] sm:$0xff]
        %v268 = vld [vmem:[#allocation6 + $0xa0] sm:$0xff]
        %v269 = vld [vmem:[#allocation6 + $0xa8] sm:$0xff]
        %v270 = vld [vmem:[#allocation6 + $0xb0] sm:$0xf]
        %v271 = vld [vmem:[#allocation6 + $0xb4] sm:$0xff]
        %v272 = vld [vmem:[#allocation6 + $0xbc] sm:$0xff]
        %v273 = vld [vmem:[#allocation6 + $0xc4] sm:$0xff]
        %v274 = vld [vmem:[#allocation6 + $0xcc] sm:$0xff]
        %v275 = vld [vmem:[#allocation6 + $0xd4] sm:$0xf]
        %v276 = vld [vmem:[#allocation6 + $0xd8] sm:$0xff]
        %v277 = vld [vmem:[#allocation6 + $0xe0] sm:$0xff]
        %v278 = vld [vmem:[#allocation6 + $0xe8] sm:$0xff]
        %v279 = vld [vmem:[#allocation6 + $0xf0] sm:$0xff]
        %v280 = vld [vmem:[#allocation6 + $0xf8] sm:$0xf]
        %v281 = vld [vmem:[#allocation6 + $0xfc] sm:$0xff]
        %v282 = vld [vmem:[#allocation6 + $0x104] sm:$0xff]
        %v283 = vld [vmem:[#allocation6 + $0x10c] sm:$0xff]
        %v284 = vld [vmem:[#allocation6 + $0x114] sm:$0xff]
        %v285 = vld [vmem:[#allocation6 + $0x11c] sm:$0xf]
        %v286 = vld [vmem:[#allocation6 + $0x120] sm:$0xff]
        %v287 = vld [vmem:[#allocation6 + $0x128] sm:$0xff]
        %v288 = vld [vmem:[#allocation6 + $0x130] sm:$0xff]
        %v289 = vld [vmem:[#allocation6 + $0x138] sm:$0xff]
        %v290 = vld [vmem:[#allocation6 + $0x140] sm:$0xf]
        %v291 = vld [vmem:[#allocation6 + $0x144] sm:$0xff]
        %v292 = vld [vmem:[#allocation6 + $0x14c] sm:$0xff]
        %v293 = vld [vmem:[#allocation6 + $0x154] sm:$0xff]
        %v294 = vld [vmem:[#allocation6 + $0x15c] sm:$0xff]
        %v295 = vld [vmem:[#allocation6 + $0x164] sm:$0xf]
        %v296 = vld [vmem:[#allocation6 + $0x168] sm:$0xff]
        %v297 = vld [vmem:[#allocation6 + $0x170] sm:$0xff]
        %v298 = vld [vmem:[#allocation6 + $0x178] sm:$0xff]
        %v299 = vld [vmem:[#allocation6 + $0x180] sm:$0xff]
        %v300 = vld [vmem:[#allocation6 + $0x188] sm:$0xf]
        %v301 = vld [vmem:[#allocation6 + $0x18c] sm:$0xff]
        %v302 = vld [vmem:[#allocation6 + $0x194] sm:$0xff]
        %v303 = vld [vmem:[#allocation6 + $0x19c] sm:$0xff]
        %v304 = vld [vmem:[#allocation6 + $0x1a4] sm:$0xff]
        %v305 = vld [vmem:[#allocation6 + $0x1ac] sm:$0xf]
        %v306 = vld [vmem:[#allocation6 + $0x1b0] sm:$0xff]
        %v307 = vld [vmem:[#allocation6 + $0x1b8] sm:$0xff]
        %v308 = vld [vmem:[#allocation6 + $0x1c0] sm:$0xff]
        %v309 = vld [vmem:[#allocation6 + $0x1c8] sm:$0xff]
        %v310 = vld [vmem:[#allocation6 + $0x1d0] sm:$0xf]
        %v311 = vld [vmem:[#allocation6 + $0x1d4] sm:$0xff]
        %v312 = vld [vmem:[#allocation6 + $0x1dc] sm:$0xff]
        %v313 = vld [vmem:[#allocation6 + $0x1e4] sm:$0xff]
        %v314 = vld [vmem:[#allocation6 + $0x1ec] sm:$0xff]
        %v315 = vld [vmem:[#allocation6 + $0x1f4] sm:$0xf]
        %v316 = vld [vmem:[#allocation6 + $0x1f8] sm:$0xff]
        %v317 = vld [vmem:[#allocation6 + $0x200] sm:$0xff]
        %v318 = vld [vmem:[#allocation6 + $0x208] sm:$0xff]
        %v319 = vld [vmem:[#allocation6 + $0x210] sm:$0xff]
        %v320 = vld [vmem:[#allocation6 + $0x218] sm:$0xf]
        %v321 = vld [vmem:[#allocation6 + $0x21c] sm:$0xff]
        %v322 = vld [vmem:[#allocation6 + $0x224] sm:$0xff]
        %v323 = vld [vmem:[#allocation6 + $0x22c] sm:$0xff]
        %v324 = vld [vmem:[#allocation6 + $0x234] sm:$0xff]
        %v325 = vld [vmem:[#allocation6 + $0x23c] sm:$0xf]
        %v326 = vld [vmem:[#allocation6 + $0x240] sm:$0xff]
        %v327 = vld [vmem:[#allocation6 + $0x248] sm:$0xff]
        %v328 = vld [vmem:[#allocation6 + $0x250] sm:$0xff]
        %v329 = vld [vmem:[#allocation6 + $0x258] sm:$0xff]
        %v330 = vld [vmem:[#allocation6 + $0x260] sm:$0xf]
        %v331 = vld [vmem:[#allocation6 + $0x264] sm:$0xff]
        %v332 = vld [vmem:[#allocation6 + $0x26c] sm:$0xff]
        %v333 = vld [vmem:[#allocation6 + $0x274] sm:$0xff]
        %v334 = vld [vmem:[#allocation6 + $0x27c] sm:$0xff]
        %v335 = vld [vmem:[#allocation6 + $0x284] sm:$0xf]
        %v336 = vld [vmem:[#allocation6 + $0x288] sm:$0xff]
        %v337 = vld [vmem:[#allocation6 + $0x290] sm:$0xff]
        %v338 = vld [vmem:[#allocation6 + $0x298] sm:$0xff]
        %v339 = vld [vmem:[#allocation6 + $0x2a0] sm:$0xff]
        %v340 = vld [vmem:[#allocation6 + $0x2a8] sm:$0xf]
        %v341 = vld [vmem:[#allocation6 + $0x2ac] sm:$0xff]
        %v342 = vld [vmem:[#allocation6 + $0x2b4] sm:$0xff]
        %v343 = vld [vmem:[#allocation6 + $0x2bc] sm:$0xff]
        %v344 = vld [vmem:[#allocation6 + $0x2c4] sm:$0xff]
        %v345 = vld [vmem:[#allocation6 + $0x2cc] sm:$0xf]
        %v346 = vld [vmem:[#allocation6 + $0x2d0] sm:$0xff]
        %v347 = vld [vmem:[#allocation6 + $0x2d8] sm:$0xff]
        %v348 = vld [vmem:[#allocation6 + $0x2e0] sm:$0xff]
        %v349 = vld [vmem:[#allocation6 + $0x2e8] sm:$0xff]
        %v350 = vld [vmem:[#allocation6 + $0x2f0] sm:$0xf]
        %v351 = vld [vmem:[#allocation6 + $0x2f4] sm:$0xff]
        %v352 = vld [vmem:[#allocation6 + $0x2fc] sm:$0xff]
        %v353 = vld [vmem:[#allocation6 + $0x304] sm:$0xff]
        %v354 = vld [vmem:[#allocation6 + $0x30c] sm:$0xff]
        %v355 = vld [vmem:[#allocation6 + $0x314] sm:$0xf]
        %v356 = vld [vmem:[#allocation6 + $0x318] sm:$0xff]
        %v357 = vld [vmem:[#allocation6 + $0x320] sm:$0xff]
        %v358 = vld [vmem:[#allocation6 + $0x328] sm:$0xff]
        %v359 = vld [vmem:[#allocation6 + $0x330] sm:$0xff]
        %v360 = vld [vmem:[#allocation6 + $0x338] sm:$0xf]
        %v361 = vld [vmem:[#allocation6 + $0x33c] sm:$0xff]
        %v362 = vld [vmem:[#allocation6 + $0x344] sm:$0xff]
        %v363 = vld [vmem:[#allocation6 + $0x34c] sm:$0xff]
        %v364 = vld [vmem:[#allocation6 + $0x354] sm:$0xff]
        %v365 = vld [vmem:[#allocation6 + $0x35c] sm:$0xf]
        %v366 = vld [vmem:[#allocation6 + $0x360] sm:$0xff]
        %v367 = vld [vmem:[#allocation6 + $0x368] sm:$0xff]
        %v368 = vld [vmem:[#allocation6 + $0x370] sm:$0xff]
        %v369 = vld [vmem:[#allocation6 + $0x378] sm:$0xff]
        %v370 = vld [vmem:[#allocation6 + $0x380] sm:$0xf]
        %v371 = vld [vmem:[#allocation6 + $0x384] sm:$0xff]
        %v372 = vld [vmem:[#allocation6 + $0x38c] sm:$0xff]
        %v373 = vld [vmem:[#allocation6 + $0x394] sm:$0xff]
        %v374 = vld [vmem:[#allocation6 + $0x39c] sm:$0xff]
        %v375 = vld [vmem:[#allocation6 + $0x3a4] sm:$0xf]
        %v376 = vld [vmem:[#allocation6 + $0x3a8] sm:$0xff]
        %v377 = vld [vmem:[#allocation6 + $0x3b0] sm:$0xff]
        %v378 = vld [vmem:[#allocation6 + $0x3b8] sm:$0xff]
        %v379 = vld [vmem:[#allocation6 + $0x3c0] sm:$0xff]
        %v380 = vld [vmem:[#allocation6 + $0x3c8] sm:$0xf]
        %v381 = vld [vmem:[#allocation6 + $0x3cc] sm:$0xff]
        %v382 = vld [vmem:[#allocation6 + $0x3d4] sm:$0xff]
        %v383 = vld [vmem:[#allocation6 + $0x3dc] sm:$0xff]
        %v384 = vld [vmem:[#allocation6 + $0x3e4] sm:$0xff]
        %v385 = vld [vmem:[#allocation6 + $0x3ec] sm:$0xf]
        %v386 = vld [vmem:[#allocation6 + $0x3f0] sm:$0xff]
        %v387 = vld [vmem:[#allocation6 + $0x3f8] sm:$0xff]
        %v388 = vld [vmem:[#allocation6 + $0x400] sm:$0xff]
        %v389 = vld [vmem:[#allocation6 + $0x408] sm:$0xff]
        %v390 = vld [vmem:[#allocation6 + $0x410] sm:$0xf]
        %v391 = vld [vmem:[#allocation6 + $0x414] sm:$0xff]
        %v392 = vld [vmem:[#allocation6 + $0x41c] sm:$0xff]
        %v393 = vld [vmem:[#allocation6 + $0x424] sm:$0xff]
        %v394 = vld [vmem:[#allocation6 + $0x42c] sm:$0xff]
        %v395 = vld [vmem:[#allocation6 + $0x434] sm:$0xf]
        %v396 = vld [vmem:[#allocation6 + $0x438] sm:$0xff]
        %v397 = vld [vmem:[#allocation6 + $0x440] sm:$0xff]
        %v398 = vld [vmem:[#allocation6 + $0x448] sm:$0xff]
        %v399 = vld [vmem:[#allocation6 + $0x450] sm:$0xff]
        %v400 = vld [vmem:[#allocation6 + $0x458] sm:$0xf]
        %v401 = vld [vmem:[#allocation6 + $0x45c] sm:$0xff]
        %v402 = vld [vmem:[#allocation6 + $0x464] sm:$0xff]
        %v403 = vld [vmem:[#allocation6 + $0x46c] sm:$0xff]
        %v404 = vld [vmem:[#allocation6 + $0x474] sm:$0xff]
        %v405 = vld [vmem:[#allocation6 + $0x47c] sm:$0xf]
        %v406 = vld [vmem:[#allocation6 + $0x480] sm:$0xff]
        %v407 = vld [vmem:[#allocation6 + $0x488] sm:$0xff]
        %v408 = vld [vmem:[#allocation6 + $0x490] sm:$0xff]
        %v409 = vld [vmem:[#allocation6 + $0x498] sm:$0xff]
        %v410 = vld [vmem:[#allocation6 + $0x4a0] sm:$0xf]
        %v411 = vld [vmem:[#allocation6 + $0x4a4] sm:$0xff]
        %v412 = vld [vmem:[#allocation6 + $0x4ac] sm:$0xff]
        %v413 = vld [vmem:[#allocation6 + $0x4b4] sm:$0xff]
        %v414 = vld [vmem:[#allocation6 + $0x4bc] sm:$0xff]
        %v415 = vld [vmem:[#allocation6 + $0x4c4] sm:$0xf]
        %v416 = vld [vmem:[#allocation6 + $0x4c8] sm:$0xff]
        %v417 = vld [vmem:[#allocation6 + $0x4d0] sm:$0xff]
        %v418 = vld [vmem:[#allocation6 + $0x4d8] sm:$0xff]
        %v419 = vld [vmem:[#allocation6 + $0x4e0] sm:$0xff]
        %v420 = vld [vmem:[#allocation6 + $0x4e8] sm:$0xf]
        %v421 = vld [vmem:[#allocation6 + $0x4ec] sm:$0xff]
        %v422 = vld [vmem:[#allocation6 + $0x4f4] sm:$0xff]
        %v423 = vld [vmem:[#allocation6 + $0x4fc] sm:$0xff]
        %v424 = vld [vmem:[#allocation6 + $0x504] sm:$0xff]
        %v425 = vld [vmem:[#allocation6 + $0x50c] sm:$0xf]
        %v426 = vld [vmem:[#allocation6 + $0x510] sm:$0xff]
        %v427 = vld [vmem:[#allocation6 + $0x518] sm:$0xff]
        %v428 = vld [vmem:[#allocation6 + $0x520] sm:$0xff]
        %v429 = vld [vmem:[#allocation6 + $0x528] sm:$0xff]
        %v430 = vld [vmem:[#allocation6 + $0x530] sm:$0xf]
        %v431 = vld [vmem:[#allocation6 + $0x534] sm:$0xff]
        %v432 = vld [vmem:[#allocation6 + $0x53c] sm:$0xff]
        %v433 = vld [vmem:[#allocation6 + $0x544] sm:$0xff]
        %v434 = vld [vmem:[#allocation6 + $0x54c] sm:$0xff]
        %v435 = vld [vmem:[#allocation6 + $0x554] sm:$0xf]
        %v436 = vld [vmem:[#allocation6 + $0x558] sm:$0xff]
        %v437 = vld [vmem:[#allocation6 + $0x560] sm:$0xff]
        %v438 = vld [vmem:[#allocation6 + $0x568] sm:$0xff]
        %v439 = vld [vmem:[#allocation6 + $0x570] sm:$0xff]
        %v440 = vld [vmem:[#allocation6 + $0x578] sm:$0xf]
        %v441 = vld [vmem:[#allocation6 + $0x57c] sm:$0xff]
        %v442 = vld [vmem:[#allocation6 + $0x584] sm:$0xff]
        %v443 = vld [vmem:[#allocation6 + $0x58c] sm:$0xff]
        %v444 = vld [vmem:[#allocation6 + $0x594] sm:$0xff]
        %v445 = vld [vmem:[#allocation6 + $0x59c] sm:$0xf]
        %v446 = vld [vmem:[#allocation6 + $0x5a0] sm:$0xff]
        %v447 = vld [vmem:[#allocation6 + $0x5a8] sm:$0xff]
        %v448 = vld [vmem:[#allocation6 + $0x5b0] sm:$0xff]
        %v449 = vld [vmem:[#allocation6 + $0x5b8] sm:$0xff]
        %v450 = vld [vmem:[#allocation6 + $0x5c0] sm:$0xf]
        %v451 = vld [vmem:[#allocation6 + $0x5c4] sm:$0xff]
        %v452 = vld [vmem:[#allocation6 + $0x5cc] sm:$0xff]
        %v453 = vld [vmem:[#allocation6 + $0x5d4] sm:$0xff]
        %v454 = vld [vmem:[#allocation6 + $0x5dc] sm:$0xff]
        %v455 = vld [vmem:[#allocation6 + $0x5e4] sm:$0xf]
        %v456 = vld [vmem:[#allocation6 + $0x5e8] sm:$0xff]
        %v457 = vld [vmem:[#allocation6 + $0x5f0] sm:$0xff]
        %v458 = vld [vmem:[#allocation6 + $0x5f8] sm:$0xff]
        %v459 = vld [vmem:[#allocation6 + $0x600] sm:$0xff]
        %v460 = vld [vmem:[#allocation6 + $0x608] sm:$0xf]
        %v461 = vld [vmem:[#allocation6 + $0x60c] sm:$0xff]
        %v462 = vld [vmem:[#allocation6 + $0x614] sm:$0xff]
        %v463 = vld [vmem:[#allocation6 + $0x61c] sm:$0xff]
        %v464 = vld [vmem:[#allocation6 + $0x624] sm:$0xff]
        %v465 = vld [vmem:[#allocation6 + $0x62c] sm:$0xf]
        %v466 = vld [vmem:[#allocation6 + $0x630] sm:$0xff]
        %v467 = vld [vmem:[#allocation6 + $0x638] sm:$0xff]
        %v468 = vld [vmem:[#allocation6 + $0x640] sm:$0xff]
        %v469 = vld [vmem:[#allocation6 + $0x648] sm:$0xff]
        %v470 = vld [vmem:[#allocation6 + $0x650] sm:$0xf]
        %v471 = vld [vmem:[#allocation6 + $0x654] sm:$0xff]
        %v472 = vld [vmem:[#allocation6 + $0x65c] sm:$0xff]
        %v473 = vld [vmem:[#allocation6 + $0x664] sm:$0xff]
        %v474 = vld [vmem:[#allocation6 + $0x66c] sm:$0xff]
        %v475 = vld [vmem:[#allocation6 + $0x674] sm:$0xf]
        %v476 = vld [vmem:[#allocation6 + $0x678] sm:$0xff]
        %v477 = vld [vmem:[#allocation6 + $0x680] sm:$0xff]
        %v478 = vld [vmem:[#allocation6 + $0x688] sm:$0xff]
        %v479 = vld [vmem:[#allocation6 + $0x690] sm:$0xff]
        %v480 = vld [vmem:[#allocation6 + $0x698] sm:$0xf]
        %v481 = vld [vmem:[#allocation6 + $0x69c] sm:$0xff]
        %v482 = vld [vmem:[#allocation6 + $0x6a4] sm:$0xff]
        %v483 = vld [vmem:[#allocation6 + $0x6ac] sm:$0xff]
        %v484 = vld [vmem:[#allocation6 + $0x6b4] sm:$0xff]
        %v485 = vld [vmem:[#allocation6 + $0x6bc] sm:$0xf]
        %v488 = vunpack.c.l.b16 %v244
        %v489 = vunpack.c.h.b16 %v244
        %v490 = vunpack.c.l.b16 %v245
        %v491 = vpack.c.b16 %v488, %v488
        %v492 = vpack.c.b16 %v489, %v489
        %v493 = vpack.c.b16 %v490, %v490
        %v737 = vunpack.c.l.b16 %v246
        %v738 = vunpack.c.h.b16 %v246
        %v739 = vunpack.c.l.b16 %v247
        %v740 = vunpack.c.h.b16 %v247
        %v741 = vunpack.c.l.b16 %v248
        %v742 = vunpack.c.h.b16 %v248
        %v743 = vunpack.c.l.b16 %v249
        %v744 = vunpack.c.h.b16 %v249
        %v745 = vunpack.c.l.b16 %v250
        %v746 = vunpack.c.l.b16 %v251
        %v747 = vunpack.c.h.b16 %v251
        %v748 = vunpack.c.l.b16 %v252
        %v749 = vunpack.c.h.b16 %v252
        %v750 = vunpack.c.l.b16 %v253
        %v751 = vunpack.c.h.b16 %v253
        %v752 = vunpack.c.l.b16 %v254
        %v753 = vunpack.c.h.b16 %v254
        %v754 = vunpack.c.l.b16 %v255
        %v755 = vunpack.c.l.b16 %v256
        %v756 = vunpack.c.h.b16 %v256
        %v757 = vunpack.c.l.b16 %v257
        %v758 = vunpack.c.h.b16 %v257
        %v759 = vunpack.c.l.b16 %v258
        %v760 = vunpack.c.h.b16 %v258
        %v761 = vunpack.c.l.b16 %v259
        %v762 = vunpack.c.h.b16 %v259
        %v763 = vunpack.c.l.b16 %v260
        %v764 = vunpack.c.l.b16 %v261
        %v765 = vunpack.c.h.b16 %v261
        %v766 = vunpack.c.l.b16 %v262
        %v767 = vunpack.c.h.b16 %v262
        %v768 = vunpack.c.l.b16 %v263
        %v769 = vunpack.c.h.b16 %v263
        %v770 = vunpack.c.l.b16 %v264
        %v771 = vunpack.c.h.b16 %v264
        %v772 = vunpack.c.l.b16 %v265
        %v773 = vunpack.c.l.b16 %v266
        %v774 = vunpack.c.h.b16 %v266
        %v775 = vunpack.c.l.b16 %v267
        %v776 = vunpack.c.h.b16 %v267
        %v777 = vunpack.c.l.b16 %v268
        %v778 = vunpack.c.h.b16 %v268
        %v779 = vunpack.c.l.b16 %v269
        %v780 = vunpack.c.h.b16 %v269
        %v781 = vunpack.c.l.b16 %v270
        %v782 = vunpack.c.l.b16 %v271
        %v783 = vunpack.c.h.b16 %v271
        %v784 = vunpack.c.l.b16 %v272
        %v785 = vunpack.c.h.b16 %v272
        %v786 = vunpack.c.l.b16 %v273
        %v787 = vunpack.c.h.b16 %v273
        %v788 = vunpack.c.l.b16 %v274
        %v789 = vunpack.c.h.b16 %v274
        %v790 = vunpack.c.l.b16 %v275
        %v791 = vunpack.c.l.b16 %v276
        %v792 = vunpack.c.h.b16 %v276
        %v793 = vunpack.c.l.b16 %v277
        %v794 = vunpack.c.h.b16 %v277
        %v795 = vunpack.c.l.b16 %v278
        %v796 = vunpack.c.h.b16 %v278
        %v797 = vunpack.c.l.b16 %v279
        %v798 = vunpack.c.h.b16 %v279
        %v799 = vunpack.c.l.b16 %v280
        %v800 = vunpack.c.l.b16 %v281
        %v801 = vunpack.c.h.b16 %v281
        %v802 = vunpack.c.l.b16 %v282
        %v803 = vunpack.c.h.b16 %v282
        %v804 = vunpack.c.l.b16 %v283
        %v805 = vunpack.c.h.b16 %v283
        %v806 = vunpack.c.l.b16 %v284
        %v807 = vunpack.c.h.b16 %v284
        %v808 = vunpack.c.l.b16 %v285
        %v809 = vunpack.c.l.b16 %v286
        %v810 = vunpack.c.h.b16 %v286
        %v811 = vunpack.c.l.b16 %v287
        %v812 = vunpack.c.h.b16 %v287
        %v813 = vunpack.c.l.b16 %v288
        %v814 = vunpack.c.h.b16 %v288
        %v815 = vunpack.c.l.b16 %v289
        %v816 = vunpack.c.h.b16 %v289
        %v817 = vunpack.c.l.b16 %v290
        %v818 = vunpack.c.l.b16 %v291
        %v819 = vunpack.c.h.b16 %v291
        %v820 = vunpack.c.l.b16 %v292
        %v821 = vunpack.c.h.b16 %v292
        %v822 = vunpack.c.l.b16 %v293
        %v823 = vunpack.c.h.b16 %v293
        %v824 = vunpack.c.l.b16 %v294
        %v825 = vunpack.c.h.b16 %v294
        %v826 = vunpack.c.l.b16 %v295
        %v827 = vunpack.c.l.b16 %v296
        %v828 = vunpack.c.h.b16 %v296
        %v829 = vunpack.c.l.b16 %v297
        %v830 = vunpack.c.h.b16 %v297
        %v831 = vunpack.c.l.b16 %v298
        %v832 = vunpack.c.h.b16 %v298
        %v833 = vunpack.c.l.b16 %v299
        %v834 = vunpack.c.h.b16 %v299
        %v835 = vunpack.c.l.b16 %v300
        %v836 = vunpack.c.l.b16 %v301
        %v837 = vunpack.c.h.b16 %v301
        %v838 = vunpack.c.l.b16 %v302
        %v839 = vunpack.c.h.b16 %v302
        %v840 = vunpack.c.l.b16 %v303
        %v841 = vunpack.c.h.b16 %v303
        %v842 = vunpack.c.l.b16 %v304
        %v843 = vunpack.c.h.b16 %v304
        %v844 = vunpack.c.l.b16 %v305
        %v845 = vunpack.c.l.b16 %v306
        %v846 = vunpack.c.h.b16 %v306
        %v847 = vunpack.c.l.b16 %v307
        %v848 = vunpack.c.h.b16 %v307
        %v849 = vunpack.c.l.b16 %v308
        %v850 = vunpack.c.h.b16 %v308
        %v851 = vunpack.c.l.b16 %v309
        %v852 = vunpack.c.h.b16 %v309
        %v853 = vunpack.c.l.b16 %v310
        %v854 = vunpack.c.l.b16 %v311
        %v855 = vunpack.c.h.b16 %v311
        %v856 = vunpack.c.l.b16 %v312
        %v857 = vunpack.c.h.b16 %v312
        %v858 = vunpack.c.l.b16 %v313
        %v859 = vunpack.c.h.b16 %v313
        %v860 = vunpack.c.l.b16 %v314
        %v861 = vunpack.c.h.b16 %v314
        %v862 = vunpack.c.l.b16 %v315
        %v863 = vunpack.c.l.b16 %v316
        %v864 = vunpack.c.h.b16 %v316
        %v865 = vunpack.c.l.b16 %v317
        %v866 = vunpack.c.h.b16 %v317
        %v867 = vunpack.c.l.b16 %v318
        %v868 = vunpack.c.h.b16 %v318
        %v869 = vunpack.c.l.b16 %v319
        %v870 = vunpack.c.h.b16 %v319
        %v871 = vunpack.c.l.b16 %v320
        %v872 = vunpack.c.l.b16 %v321
        %v873 = vunpack.c.h.b16 %v321
        %v874 = vunpack.c.l.b16 %v322
        %v875 = vunpack.c.h.b16 %v322
        %v876 = vunpack.c.l.b16 %v323
        %v877 = vunpack.c.h.b16 %v323
        %v878 = vunpack.c.l.b16 %v324
        %v879 = vunpack.c.h.b16 %v324
        %v880 = vunpack.c.l.b16 %v325
        %v881 = vunpack.c.l.b16 %v326
        %v882 = vunpack.c.h.b16 %v326
        %v883 = vunpack.c.l.b16 %v327
        %v884 = vunpack.c.h.b16 %v327
        %v885 = vunpack.c.l.b16 %v328
        %v886 = vunpack.c.h.b16 %v328
        %v887 = vunpack.c.l.b16 %v329
        %v888 = vunpack.c.h.b16 %v329
        %v889 = vunpack.c.l.b16 %v330
        %v890 = vunpack.c.l.b16 %v331
        %v891 = vunpack.c.h.b16 %v331
        %v892 = vunpack.c.l.b16 %v332
        %v893 = vunpack.c.h.b16 %v332
        %v894 = vunpack.c.l.b16 %v333
        %v895 = vunpack.c.h.b16 %v333
        %v896 = vunpack.c.l.b16 %v334
        %v897 = vunpack.c.h.b16 %v334
        %v898 = vunpack.c.l.b16 %v335
        %v899 = vunpack.c.l.b16 %v336
        %v900 = vunpack.c.h.b16 %v336
        %v901 = vunpack.c.l.b16 %v337
        %v902 = vunpack.c.h.b16 %v337
        %v903 = vunpack.c.l.b16 %v338
        %v904 = vunpack.c.h.b16 %v338
        %v905 = vunpack.c.l.b16 %v339
        %v906 = vunpack.c.h.b16 %v339
        %v907 = vunpack.c.l.b16 %v340
        %v908 = vunpack.c.l.b16 %v341
        %v909 = vunpack.c.h.b16 %v341
        %v910 = vunpack.c.l.b16 %v342
        %v911 = vunpack.c.h.b16 %v342
        %v912 = vunpack.c.l.b16 %v343
        %v913 = vunpack.c.h.b16 %v343
        %v914 = vunpack.c.l.b16 %v344
        %v915 = vunpack.c.h.b16 %v344
        %v916 = vunpack.c.l.b16 %v345
        %v917 = vunpack.c.l.b16 %v346
        %v918 = vunpack.c.h.b16 %v346
        %v919 = vunpack.c.l.b16 %v347
        %v920 = vunpack.c.h.b16 %v347
        %v921 = vunpack.c.l.b16 %v348
        %v922 = vunpack.c.h.b16 %v348
        %v923 = vunpack.c.l.b16 %v349
        %v924 = vunpack.c.h.b16 %v349
        %v925 = vunpack.c.l.b16 %v350
        %v926 = vunpack.c.l.b16 %v351
        %v927 = vunpack.c.h.b16 %v351
        %v928 = vunpack.c.l.b16 %v352
        %v929 = vunpack.c.h.b16 %v352
        %v930 = vunpack.c.l.b16 %v353
        %v931 = vunpack.c.h.b16 %v353
        %v932 = vunpack.c.l.b16 %v354
        %v933 = vunpack.c.h.b16 %v354
        %v934 = vunpack.c.l.b16 %v355
        %v935 = vunpack.c.l.b16 %v356
        %v936 = vunpack.c.h.b16 %v356
        %v937 = vunpack.c.l.b16 %v357
        %v938 = vunpack.c.h.b16 %v357
        %v939 = vunpack.c.l.b16 %v358
        %v940 = vunpack.c.h.b16 %v358
        %v941 = vunpack.c.l.b16 %v359
        %v942 = vunpack.c.h.b16 %v359
        %v943 = vunpack.c.l.b16 %v360
        %v944 = vunpack.c.l.b16 %v361
        %v945 = vunpack.c.h.b16 %v361
        %v946 = vunpack.c.l.b16 %v362
        %v947 = vunpack.c.h.b16 %v362
        %v948 = vunpack.c.l.b16 %v363
        %v949 = vunpack.c.h.b16 %v363
        %v950 = vunpack.c.l.b16 %v364
        %v951 = vunpack.c.h.b16 %v364
        %v952 = vunpack.c.l.b16 %v365
        %v953 = vunpack.c.l.b16 %v366
        %v954 = vunpack.c.h.b16 %v366
        %v955 = vunpack.c.l.b16 %v367
        %v956 = vunpack.c.h.b16 %v367
        %v957 = vunpack.c.l.b16 %v368
        %v958 = vunpack.c.h.b16 %v368
        %v959 = vunpack.c.l.b16 %v369
        %v960 = vunpack.c.h.b16 %v369
        %v961 = vunpack.c.l.b16 %v370
        %v962 = vunpack.c.l.b16 %v371
        %v963 = vunpack.c.h.b16 %v371
        %v964 = vunpack.c.l.b16 %v372
        %v965 = vunpack.c.h.b16 %v372
        %v966 = vunpack.c.l.b16 %v373
        %v967 = vunpack.c.h.b16 %v373
        %v968 = vunpack.c.l.b16 %v374
        %v969 = vunpack.c.h.b16 %v374
        %v970 = vunpack.c.l.b16 %v375
        %v971 = vunpack.c.l.b16 %v376
        %v972 = vunpack.c.h.b16 %v376
        %v973 = vunpack.c.l.b16 %v377
        %v974 = vunpack.c.h.b16 %v377
        %v975 = vunpack.c.l.b16 %v378
        %v976 = vunpack.c.h.b16 %v378
        %v977 = vunpack.c.l.b16 %v379
        %v978 = vunpack.c.h.b16 %v379
        %v979 = vunpack.c.l.b16 %v380
        %v980 = vunpack.c.l.b16 %v381
        %v981 = vunpack.c.h.b16 %v381
        %v982 = vunpack.c.l.b16 %v382
        %v983 = vunpack.c.h.b16 %v382
        %v984 = vunpack.c.l.b16 %v383
        %v985 = vunpack.c.h.b16 %v383
        %v986 = vunpack.c.l.b16 %v384
        %v987 = vunpack.c.h.b16 %v384
        %v988 = vunpack.c.l.b16 %v385
        %v989 = vunpack.c.l.b16 %v386
        %v990 = vunpack.c.h.b16 %v386
        %v991 = vunpack.c.l.b16 %v387
        %v992 = vunpack.c.h.b16 %v387
        %v993 = vunpack.c.l.b16 %v388
        %v994 = vunpack.c.h.b16 %v388
        %v995 = vunpack.c.l.b16 %v389
        %v996 = vunpack.c.h.b16 %v389
        %v997 = vunpack.c.l.b16 %v390
        %v998 = vunpack.c.l.b16 %v391
        %v999 = vunpack.c.h.b16 %v391
        %v1000 = vunpack.c.l.b16 %v392
        %v1001 = vunpack.c.h.b16 %v392
        %v1002 = vunpack.c.l.b16 %v393
        %v1003 = vunpack.c.h.b16 %v393
        %v1004 = vunpack.c.l.b16 %v394
        %v1005 = vunpack.c.h.b16 %v394
        %v1006 = vunpack.c.l.b16 %v395
        %v1007 = vunpack.c.l.b16 %v396
        %v1008 = vunpack.c.h.b16 %v396
        %v1009 = vunpack.c.l.b16 %v397
        %v1010 = vunpack.c.h.b16 %v397
        %v1011 = vunpack.c.l.b16 %v398
        %v1012 = vunpack.c.h.b16 %v398
        %v1013 = vunpack.c.l.b16 %v399
        %v1014 = vunpack.c.h.b16 %v399
        %v1015 = vunpack.c.l.b16 %v400
        %v1016 = vunpack.c.l.b16 %v401
        %v1017 = vunpack.c.h.b16 %v401
        %v1018 = vunpack.c.l.b16 %v402
        %v1019 = vunpack.c.h.b16 %v402
        %v1020 = vunpack.c.l.b16 %v403
        %v1021 = vunpack.c.h.b16 %v403
        %v1022 = vunpack.c.l.b16 %v404
        %v1023 = vunpack.c.h.b16 %v404
        %v1024 = vunpack.c.l.b16 %v405
        %v1025 = vunpack.c.l.b16 %v406
        %v1026 = vunpack.c.h.b16 %v406
        %v1027 = vunpack.c.l.b16 %v407
        %v1028 = vunpack.c.h.b16 %v407
        %v1029 = vunpack.c.l.b16 %v408
        %v1030 = vunpack.c.h.b16 %v408
        %v1031 = vunpack.c.l.b16 %v409
        %v1032 = vunpack.c.h.b16 %v409
        %v1033 = vunpack.c.l.b16 %v410
        %v1034 = vunpack.c.l.b16 %v411
        %v1035 = vunpack.c.h.b16 %v411
        %v1036 = vunpack.c.l.b16 %v412
        %v1037 = vunpack.c.h.b16 %v412
        %v1038 = vunpack.c.l.b16 %v413
        %v1039 = vunpack.c.h.b16 %v413
        %v1040 = vunpack.c.l.b16 %v414
        %v1041 = vunpack.c.h.b16 %v414
        %v1042 = vunpack.c.l.b16 %v415
        %v1043 = vunpack.c.l.b16 %v416
        %v1044 = vunpack.c.h.b16 %v416
        %v1045 = vunpack.c.l.b16 %v417
        %v1046 = vunpack.c.h.b16 %v417
        %v1047 = vunpack.c.l.b16 %v418
        %v1048 = vunpack.c.h.b16 %v418
        %v1049 = vunpack.c.l.b16 %v419
        %v1050 = vunpack.c.h.b16 %v419
        %v1051 = vunpack.c.l.b16 %v420
        %v1052 = vunpack.c.l.b16 %v421
        %v1053 = vunpack.c.h.b16 %v421
        %v1054 = vunpack.c.l.b16 %v422
        %v1055 = vunpack.c.h.b16 %v422
        %v1056 = vunpack.c.l.b16 %v423
        %v1057 = vunpack.c.h.b16 %v423
        %v1058 = vunpack.c.l.b16 %v424
        %v1059 = vunpack.c.h.b16 %v424
        %v1060 = vunpack.c.l.b16 %v425
        %v1061 = vunpack.c.l.b16 %v426
        %v1062 = vunpack.c.h.b16 %v426
        %v1063 = vunpack.c.l.b16 %v427
        %v1064 = vunpack.c.h.b16 %v427
        %v1065 = vunpack.c.l.b16 %v428
        %v1066 = vunpack.c.h.b16 %v428
        %v1067 = vunpack.c.l.b16 %v429
        %v1068 = vunpack.c.h.b16 %v429
        %v1069 = vunpack.c.l.b16 %v430
        %v1070 = vunpack.c.l.b16 %v431
        %v1071 = vunpack.c.h.b16 %v431
        %v1072 = vunpack.c.l.b16 %v432
        %v1073 = vunpack.c.h.b16 %v432
        %v1074 = vunpack.c.l.b16 %v433
        %v1075 = vunpack.c.h.b16 %v433
        %v1076 = vunpack.c.l.b16 %v434
        %v1077 = vunpack.c.h.b16 %v434
        %v1078 = vunpack.c.l.b16 %v435
        %v1079 = vunpack.c.l.b16 %v436
        %v1080 = vunpack.c.h.b16 %v436
        %v1081 = vunpack.c.l.b16 %v437
        %v1082 = vunpack.c.h.b16 %v437
        %v1083 = vunpack.c.l.b16 %v438
        %v1084 = vunpack.c.h.b16 %v438
        %v1085 = vunpack.c.l.b16 %v439
        %v1086 = vunpack.c.h.b16 %v439
        %v1087 = vunpack.c.l.b16 %v440
        %v1088 = vunpack.c.l.b16 %v441
        %v1089 = vunpack.c.h.b16 %v441
        %v1090 = vunpack.c.l.b16 %v442
        %v1091 = vunpack.c.h.b16 %v442
        %v1092 = vunpack.c.l.b16 %v443
        %v1093 = vunpack.c.h.b16 %v443
        %v1094 = vunpack.c.l.b16 %v444
        %v1095 = vunpack.c.h.b16 %v444
        %v1096 = vunpack.c.l.b16 %v445
        %v1097 = vunpack.c.l.b16 %v446
        %v1098 = vunpack.c.h.b16 %v446
        %v1099 = vunpack.c.l.b16 %v447
        %v1100 = vunpack.c.h.b16 %v447
        %v1101 = vunpack.c.l.b16 %v448
        %v1102 = vunpack.c.h.b16 %v448
        %v1103 = vunpack.c.l.b16 %v449
        %v1104 = vunpack.c.h.b16 %v449
        %v1105 = vunpack.c.l.b16 %v450
        %v1106 = vunpack.c.l.b16 %v451
        %v1107 = vunpack.c.h.b16 %v451
        %v1108 = vunpack.c.l.b16 %v452
        %v1109 = vunpack.c.h.b16 %v452
        %v1110 = vunpack.c.l.b16 %v453
        %v1111 = vunpack.c.h.b16 %v453
        %v1112 = vunpack.c.l.b16 %v454
        %v1113 = vunpack.c.h.b16 %v454
        %v1114 = vunpack.c.l.b16 %v455
        %v1115 = vunpack.c.l.b16 %v456
        %v1116 = vunpack.c.h.b16 %v456
        %v1117 = vunpack.c.l.b16 %v457
        %v1118 = vunpack.c.h.b16 %v457
        %v1119 = vunpack.c.l.b16 %v458
        %v1120 = vunpack.c.h.b16 %v458
        %v1121 = vunpack.c.l.b16 %v459
        %v1122 = vunpack.c.h.b16 %v459
        %v1123 = vunpack.c.l.b16 %v460
        %v1124 = vunpack.c.l.b16 %v461
        %v1125 = vunpack.c.h.b16 %v461
        %v1126 = vunpack.c.l.b16 %v462
        %v1127 = vunpack.c.h.b16 %v462
        %v1128 = vunpack.c.l.b16 %v463
        %v1129 = vunpack.c.h.b16 %v463
        %v1130 = vunpack.c.l.b16 %v464
        %v1131 = vunpack.c.h.b16 %v464
        %v1132 = vunpack.c.l.b16 %v465
        %v1133 = vunpack.c.l.b16 %v466
        %v1134 = vunpack.c.h.b16 %v466
        %v1135 = vunpack.c.l.b16 %v467
        %v1136 = vunpack.c.h.b16 %v467
        %v1137 = vunpack.c.l.b16 %v468
        %v1138 = vunpack.c.h.b16 %v468
        %v1139 = vunpack.c.l.b16 %v469
        %v1140 = vunpack.c.h.b16 %v469
        %v1141 = vunpack.c.l.b16 %v470
        %v1142 = vunpack.c.l.b16 %v471
        %v1143 = vunpack.c.h.b16 %v471
        %v1144 = vunpack.c.l.b16 %v472
        %v1145 = vunpack.c.h.b16 %v472
        %v1146 = vunpack.c.l.b16 %v473
        %v1147 = vunpack.c.h.b16 %v473
        %v1148 = vunpack.c.l.b16 %v474
        %v1149 = vunpack.c.h.b16 %v474
        %v1150 = vunpack.c.l.b16 %v475
        %v1151 = vunpack.c.l.b16 %v476
        %v1152 = vunpack.c.h.b16 %v476
        %v1153 = vunpack.c.l.b16 %v477
        %v1154 = vunpack.c.h.b16 %v477
        %v1155 = vunpack.c.l.b16 %v478
        %v1156 = vunpack.c.h.b16 %v478
        %v1157 = vunpack.c.l.b16 %v479
        %v1158 = vunpack.c.h.b16 %v479
        %v1159 = vunpack.c.l.b16 %v480
        %v1160 = vunpack.c.l.b16 %v481
        %v1161 = vunpack.c.h.b16 %v481
        %v1162 = vunpack.c.l.b16 %v482
        %v1163 = vunpack.c.h.b16 %v482
        %v1164 = vunpack.c.l.b16 %v483
        %v1165 = vunpack.c.h.b16 %v483
        %v1166 = vunpack.c.l.b16 %v484
        %v1167 = vunpack.c.h.b16 %v484
        %v1168 = vunpack.c.l.b16 %v485
        %v1169 = vpack.c.b16 %v746, %v737
        %v1170 = vpack.c.b16 %v747, %v738
        %v1171 = vpack.c.b16 %v748, %v739
        %v1172 = vpack.c.b16 %v749, %v740
        %v1173 = vpack.c.b16 %v750, %v741
        %v1174 = vpack.c.b16 %v751, %v742
        %v1175 = vpack.c.b16 %v752, %v743
        %v1176 = vpack.c.b16 %v753, %v744
        %v1177 = vpack.c.b16 %v754, %v745
        %v1178 = vpack.c.b16 %v764, %v755
        %v1179 = vpack.c.b16 %v765, %v756
        %v1180 = vpack.c.b16 %v766, %v757
        %v1181 = vpack.c.b16 %v767, %v758
        %v1182 = vpack.c.b16 %v768, %v759
        %v1183 = vpack.c.b16 %v769, %v760
        %v1184 = vpack.c.b16 %v770, %v761
        %v1185 = vpack.c.b16 %v771, %v762
        %v1186 = vpack.c.b16 %v772, %v763
        %v1187 = vpack.c.b16 %v782, %v773
        %v1188 = vpack.c.b16 %v783, %v774
        %v1189 = vpack.c.b16 %v784, %v775
        %v1190 = vpack.c.b16 %v785, %v776
        %v1191 = vpack.c.b16 %v786, %v777
        %v1192 = vpack.c.b16 %v787, %v778
        %v1193 = vpack.c.b16 %v788, %v779
        %v1194 = vpack.c.b16 %v789, %v780
        %v1195 = vpack.c.b16 %v790, %v781
        %v1196 = vpack.c.b16 %v800, %v791
        %v1197 = vpack.c.b16 %v801, %v792
        %v1198 = vpack.c.b16 %v802, %v793
        %v1199 = vpack.c.b16 %v803, %v794
        %v1200 = vpack.c.b16 %v804, %v795
        %v1201 = vpack.c.b16 %v805, %v796
        %v1202 = vpack.c.b16 %v806, %v797
        %v1203 = vpack.c.b16 %v807, %v798
        %v1204 = vpack.c.b16 %v808, %v799
        %v1205 = vpack.c.b16 %v818, %v809
        %v1206 = vpack.c.b16 %v819, %v810
        %v1207 = vpack.c.b16 %v820, %v811
        %v1208 = vpack.c.b16 %v821, %v812
        %v1209 = vpack.c.b16 %v822, %v813
        %v1210 = vpack.c.b16 %v823, %v814
        %v1211 = vpack.c.b16 %v824, %v815
        %v1212 = vpack.c.b16 %v825, %v816
        %v1213 = vpack.c.b16 %v826, %v817
        %v1214 = vpack.c.b16 %v836, %v827
        %v1215 = vpack.c.b16 %v837, %v828
        %v1216 = vpack.c.b16 %v838, %v829
        %v1217 = vpack.c.b16 %v839, %v830
        %v1218 = vpack.c.b16 %v840, %v831
        %v1219 = vpack.c.b16 %v841, %v832
        %v1220 = vpack.c.b16 %v842, %v833
        %v1221 = vpack.c.b16 %v843, %v834
        %v1222 = vpack.c.b16 %v844, %v835
        %v1223 = vpack.c.b16 %v854, %v845
        %v1224 = vpack.c.b16 %v855, %v846
        %v1225 = vpack.c.b16 %v856, %v847
        %v1226 = vpack.c.b16 %v857, %v848
        %v1227 = vpack.c.b16 %v858, %v849
        %v1228 = vpack.c.b16 %v859, %v850
        %v1229 = vpack.c.b16 %v860, %v851
        %v1230 = vpack.c.b16 %v861, %v852
        %v1231 = vpack.c.b16 %v862, %v853
        %v1232 = vpack.c.b16 %v872, %v863
        %v1233 = vpack.c.b16 %v873, %v864
        %v1234 = vpack.c.b16 %v874, %v865
        %v1235 = vpack.c.b16 %v875, %v866
        %v1236 = vpack.c.b16 %v876, %v867
        %v1237 = vpack.c.b16 %v877, %v868
        %v1238 = vpack.c.b16 %v878, %v869
        %v1239 = vpack.c.b16 %v879, %v870
        %v1240 = vpack.c.b16 %v880, %v871
        %v1241 = vpack.c.b16 %v890, %v881
        %v1242 = vpack.c.b16 %v891, %v882
        %v1243 = vpack.c.b16 %v892, %v883
        %v1244 = vpack.c.b16 %v893, %v884
        %v1245 = vpack.c.b16 %v894, %v885
        %v1246 = vpack.c.b16 %v895, %v886
        %v1247 = vpack.c.b16 %v896, %v887
        %v1248 = vpack.c.b16 %v897, %v888
        %v1249 = vpack.c.b16 %v898, %v889
        %v1250 = vpack.c.b16 %v908, %v899
        %v1251 = vpack.c.b16 %v909, %v900
        %v1252 = vpack.c.b16 %v910, %v901
        %v1253 = vpack.c.b16 %v911, %v902
        %v1254 = vpack.c.b16 %v912, %v903
        %v1255 = vpack.c.b16 %v913, %v904
        %v1256 = vpack.c.b16 %v914, %v905
        %v1257 = vpack.c.b16 %v915, %v906
        %v1258 = vpack.c.b16 %v916, %v907
        %v1259 = vpack.c.b16 %v926, %v917
        %v1260 = vpack.c.b16 %v927, %v918
        %v1261 = vpack.c.b16 %v928, %v919
        %v1262 = vpack.c.b16 %v929, %v920
        %v1263 = vpack.c.b16 %v930, %v921
        %v1264 = vpack.c.b16 %v931, %v922
        %v1265 = vpack.c.b16 %v932, %v923
        %v1266 = vpack.c.b16 %v933, %v924
        %v1267 = vpack.c.b16 %v934, %v925
        %v1268 = vpack.c.b16 %v944, %v935
        %v1269 = vpack.c.b16 %v945, %v936
        %v1270 = vpack.c.b16 %v946, %v937
        %v1271 = vpack.c.b16 %v947, %v938
        %v1272 = vpack.c.b16 %v948, %v939
        %v1273 = vpack.c.b16 %v949, %v940
        %v1274 = vpack.c.b16 %v950, %v941
        %v1275 = vpack.c.b16 %v951, %v942
        %v1276 = vpack.c.b16 %v952, %v943
        %v1277 = vpack.c.b16 %v962, %v953
        %v1278 = vpack.c.b16 %v963, %v954
        %v1279 = vpack.c.b16 %v964, %v955
        %v1280 = vpack.c.b16 %v965, %v956
        %v1281 = vpack.c.b16 %v966, %v957
        %v1282 = vpack.c.b16 %v967, %v958
        %v1283 = vpack.c.b16 %v968, %v959
        %v1284 = vpack.c.b16 %v969, %v960
        %v1285 = vpack.c.b16 %v970, %v961
        %v1286 = vpack.c.b16 %v980, %v971
        %v1287 = vpack.c.b16 %v981, %v972
        %v1288 = vpack.c.b16 %v982, %v973
        %v1289 = vpack.c.b16 %v983, %v974
        %v1290 = vpack.c.b16 %v984, %v975
        %v1291 = vpack.c.b16 %v985, %v976
        %v1292 = vpack.c.b16 %v986, %v977
        %v1293 = vpack.c.b16 %v987, %v978
        %v1294 = vpack.c.b16 %v988, %v979
        %v1295 = vpack.c.b16 %v998, %v989
        %v1296 = vpack.c.b16 %v999, %v990
        %v1297 = vpack.c.b16 %v1000, %v991
        %v1298 = vpack.c.b16 %v1001, %v992
        %v1299 = vpack.c.b16 %v1002, %v993
        %v1300 = vpack.c.b16 %v1003, %v994
        %v1301 = vpack.c.b16 %v1004, %v995
        %v1302 = vpack.c.b16 %v1005, %v996
        %v1303 = vpack.c.b16 %v1006, %v997
        %v1304 = vpack.c.b16 %v1016, %v1007
        %v1305 = vpack.c.b16 %v1017, %v1008
        %v1306 = vpack.c.b16 %v1018, %v1009
        %v1307 = vpack.c.b16 %v1019, %v1010
        %v1308 = vpack.c.b16 %v1020, %v1011
        %v1309 = vpack.c.b16 %v1021, %v1012
        %v1310 = vpack.c.b16 %v1022, %v1013
        %v1311 = vpack.c.b16 %v1023, %v1014
        %v1312 = vpack.c.b16 %v1024, %v1015
        %v1313 = vpack.c.b16 %v1034, %v1025
        %v1314 = vpack.c.b16 %v1035, %v1026
        %v1315 = vpack.c.b16 %v1036, %v1027
        %v1316 = vpack.c.b16 %v1037, %v1028
        %v1317 = vpack.c.b16 %v1038, %v1029
        %v1318 = vpack.c.b16 %v1039, %v1030
        %v1319 = vpack.c.b16 %v1040, %v1031
        %v1320 = vpack.c.b16 %v1041, %v1032
        %v1321 = vpack.c.b16 %v1042, %v1033
        %v1322 = vpack.c.b16 %v1052, %v1043
        %v1323 = vpack.c.b16 %v1053, %v1044
        %v1324 = vpack.c.b16 %v1054, %v1045
        %v1325 = vpack.c.b16 %v1055, %v1046
        %v1326 = vpack.c.b16 %v1056, %v1047
        %v1327 = vpack.c.b16 %v1057, %v1048
        %v1328 = vpack.c.b16 %v1058, %v1049
        %v1329 = vpack.c.b16 %v1059, %v1050
        %v1330 = vpack.c.b16 %v1060, %v1051
        %v1331 = vpack.c.b16 %v1070, %v1061
        %v1332 = vpack.c.b16 %v1071, %v1062
        %v1333 = vpack.c.b16 %v1072, %v1063
        %v1334 = vpack.c.b16 %v1073, %v1064
        %v1335 = vpack.c.b16 %v1074, %v1065
        %v1336 = vpack.c.b16 %v1075, %v1066
        %v1337 = vpack.c.b16 %v1076, %v1067
        %v1338 = vpack.c.b16 %v1077, %v1068
        %v1339 = vpack.c.b16 %v1078, %v1069
        %v1340 = vpack.c.b16 %v1088, %v1079
        %v1341 = vpack.c.b16 %v1089, %v1080
        %v1342 = vpack.c.b16 %v1090, %v1081
        %v1343 = vpack.c.b16 %v1091, %v1082
        %v1344 = vpack.c.b16 %v1092, %v1083
        %v1345 = vpack.c.b16 %v1093, %v1084
        %v1346 = vpack.c.b16 %v1094, %v1085
        %v1347 = vpack.c.b16 %v1095, %v1086
        %v1348 = vpack.c.b16 %v1096, %v1087
        %v1349 = vpack.c.b16 %v1106, %v1097
        %v1350 = vpack.c.b16 %v1107, %v1098
        %v1351 = vpack.c.b16 %v1108, %v1099
        %v1352 = vpack.c.b16 %v1109, %v1100
        %v1353 = vpack.c.b16 %v1110, %v1101
        %v1354 = vpack.c.b16 %v1111, %v1102
        %v1355 = vpack.c.b16 %v1112, %v1103
        %v1356 = vpack.c.b16 %v1113, %v1104
        %v1357 = vpack.c.b16 %v1114, %v1105
        %v1358 = vpack.c.b16 %v1124, %v1115
        %v1359 = vpack.c.b16 %v1125, %v1116
        %v1360 = vpack.c.b16 %v1126, %v1117
        %v1361 = vpack.c.b16 %v1127, %v1118
        %v1362 = vpack.c.b16 %v1128, %v1119
        %v1363 = vpack.c.b16 %v1129, %v1120
        %v1364 = vpack.c.b16 %v1130, %v1121
        %v1365 = vpack.c.b16 %v1131, %v1122
        %v1366 = vpack.c.b16 %v1132, %v1123
        %v1367 = vpack.c.b16 %v1142, %v1133
        %v1368 = vpack.c.b16 %v1143, %v1134
        %v1369 = vpack.c.b16 %v1144, %v1135
        %v1370 = vpack.c.b16 %v1145, %v1136
        %v1371 = vpack.c.b16 %v1146, %v1137
        %v1372 = vpack.c.b16 %v1147, %v1138
        %v1373 = vpack.c.b16 %v1148, %v1139
        %v1374 = vpack.c.b16 %v1149, %v1140
        %v1375 = vpack.c.b16 %v1150, %v1141
        %v1376 = vpack.c.b16 %v1160, %v1151
        %v1377 = vpack.c.b16 %v1161, %v1152
        %v1378 = vpack.c.b16 %v1162, %v1153
        %v1379 = vpack.c.b16 %v1163, %v1154
        %v1380 = vpack.c.b16 %v1164, %v1155
        %v1381 = vpack.c.b16 %v1165, %v1156
        %v1382 = vpack.c.b16 %v1166, %v1157
        %v1383 = vpack.c.b16 %v1167, %v1158
        %v1384 = vpack.c.b16 %v1168, %v1159
        %1601 = vmatprep.subr.bf16.mxu0 %v1233
        %1602 = vmatpush1.bf16.msra.mxu0 %v1232
        %1603 = vmatprep.subr.bf16.mxu0 %v1224
        %1604 = vmatpush1.bf16.msra.mxu0 %v1223
        %1605 = vmatprep.subr.bf16.mxu0 %v1215
        %1606 = vmatpush1.bf16.msra.mxu0 %v1214
        %1607 = vmatprep.subr.bf16.mxu0 %v1206
        %1608 = vmatpush1.bf16.msra.mxu0 %v1205
        %1609 = vmatprep.subr.bf16.mxu0 %v1197
        %1610 = vmatpush1.bf16.msra.mxu0 %v1196
        %1611 = vmatprep.subr.bf16.mxu0 %v1188
        %1612 = vmatpush1.bf16.msra.mxu0 %v1187
        %1613 = vmatprep.subr.bf16.mxu0 %v1179
        %1614 = vmatpush1.bf16.msra.mxu0 %v1178
        %1615 = vmatprep.subr.bf16.mxu0 %v1170
        %1616 = vmatpush1.bf16.msra.mxu0 %v1169
        %1617 = vmatprep.subr.bf16.mxu0 %v1305
        %1618 = vmatpush2.bf16.msra.mxu0 %v1304
        %1619 = vmatprep.subr.bf16.mxu0 %v1296
        %1620 = vmatpush2.bf16.msra.mxu0 %v1295
        %1621 = vmatprep.subr.bf16.mxu0 %v1287
        %1622 = vmatpush2.bf16.msra.mxu0 %v1286
        %1623 = vmatprep.subr.bf16.mxu0 %v1278
        %1624 = vmatpush2.bf16.msra.mxu0 %v1277
        %1625 = vmatprep.subr.bf16.mxu0 %v1269
        %1626 = vmatpush2.bf16.msra.mxu0 %v1268
        %1627 = vmatprep.subr.bf16.mxu0 %v1260
        %1628 = vmatpush2.bf16.msra.mxu0 %v1259
        %1629 = vmatprep.subr.bf16.mxu0 %v1251
        %1630 = vmatpush2.bf16.msra.mxu0 %v1250
        %1631 = vmatprep.subr.bf16.mxu0 %v1242
        %1632 = vmatpush2.bf16.msra.mxu0 %v1241
        %1633 = vmatprep.mubr.bf16.mxu0 %v492
        %1634 = vmatmul.mubr.bf16.gmra.mxu0 %v491
        %v1635 = vpop.f32.mrf.mxu0
        %v1636 = vadd.f32 0.0, %v1635
        %v1637 = vpop.f32.mrf.mxu0
        %v1638 = vadd.f32 0.0, %v1637
        %v1639 = vpop.f32.mrf.mxu0
        %v1640 = vpop.f32.mrf.mxu0
        %1641 = vdwg.mxu0
        %1642 = vmatprep.subr.bf16.mxu0 %v1377
        %1643 = vmatpush1.bf16.msra.mxu0 %v1376
        %1644 = vmatprep.subr.bf16.mxu0 %v1368
        %1645 = vmatpush1.bf16.msra.mxu0 %v1367
        %1646 = vmatprep.subr.bf16.mxu0 %v1359
        %1647 = vmatpush1.bf16.msra.mxu0 %v1358
        %1648 = vmatprep.subr.bf16.mxu0 %v1350
        %1649 = vmatpush1.bf16.msra.mxu0 %v1349
        %1650 = vmatprep.subr.bf16.mxu0 %v1341
        %1651 = vmatpush1.bf16.msra.mxu0 %v1340
        %1652 = vmatprep.subr.bf16.mxu0 %v1332
        %1653 = vmatpush1.bf16.msra.mxu0 %v1331
        %1654 = vmatprep.subr.bf16.mxu0 %v1323
        %1655 = vmatpush1.bf16.msra.mxu0 %v1322
        %1656 = vmatprep.subr.bf16.mxu0 %v1314
        %1657 = vmatpush1.bf16.msra.mxu0 %v1313
        %1658 = vmatprep.subr.bf16.mxu0 0
        %1659 = vmatpush2.bf16.msra.mxu0 0
        %1660 = vmatprep.subr.bf16.mxu0 0
        %1661 = vmatpush2.bf16.msra.mxu0 0
        %1662 = vmatprep.subr.bf16.mxu0 0
        %1663 = vmatpush2.bf16.msra.mxu0 0
        %1664 = vmatprep.subr.bf16.mxu0 0
        %1665 = vmatpush2.bf16.msra.mxu0 0
        %1666 = vmatprep.subr.bf16.mxu0 0
        %1667 = vmatpush2.bf16.msra.mxu0 0
        %1668 = vmatprep.subr.bf16.mxu0 0
        %1669 = vmatpush2.bf16.msra.mxu0 0
        %1670 = vmatprep.subr.bf16.mxu0 0
        %1671 = vmatpush2.bf16.msra.mxu0 0
        %1672 = vmatprep.subr.bf16.mxu0 0
        %1673 = vmatpush2.bf16.msra.mxu0 0
        %1674 = vmatprep.mubr.bf16.mxu0 0
        %1675 = vmatmul.mubr.bf16.gmra.mxu0 %v493
        %v1676 = vpop.f32.mrf.mxu0
        %v1677 = vadd.f32 %v1636, %v1676
        %v1678 = vpop.f32.mrf.mxu0
        %v1679 = vadd.f32 %v1638, %v1678
        %v1680 = vpop.f32.mrf.mxu0
        %v1681 = vpop.f32.mrf.mxu0
        %1682 = vdwg.mxu0
        %1683 = vmatprep.subr.bf16.mxu0 %v1235
        %1684 = vmatpush1.bf16.msra.mxu0 %v1234
        %1685 = vmatprep.subr.bf16.mxu0 %v1226
        %1686 = vmatpush1.bf16.msra.mxu0 %v1225
        %1687 = vmatprep.subr.bf16.mxu0 %v1217
        %1688 = vmatpush1.bf16.msra.mxu0 %v1216
        %1689 = vmatprep.subr.bf16.mxu0 %v1208
        %1690 = vmatpush1.bf16.msra.mxu0 %v1207
        %1691 = vmatprep.subr.bf16.mxu0 %v1199
        %1692 = vmatpush1.bf16.msra.mxu0 %v1198
        %1693 = vmatprep.subr.bf16.mxu0 %v1190
        %1694 = vmatpush1.bf16.msra.mxu0 %v1189
        %1695 = vmatprep.subr.bf16.mxu0 %v1181
        %1696 = vmatpush1.bf16.msra.mxu0 %v1180
        %1697 = vmatprep.subr.bf16.mxu0 %v1172
        %1698 = vmatpush1.bf16.msra.mxu0 %v1171
        %1699 = vmatprep.subr.bf16.mxu0 %v1307
        %1700 = vmatpush2.bf16.msra.mxu0 %v1306
        %1701 = vmatprep.subr.bf16.mxu0 %v1298
        %1702 = vmatpush2.bf16.msra.mxu0 %v1297
        %1703 = vmatprep.subr.bf16.mxu0 %v1289
        %1704 = vmatpush2.bf16.msra.mxu0 %v1288
        %1705 = vmatprep.subr.bf16.mxu0 %v1280
        %1706 = vmatpush2.bf16.msra.mxu0 %v1279
        %1707 = vmatprep.subr.bf16.mxu0 %v1271
        %1708 = vmatpush2.bf16.msra.mxu0 %v1270
        %1709 = vmatprep.subr.bf16.mxu0 %v1262
        %1710 = vmatpush2.bf16.msra.mxu0 %v1261
        %1711 = vmatprep.subr.bf16.mxu0 %v1253
        %1712 = vmatpush2.bf16.msra.mxu0 %v1252
        %1713 = vmatprep.subr.bf16.mxu0 %v1244
        %1714 = vmatpush2.bf16.msra.mxu0 %v1243
        %1715 = vmatprep.mubr.bf16.mxu0 %v492
        %1716 = vmatmul.mubr.bf16.gmra.mxu0 %v491
        %v1717 = vpop.f32.mrf.mxu0
        %v1718 = vadd.f32 0.0, %v1717
        %v1719 = vpop.f32.mrf.mxu0
        %v1720 = vadd.f32 0.0, %v1719
        %v1721 = vpop.f32.mrf.mxu0
        %v1722 = vpop.f32.mrf.mxu0
        %1723 = vdwg.mxu0
        %1724 = vmatprep.subr.bf16.mxu0 %v1379
        %1725 = vmatpush1.bf16.msra.mxu0 %v1378
        %1726 = vmatprep.subr.bf16.mxu0 %v1370
        %1727 = vmatpush1.bf16.msra.mxu0 %v1369
        %1728 = vmatprep.subr.bf16.mxu0 %v1361
        %1729 = vmatpush1.bf16.msra.mxu0 %v1360
        %1730 = vmatprep.subr.bf16.mxu0 %v1352
        %1731 = vmatpush1.bf16.msra.mxu0 %v1351
        %1732 = vmatprep.subr.bf16.mxu0 %v1343
        %1733 = vmatpush1.bf16.msra.mxu0 %v1342
        %1734 = vmatprep.subr.bf16.mxu0 %v1334
        %1735 = vmatpush1.bf16.msra.mxu0 %v1333
        %1736 = vmatprep.subr.bf16.mxu0 %v1325
        %1737 = vmatpush1.bf16.msra.mxu0 %v1324
        %1738 = vmatprep.subr.bf16.mxu0 %v1316
        %1739 = vmatpush1.bf16.msra.mxu0 %v1315
        %1740 = vmatprep.subr.bf16.mxu0 0
        %1741 = vmatpush2.bf16.msra.mxu0 0
        %1742 = vmatprep.subr.bf16.mxu0 0
        %1743 = vmatpush2.bf16.msra.mxu0 0
        %1744 = vmatprep.subr.bf16.mxu0 0
        %1745 = vmatpush2.bf16.msra.mxu0 0
        %1746 = vmatprep.subr.bf16.mxu0 0
        %1747 = vmatpush2.bf16.msra.mxu0 0
        %1748 = vmatprep.subr.bf16.mxu0 0
        %1749 = vmatpush2.bf16.msra.mxu0 0
        %1750 = vmatprep.subr.bf16.mxu0 0
        %1751 = vmatpush2.bf16.msra.mxu0 0
        %1752 = vmatprep.subr.bf16.mxu0 0
        %1753 = vmatpush2.bf16.msra.mxu0 0
        %1754 = vmatprep.subr.bf16.mxu0 0
        %1755 = vmatpush2.bf16.msra.mxu0 0
        %1756 = vmatprep.mubr.bf16.mxu0 0
        %1757 = vmatmul.mubr.bf16.gmra.mxu0 %v493
        %v1758 = vpop.f32.mrf.mxu0
        %v1759 = vadd.f32 %v1718, %v1758
        %v1760 = vpop.f32.mrf.mxu0
        %v1761 = vadd.f32 %v1720, %v1760
        %v1762 = vpop.f32.mrf.mxu0
        %v1763 = vpop.f32.mrf.mxu0
        %1764 = vdwg.mxu0
        %1765 = vmatprep.subr.bf16.mxu0 %v1237
        %1766 = vmatpush1.bf16.msra.mxu0 %v1236
        %1767 = vmatprep.subr.bf16.mxu0 %v1228
        %1768 = vmatpush1.bf16.msra.mxu0 %v1227
        %1769 = vmatprep.subr.bf16.mxu0 %v1219
        %1770 = vmatpush1.bf16.msra.mxu0 %v1218
        %1771 = vmatprep.subr.bf16.mxu0 %v1210
        %1772 = vmatpush1.bf16.msra.mxu0 %v1209
        %1773 = vmatprep.subr.bf16.mxu0 %v1201
        %1774 = vmatpush1.bf16.msra.mxu0 %v1200
        %1775 = vmatprep.subr.bf16.mxu0 %v1192
        %1776 = vmatpush1.bf16.msra.mxu0 %v1191
        %1777 = vmatprep.subr.bf16.mxu0 %v1183
        %1778 = vmatpush1.bf16.msra.mxu0 %v1182
        %1779 = vmatprep.subr.bf16.mxu0 %v1174
        %1780 = vmatpush1.bf16.msra.mxu0 %v1173
        %1781 = vmatprep.subr.bf16.mxu0 %v1309
        %1782 = vmatpush2.bf16.msra.mxu0 %v1308
        %1783 = vmatprep.subr.bf16.mxu0 %v1300
        %1784 = vmatpush2.bf16.msra.mxu0 %v1299
        %1785 = vmatprep.subr.bf16.mxu0 %v1291
        %1786 = vmatpush2.bf16.msra.mxu0 %v1290
        %1787 = vmatprep.subr.bf16.mxu0 %v1282
        %1788 = vmatpush2.bf16.msra.mxu0 %v1281
        %1789 = vmatprep.subr.bf16.mxu0 %v1273
        %1790 = vmatpush2.bf16.msra.mxu0 %v1272
        %1791 = vmatprep.subr.bf16.mxu0 %v1264
        %1792 = vmatpush2.bf16.msra.mxu0 %v1263
        %1793 = vmatprep.subr.bf16.mxu0 %v1255
        %1794 = vmatpush2.bf16.msra.mxu0 %v1254
        %1795 = vmatprep.subr.bf16.mxu0 %v1246
        %1796 = vmatpush2.bf16.msra.mxu0 %v1245
        %1797 = vmatprep.mubr.bf16.mxu0 %v492
        %1798 = vmatmul.mubr.bf16.gmra.mxu0 %v491
        %v1799 = vpop.f32.mrf.mxu0
        %v1800 = vadd.f32 0.0, %v1799
        %v1801 = vpop.f32.mrf.mxu0
        %v1802 = vadd.f32 0.0, %v1801
        %v1803 = vpop.f32.mrf.mxu0
        %v1804 = vpop.f32.mrf.mxu0
        %1805 = vdwg.mxu0
        %1806 = vmatprep.subr.bf16.mxu0 %v1381
        %1807 = vmatpush1.bf16.msra.mxu0 %v1380
        %1808 = vmatprep.subr.bf16.mxu0 %v1372
        %1809 = vmatpush1.bf16.msra.mxu0 %v1371
        %1810 = vmatprep.subr.bf16.mxu0 %v1363
        %1811 = vmatpush1.bf16.msra.mxu0 %v1362
        %1812 = vmatprep.subr.bf16.mxu0 %v1354
        %1813 = vmatpush1.bf16.msra.mxu0 %v1353
        %1814 = vmatprep.subr.bf16.mxu0 %v1345
        %1815 = vmatpush1.bf16.msra.mxu0 %v1344
        %1816 = vmatprep.subr.bf16.mxu0 %v1336
        %1817 = vmatpush1.bf16.msra.mxu0 %v1335
        %1818 = vmatprep.subr.bf16.mxu0 %v1327
        %1819 = vmatpush1.bf16.msra.mxu0 %v1326
        %1820 = vmatprep.subr.bf16.mxu0 %v1318
        %1821 = vmatpush1.bf16.msra.mxu0 %v1317
        %1822 = vmatprep.subr.bf16.mxu0 0
        %1823 = vmatpush2.bf16.msra.mxu0 0
        %1824 = vmatprep.subr.bf16.mxu0 0
        %1825 = vmatpush2.bf16.msra.mxu0 0
        %1826 = vmatprep.subr.bf16.mxu0 0
        %1827 = vmatpush2.bf16.msra.mxu0 0
        %1828 = vmatprep.subr.bf16.mxu0 0
        %1829 = vmatpush2.bf16.msra.mxu0 0
        %1830 = vmatprep.subr.bf16.mxu0 0
        %1831 = vmatpush2.bf16.msra.mxu0 0
        %1832 = vmatprep.subr.bf16.mxu0 0
        %1833 = vmatpush2.bf16.msra.mxu0 0
        %1834 = vmatprep.subr.bf16.mxu0 0
        %1835 = vmatpush2.bf16.msra.mxu0 0
        %1836 = vmatprep.subr.bf16.mxu0 0
        %1837 = vmatpush2.bf16.msra.mxu0 0
        %1838 = vmatprep.mubr.bf16.mxu0 0
        %1839 = vmatmul.mubr.bf16.gmra.mxu0 %v493
        %v1840 = vpop.f32.mrf.mxu0
        %v1841 = vadd.f32 %v1800, %v1840
        %v1842 = vpop.f32.mrf.mxu0
        %v1843 = vadd.f32 %v1802, %v1842
        %v1844 = vpop.f32.mrf.mxu0
        %v1845 = vpop.f32.mrf.mxu0
        %1846 = vdwg.mxu0
        %1847 = vmatprep.subr.bf16.mxu0 %v1239
        %1848 = vmatpush1.bf16.msra.mxu0 %v1238
        %1849 = vmatprep.subr.bf16.mxu0 %v1230
        %1850 = vmatpush1.bf16.msra.mxu0 %v1229
        %1851 = vmatprep.subr.bf16.mxu0 %v1221
        %1852 = vmatpush1.bf16.msra.mxu0 %v1220
        %1853 = vmatprep.subr.bf16.mxu0 %v1212
        %1854 = vmatpush1.bf16.msra.mxu0 %v1211
        %1855 = vmatprep.subr.bf16.mxu0 %v1203
        %1856 = vmatpush1.bf16.msra.mxu0 %v1202
        %1857 = vmatprep.subr.bf16.mxu0 %v1194
        %1858 = vmatpush1.bf16.msra.mxu0 %v1193
        %1859 = vmatprep.subr.bf16.mxu0 %v1185
        %1860 = vmatpush1.bf16.msra.mxu0 %v1184
        %1861 = vmatprep.subr.bf16.mxu0 %v1176
        %1862 = vmatpush1.bf16.msra.mxu0 %v1175
        %1863 = vmatprep.subr.bf16.mxu0 %v1311
        %1864 = vmatpush2.bf16.msra.mxu0 %v1310
        %1865 = vmatprep.subr.bf16.mxu0 %v1302
        %1866 = vmatpush2.bf16.msra.mxu0 %v1301
        %1867 = vmatprep.subr.bf16.mxu0 %v1293
        %1868 = vmatpush2.bf16.msra.mxu0 %v1292
        %1869 = vmatprep.subr.bf16.mxu0 %v1284
        %1870 = vmatpush2.bf16.msra.mxu0 %v1283
        %1871 = vmatprep.subr.bf16.mxu0 %v1275
        %1872 = vmatpush2.bf16.msra.mxu0 %v1274
        %1873 = vmatprep.subr.bf16.mxu0 %v1266
        %1874 = vmatpush2.bf16.msra.mxu0 %v1265
        %1875 = vmatprep.subr.bf16.mxu0 %v1257
        %1876 = vmatpush2.bf16.msra.mxu0 %v1256
        %1877 = vmatprep.subr.bf16.mxu0 %v1248
        %1878 = vmatpush2.bf16.msra.mxu0 %v1247
        %1879 = vmatprep.mubr.bf16.mxu0 %v492
        %1880 = vmatmul.mubr.bf16.gmra.mxu0 %v491
        %v1881 = vpop.f32.mrf.mxu0
        %v1882 = vadd.f32 0.0, %v1881
        %v1883 = vpop.f32.mrf.mxu0
        %v1884 = vadd.f32 0.0, %v1883
        %v1885 = vpop.f32.mrf.mxu0
        %v1886 = vpop.f32.mrf.mxu0
        %1887 = vdwg.mxu0
        %1888 = vmatprep.subr.bf16.mxu0 %v1383
        %1889 = vmatpush1.bf16.msra.mxu0 %v1382
        %1890 = vmatprep.subr.bf16.mxu0 %v1374
        %1891 = vmatpush1.bf16.msra.mxu0 %v1373
        %1892 = vmatprep.subr.bf16.mxu0 %v1365
        %1893 = vmatpush1.bf16.msra.mxu0 %v1364
        %1894 = vmatprep.subr.bf16.mxu0 %v1356
        %1895 = vmatpush1.bf16.msra.mxu0 %v1355
        %1896 = vmatprep.subr.bf16.mxu0 %v1347
        %1897 = vmatpush1.bf16.msra.mxu0 %v1346
        %1898 = vmatprep.subr.bf16.mxu0 %v1338
        %1899 = vmatpush1.bf16.msra.mxu0 %v1337
        %1900 = vmatprep.subr.bf16.mxu0 %v1329
        %1901 = vmatpush1.bf16.msra.mxu0 %v1328
        %1902 = vmatprep.subr.bf16.mxu0 %v1320
        %1903 = vmatpush1.bf16.msra.mxu0 %v1319
        %1904 = vmatprep.subr.bf16.mxu0 0
        %1905 = vmatpush2.bf16.msra.mxu0 0
        %1906 = vmatprep.subr.bf16.mxu0 0
        %1907 = vmatpush2.bf16.msra.mxu0 0
        %1908 = vmatprep.subr.bf16.mxu0 0
        %1909 = vmatpush2.bf16.msra.mxu0 0
        %1910 = vmatprep.subr.bf16.mxu0 0
        %1911 = vmatpush2.bf16.msra.mxu0 0
        %1912 = vmatprep.subr.bf16.mxu0 0
        %1913 = vmatpush2.bf16.msra.mxu0 0
        %1914 = vmatprep.subr.bf16.mxu0 0
        %1915 = vmatpush2.bf16.msra.mxu0 0
        %1916 = vmatprep.subr.bf16.mxu0 0
        %1917 = vmatpush2.bf16.msra.mxu0 0
        %1918 = vmatprep.subr.bf16.mxu0 0
        %1919 = vmatpush2.bf16.msra.mxu0 0
        %1920 = vmatprep.mubr.bf16.mxu0 0
        %1921 = vmatmul.mubr.bf16.gmra.mxu0 %v493
        %v1922 = vpop.f32.mrf.mxu0
        %v1923 = vadd.f32 %v1882, %v1922
        %v1924 = vpop.f32.mrf.mxu0
        %v1925 = vadd.f32 %v1884, %v1924
        %v1926 = vpop.f32.mrf.mxu0
        %v1927 = vpop.f32.mrf.mxu0
        %1928 = vdwg.mxu0
        %1929 = vmatprep.subr.bf16.mxu0 0
        %1930 = vmatpush1.bf16.msra.mxu0 %v1240
        %1931 = vmatprep.subr.bf16.mxu0 0
        %1932 = vmatpush1.bf16.msra.mxu0 %v1231
        %1933 = vmatprep.subr.bf16.mxu0 0
        %1934 = vmatpush1.bf16.msra.mxu0 %v1222
        %1935 = vmatprep.subr.bf16.mxu0 0
        %1936 = vmatpush1.bf16.msra.mxu0 %v1213
        %1937 = vmatprep.subr.bf16.mxu0 0
        %1938 = vmatpush1.bf16.msra.mxu0 %v1204
        %1939 = vmatprep.subr.bf16.mxu0 0
        %1940 = vmatpush1.bf16.msra.mxu0 %v1195
        %1941 = vmatprep.subr.bf16.mxu0 0
        %1942 = vmatpush1.bf16.msra.mxu0 %v1186
        %1943 = vmatprep.subr.bf16.mxu0 0
        %1944 = vmatpush1.bf16.msra.mxu0 %v1177
        %1945 = vmatprep.subr.bf16.mxu0 0
        %1946 = vmatpush2.bf16.msra.mxu0 %v1312
        %1947 = vmatprep.subr.bf16.mxu0 0
        %1948 = vmatpush2.bf16.msra.mxu0 %v1303
        %1949 = vmatprep.subr.bf16.mxu0 0
        %1950 = vmatpush2.bf16.msra.mxu0 %v1294
        %1951 = vmatprep.subr.bf16.mxu0 0
        %1952 = vmatpush2.bf16.msra.mxu0 %v1285
        %1953 = vmatprep.subr.bf16.mxu0 0
        %1954 = vmatpush2.bf16.msra.mxu0 %v1276
        %1955 = vmatprep.subr.bf16.mxu0 0
        %1956 = vmatpush2.bf16.msra.mxu0 %v1267
        %1957 = vmatprep.subr.bf16.mxu0 0
        %1958 = vmatpush2.bf16.msra.mxu0 %v1258
        %1959 = vmatprep.subr.bf16.mxu0 0
        %1960 = vmatpush2.bf16.msra.mxu0 %v1249
        %1961 = vmatprep.mubr.bf16.mxu0 %v492
        %1962 = vmatmul.mubr.bf16.gmra.mxu0 %v491
        %v1963 = vpop.f32.mrf.mxu0
        %v1964 = vadd.f32 0.0, %v1963
        %v1965 = vpop.f32.mrf.mxu0
        %v1966 = vpop.f32.mrf.mxu0
        %v1967 = vpop.f32.mrf.mxu0
        %1968 = vdwg.mxu0
        %1969 = vmatprep.subr.bf16.mxu0 0
        %1970 = vmatpush1.bf16.msra.mxu0 %v1384
        %1971 = vmatprep.subr.bf16.mxu0 0
        %1972 = vmatpush1.bf16.msra.mxu0 %v1375
        %1973 = vmatprep.subr.bf16.mxu0 0
        %1974 = vmatpush1.bf16.msra.mxu0 %v1366
        %1975 = vmatprep.subr.bf16.mxu0 0
        %1976 = vmatpush1.bf16.msra.mxu0 %v1357
        %1977 = vmatprep.subr.bf16.mxu0 0
        %1978 = vmatpush1.bf16.msra.mxu0 %v1348
        %1979 = vmatprep.subr.bf16.mxu0 0
        %1980 = vmatpush1.bf16.msra.mxu0 %v1339
        %1981 = vmatprep.subr.bf16.mxu0 0
        %1982 = vmatpush1.bf16.msra.mxu0 %v1330
        %1983 = vmatprep.subr.bf16.mxu0 0
        %1984 = vmatpush1.bf16.msra.mxu0 %v1321
        %1985 = vmatprep.subr.bf16.mxu0 0
        %1986 = vmatpush2.bf16.msra.mxu0 0
        %1987 = vmatprep.subr.bf16.mxu0 0
        %1988 = vmatpush2.bf16.msra.mxu0 0
        %1989 = vmatprep.subr.bf16.mxu0 0
        %1990 = vmatpush2.bf16.msra.mxu0 0
        %1991 = vmatprep.subr.bf16.mxu0 0
        %1992 = vmatpush2.bf16.msra.mxu0 0
        %1993 = vmatprep.subr.bf16.mxu0 0
        %1994 = vmatpush2.bf16.msra.mxu0 0
        %1995 = vmatprep.subr.bf16.mxu0 0
        %1996 = vmatpush2.bf16.msra.mxu0 0
        %1997 = vmatprep.subr.bf16.mxu0 0
        %1998 = vmatpush2.bf16.msra.mxu0 0
        %1999 = vmatprep.subr.bf16.mxu0 0
        %2000 = vmatpush2.bf16.msra.mxu0 0
        %2001 = vmatprep.mubr.bf16.mxu0 0
        %2002 = vmatmul.mubr.bf16.gmra.mxu0 %v493
        %v2003 = vpop.f32.mrf.mxu0
        %v2004 = vadd.f32 %v1964, %v2003
        %v2005 = vpop.f32.mrf.mxu0
        %v2006 = vpop.f32.mrf.mxu0
        %v2007 = vpop.f32.mrf.mxu0
        %2008 = vdwg.mxu0
        %v2009 = vpack.c.bf16 %v1677, %v1677
        %v2010 = vpack.c.bf16 %v1679, %v1679
        %v2011 = vpack.c.bf16 %v1759, %v1759
        %v2012 = vpack.c.bf16 %v1761, %v1761
        %v2013 = vpack.c.bf16 %v1841, %v1841
        %v2014 = vpack.c.bf16 %v1843, %v1843
        %v2015 = vpack.c.bf16 %v1923, %v1923
        %v2016 = vpack.c.bf16 %v1925, %v1925
        %v2017 = vpack.c.bf16 %v2004, %v2004
        %v2018 = vld [vmem:[%s3] sm:$0x7]
        %v2019 = vlaneseq
        %v2020 = vshrl.u32 %v2019, 7
        %v2021 = vlaneseq
        %v2022 = vand.u32 %v2021, 127
        %vm2023 = vcmp.le.s32.totalorder %v2022, %v2020
        %vm2024 = vcmask 523264
        %v2026 = vsel %vm2024, %v2009, 0
        %v2029 = vsel %vm2024, %v2012, 0
        %2031 = vmatprep.subr.bf16.mxu0 0
        %2032 = vmatpush1.bf16.xpose.msra.mxu0 0
        %2033 = vmatprep.subr.bf16.mxu0 0
        %2034 = vmatpush1.bf16.xpose.msra.mxu0 0
        %2035 = vmatprep.subr.bf16.mxu0 0
        %2036 = vmatpush1.bf16.xpose.msra.mxu0 0
        %2037 = vmatprep.subr.bf16.mxu0 0
        %2038 = vmatpush1.bf16.xpose.msra.mxu0 0
        %2039 = vmatprep.subr.bf16.mxu0 0
        %2040 = vmatpush1.bf16.xpose.msra.mxu0 0
        %2041 = vmatprep.subr.bf16.mxu0 0
        %2042 = vmatpush1.bf16.xpose.msra.mxu0 0
        %2043 = vmatprep.subr.bf16.mxu0 0
        %2044 = vmatpush1.bf16.xpose.msra.mxu0 0
        %2045 = vmatprep.subr.bf16.mxu0 0
        %2046 = vmatpush1.bf16.xpose.msra.mxu0 %v2029
        %2047 = vmatprep.subr.bf16.mxu0 0
        %2048 = vmatpush2.bf16.xpose.msra.mxu0 0
        %2049 = vmatprep.subr.bf16.mxu0 0
        %2050 = vmatpush2.bf16.xpose.msra.mxu0 0
        %2051 = vmatprep.subr.bf16.mxu0 0
        %2052 = vmatpush2.bf16.xpose.msra.mxu0 0
        %2053 = vmatprep.subr.bf16.mxu0 0
        %2054 = vmatpush2.bf16.xpose.msra.mxu0 0
        %2055 = vmatprep.subr.bf16.mxu0 0
        %2056 = vmatpush2.bf16.xpose.msra.mxu0 0
        %2057 = vmatprep.subr.bf16.mxu0 0
        %2058 = vmatpush2.bf16.xpose.msra.mxu0 0
        %2059 = vmatprep.subr.bf16.mxu0 0
        %2060 = vmatpush2.bf16.xpose.msra.mxu0 0
        %2061 = vmatprep.subr.bf16.mxu0 0
        %2062 = vmatpush2.bf16.xpose.msra.mxu0 0
        %2063 = vmatprep.mubr.bf16.mxu0 0
        %2064 = vmatmul.mubr.bf16.gmra.mxu0 %v2026
        %v2065 = vpop.f32.mrf.mxu0
        %v2066 = vadd.f32 0.0, %v2065
        %v2067 = vpop.f32.mrf.mxu0
        %v2068 = vpop.f32.mrf.mxu0
        %v2069 = vpop.f32.mrf.mxu0
        %2070 = vdwg.mxu0
        %v2071 = vsel %vm2023, %v2066, -inf
        %vm2072 = vcmask 64512
        %v2073 = vsel %vm2072, %v2071, -inf
        %2074 = vmax.xlane.f32.xlu0 %v2073
        %v2075 = vpop.xlane.xlu0 %2074
        %v2076 = vsub.f32 %v2071, %v2075
        %v2077 = vmul.f32 %v2076, 1.442695
        %v2078 = vpow.pop %v2077
        %v2079 = vsel %vm2072, %v2078, 0.0
        %2080 = vadd.xlane.f32.xlu0 %v2079
        %v2081 = vpop.xlane.xlu0 %2080
        %v2082 = vrcp.pop %v2081
        %v2083 = vmul.f32 %v2078, %v2082
        %v2084 = vpack.c.bf16 %v2083, %v2083
        %v2086 = vsel %vm2072, %v2084, 0
        %vm2088 = vcmask 1043456
        %v2090 = vsel %vm2088, %v2015, 0
        %2092 = vmatprep.subr.bf16.mxu0 0
        %2093 = vmatpush1.bf16.msra.mxu0 0
        %2094 = vmatprep.subr.bf16.mxu0 0
        %2095 = vmatpush1.bf16.msra.mxu0 0
        %2096 = vmatprep.subr.bf16.mxu0 0
        %2097 = vmatpush1.bf16.msra.mxu0 0
        %2098 = vmatprep.subr.bf16.mxu0 0
        %2099 = vmatpush1.bf16.msra.mxu0 0
        %2100 = vmatprep.subr.bf16.mxu0 0
        %2101 = vmatpush1.bf16.msra.mxu0 0
        %2102 = vmatprep.subr.bf16.mxu0 0
        %2103 = vmatpush1.bf16.msra.mxu0 0
        %2104 = vmatprep.subr.bf16.mxu0 0
        %2105 = vmatpush1.bf16.msra.mxu0 0
        %2106 = vmatprep.subr.bf16.mxu0 0
        %2107 = vmatpush1.bf16.msra.mxu0 %v2090
        %2108 = vmatprep.subr.bf16.mxu0 0
        %2109 = vmatpush2.bf16.msra.mxu0 0
        %2110 = vmatprep.subr.bf16.mxu0 0
        %2111 = vmatpush2.bf16.msra.mxu0 0
        %2112 = vmatprep.subr.bf16.mxu0 0
        %2113 = vmatpush2.bf16.msra.mxu0 0
        %2114 = vmatprep.subr.bf16.mxu0 0
        %2115 = vmatpush2.bf16.msra.mxu0 0
        %2116 = vmatprep.subr.bf16.mxu0 0
        %2117 = vmatpush2.bf16.msra.mxu0 0
        %2118 = vmatprep.subr.bf16.mxu0 0
        %2119 = vmatpush2.bf16.msra.mxu0 0
        %2120 = vmatprep.subr.bf16.mxu0 0
        %2121 = vmatpush2.bf16.msra.mxu0 0
        %2122 = vmatprep.subr.bf16.mxu0 0
        %2123 = vmatpush2.bf16.msra.mxu0 0
        %2124 = vmatprep.mubr.bf16.mxu0 0
        %2125 = vmatmul.mubr.bf16.gmra.mxu0 %v2086
        %v2126 = vpop.f32.mrf.mxu0
        %v2127 = vadd.f32 0.0, %v2126
        %v2128 = vpop.f32.mrf.mxu0
        %v2129 = vpop.f32.mrf.mxu0
        %v2130 = vpop.f32.mrf.mxu0
        %2131 = vdwg.mxu0
        %v2132 = vpack.c.bf16 %v2127, %v2127
        %vm2133 = vcmask 519168
        %2134 = vst.msk [vmem:[#allocation2] sm:$0xf] %vm2133, %v2132
        %2136 = vrot.lane.b32.xlu0 %v2009, 64
        %v2137 = vpop.permute.xlu0 %2136
        %2139 = vrot.lane.b32.xlu0 %v2012, 64
        %v2140 = vpop.permute.xlu0 %2139
        %v2142 = vsel %vm2024, %v2137, 0
        %v2145 = vsel %vm2024, %v2140, 0
        %2147 = vmatprep.subr.bf16.mxu0 0
        %2148 = vmatpush1.bf16.xpose.msra.mxu0 0
        %2149 = vmatprep.subr.bf16.mxu0 0
        %2150 = vmatpush1.bf16.xpose.msra.mxu0 0
        %2151 = vmatprep.subr.bf16.mxu0 0
        %2152 = vmatpush1.bf16.xpose.msra.mxu0 0
        %2153 = vmatprep.subr.bf16.mxu0 0
        %2154 = vmatpush1.bf16.xpose.msra.mxu0 0
        %2155 = vmatprep.subr.bf16.mxu0 0
        %2156 = vmatpush1.bf16.xpose.msra.mxu0 0
        %2157 = vmatprep.subr.bf16.mxu0 0
        %2158 = vmatpush1.bf16.xpose.msra.mxu0 0
        %2159 = vmatprep.subr.bf16.mxu0 0
        %2160 = vmatpush1.bf16.xpose.msra.mxu0 0
        %2161 = vmatprep.subr.bf16.mxu0 0
        %2162 = vmatpush1.bf16.xpose.msra.mxu0 %v2145
        %2163 = vmatprep.subr.bf16.mxu0 0
        %2164 = vmatpush2.bf16.xpose.msra.mxu0 0
        %2165 = vmatprep.subr.bf16.mxu0 0
        %2166 = vmatpush2.bf16.xpose.msra.mxu0 0
        %2167 = vmatprep.subr.bf16.mxu0 0
        %2168 = vmatpush2.bf16.xpose.msra.mxu0 0
        %2169 = vmatprep.subr.bf16.mxu0 0
        %2170 = vmatpush2.bf16.xpose.msra.mxu0 0
        %2171 = vmatprep.subr.bf16.mxu0 0
        %2172 = vmatpush2.bf16.xpose.msra.mxu0 0
        %2173 = vmatprep.subr.bf16.mxu0 0
        %2174 = vmatpush2.bf16.xpose.msra.mxu0 0
        %2175 = vmatprep.subr.bf16.mxu0 0
        %2176 = vmatpush2.bf16.xpose.msra.mxu0 0
        %2177 = vmatprep.subr.bf16.mxu0 0
        %2178 = vmatpush2.bf16.xpose.msra.mxu0 0
        %2179 = vmatprep.mubr.bf16.mxu0 0
        %2180 = vmatmul.mubr.bf16.gmra.mxu0 %v2142
        %v2181 = vpop.f32.mrf.mxu0
        %v2182 = vadd.f32 0.0, %v2181
        %v2183 = vpop.f32.mrf.mxu0
        %v2184 = vpop.f32.mrf.mxu0
        %v2185 = vpop.f32.mrf.mxu0
        %2186 = vdwg.mxu0
        %v2187 = vsel %vm2023, %v2182, -inf
        %v2188 = vsel %vm2072, %v2187, -inf
        %2189 = vmax.xlane.f32.xlu0 %v2188
        %v2190 = vpop.xlane.xlu0 %2189
        %v2191 = vsub.f32 %v2187, %v2190
        %v2192 = vmul.f32 %v2191, 1.442695
        %v2193 = vpow.pop %v2192
        %v2194 = vsel %vm2072, %v2193, 0.0
        %2195 = vadd.xlane.f32.xlu0 %v2194
        %v2196 = vpop.xlane.xlu0 %2195
        %v2197 = vrcp.pop %v2196
        %v2198 = vmul.f32 %v2193, %v2197
        %v2199 = vpack.c.bf16 %v2198, %v2198
        %2201 = vrot.lane.b32.xlu0 %v2015, 64
        %v2202 = vpop.permute.xlu0 %2201
        %v2204 = vsel %vm2072, %v2199, 0
        %v2207 = vsel %vm2088, %v2202, 0
        %2209 = vmatprep.subr.bf16.mxu0 0
        %2210 = vmatpush1.bf16.msra.mxu0 0
        %2211 = vmatprep.subr.bf16.mxu0 0
        %2212 = vmatpush1.bf16.msra.mxu0 0
        %2213 = vmatprep.subr.bf16.mxu0 0
        %2214 = vmatpush1.bf16.msra.mxu0 0
        %2215 = vmatprep.subr.bf16.mxu0 0
        %2216 = vmatpush1.bf16.msra.mxu0 0
        %2217 = vmatprep.subr.bf16.mxu0 0
        %2218 = vmatpush1.bf16.msra.mxu0 0
        %2219 = vmatprep.subr.bf16.mxu0 0
        %2220 = vmatpush1.bf16.msra.mxu0 0
        %2221 = vmatprep.subr.bf16.mxu0 0
        %2222 = vmatpush1.bf16.msra.mxu0 0
        %2223 = vmatprep.subr.bf16.mxu0 0
        %2224 = vmatpush1.bf16.msra.mxu0 %v2207
        %2225 = vmatprep.subr.bf16.mxu0 0
        %2226 = vmatpush2.bf16.msra.mxu0 0
        %2227 = vmatprep.subr.bf16.mxu0 0
        %2228 = vmatpush2.bf16.msra.mxu0 0
        %2229 = vmatprep.subr.bf16.mxu0 0
        %2230 = vmatpush2.bf16.msra.mxu0 0
        %2231 = vmatprep.subr.bf16.mxu0 0
        %2232 = vmatpush2.bf16.msra.mxu0 0
        %2233 = vmatprep.subr.bf16.mxu0 0
        %2234 = vmatpush2.bf16.msra.mxu0 0
        %2235 = vmatprep.subr.bf16.mxu0 0
        %2236 = vmatpush2.bf16.msra.mxu0 0
        %2237 = vmatprep.subr.bf16.mxu0 0
        %2238 = vmatpush2.bf16.msra.mxu0 0
        %2239 = vmatprep.subr.bf16.mxu0 0
        %2240 = vmatpush2.bf16.msra.mxu0 0
        %2241 = vmatprep.mubr.bf16.mxu0 0
        %2242 = vmatmul.mubr.bf16.gmra.mxu0 %v2204
        %v2243 = vpop.f32.mrf.mxu0
        %v2244 = vadd.f32 0.0, %v2243
        %v2245 = vpop.f32.mrf.mxu0
        %v2246 = vpop.f32.mrf.mxu0
        %v2247 = vpop.f32.mrf.mxu0
        %2248 = vdwg.mxu0
        %v2249 = vpack.c.bf16 %v2244, %v2244
        %v2251 = vunpack.c.l.b16 %v2249
        %v2252 = vpack.c.b16 %v2251, %v2251
        %2253 = vrot.lane.b32.xlu0 %v2252, 64
        %v2254 = vpop.permute.xlu0 %2253
        %vm2256 = vcmask 1043968
        %2257 = vst.msk [vmem:[#allocation2] sm:$0xf] %vm2256, %v2254
        %v2259 = vsel %vm2024, %v2010, 0
        %v2262 = vsel %vm2024, %v2013, 0
        %2264 = vmatprep.subr.bf16.mxu0 0
        %2265 = vmatpush1.bf16.xpose.msra.mxu0 0
        %2266 = vmatprep.subr.bf16.mxu0 0
        %2267 = vmatpush1.bf16.xpose.msra.mxu0 0
        %2268 = vmatprep.subr.bf16.mxu0 0
        %2269 = vmatpush1.bf16.xpose.msra.mxu0 0
        %2270 = vmatprep.subr.bf16.mxu0 0
        %2271 = vmatpush1.bf16.xpose.msra.mxu0 0
        %2272 = vmatprep.subr.bf16.mxu0 0
        %2273 = vmatpush1.bf16.xpose.msra.mxu0 0
        %2274 = vmatprep.subr.bf16.mxu0 0
        %2275 = vmatpush1.bf16.xpose.msra.mxu0 0
        %2276 = vmatprep.subr.bf16.mxu0 0
        %2277 = vmatpush1.bf16.xpose.msra.mxu0 0
        %2278 = vmatprep.subr.bf16.mxu0 0
        %2279 = vmatpush1.bf16.xpose.msra.mxu0 %v2262
        %2280 = vmatprep.subr.bf16.mxu0 0
        %2281 = vmatpush2.bf16.xpose.msra.mxu0 0
        %2282 = vmatprep.subr.bf16.mxu0 0
        %2283 = vmatpush2.bf16.xpose.msra.mxu0 0
        %2284 = vmatprep.subr.bf16.mxu0 0
        %2285 = vmatpush2.bf16.xpose.msra.mxu0 0
        %2286 = vmatprep.subr.bf16.mxu0 0
        %2287 = vmatpush2.bf16.xpose.msra.mxu0 0
        %2288 = vmatprep.subr.bf16.mxu0 0
        %2289 = vmatpush2.bf16.xpose.msra.mxu0 0
        %2290 = vmatprep.subr.bf16.mxu0 0
        %2291 = vmatpush2.bf16.xpose.msra.mxu0 0
        %2292 = vmatprep.subr.bf16.mxu0 0
        %2293 = vmatpush2.bf16.xpose.msra.mxu0 0
        %2294 = vmatprep.subr.bf16.mxu0 0
        %2295 = vmatpush2.bf16.xpose.msra.mxu0 0
        %2296 = vmatprep.mubr.bf16.mxu0 0
        %2297 = vmatmul.mubr.bf16.gmra.mxu0 %v2259
        %v2298 = vpop.f32.mrf.mxu0
        %v2299 = vadd.f32 0.0, %v2298
        %v2300 = vpop.f32.mrf.mxu0
        %v2301 = vpop.f32.mrf.mxu0
        %v2302 = vpop.f32.mrf.mxu0
        %2303 = vdwg.mxu0
        %v2304 = vsel %vm2023, %v2299, -inf
        %v2305 = vsel %vm2072, %v2304, -inf
        %2306 = vmax.xlane.f32.xlu0 %v2305
        %v2307 = vpop.xlane.xlu0 %2306
        %v2308 = vsub.f32 %v2304, %v2307
        %v2309 = vmul.f32 %v2308, 1.442695
        %v2310 = vpow.pop %v2309
        %v2311 = vsel %vm2072, %v2310, 0.0
        %2312 = vadd.xlane.f32.xlu0 %v2311
        %v2313 = vpop.xlane.xlu0 %2312
        %v2314 = vrcp.pop %v2313
        %v2315 = vmul.f32 %v2310, %v2314
        %v2316 = vpack.c.bf16 %v2315, %v2315
        %v2318 = vsel %vm2072, %v2316, 0
        %v2321 = vsel %vm2088, %v2016, 0
        %2323 = vmatprep.subr.bf16.mxu0 0
        %2324 = vmatpush1.bf16.msra.mxu0 0
        %2325 = vmatprep.subr.bf16.mxu0 0
        %2326 = vmatpush1.bf16.msra.mxu0 0
        %2327 = vmatprep.subr.bf16.mxu0 0
        %2328 = vmatpush1.bf16.msra.mxu0 0
        %2329 = vmatprep.subr.bf16.mxu0 0
        %2330 = vmatpush1.bf16.msra.mxu0 0
        %2331 = vmatprep.subr.bf16.mxu0 0
        %2332 = vmatpush1.bf16.msra.mxu0 0
        %2333 = vmatprep.subr.bf16.mxu0 0
        %2334 = vmatpush1.bf16.msra.mxu0 0
        %2335 = vmatprep.subr.bf16.mxu0 0
        %2336 = vmatpush1.bf16.msra.mxu0 0
        %2337 = vmatprep.subr.bf16.mxu0 0
        %2338 = vmatpush1.bf16.msra.mxu0 %v2321
        %2339 = vmatprep.subr.bf16.mxu0 0
        %2340 = vmatpush2.bf16.msra.mxu0 0
        %2341 = vmatprep.subr.bf16.mxu0 0
        %2342 = vmatpush2.bf16.msra.mxu0 0
        %2343 = vmatprep.subr.bf16.mxu0 0
        %2344 = vmatpush2.bf16.msra.mxu0 0
        %2345 = vmatprep.subr.bf16.mxu0 0
        %2346 = vmatpush2.bf16.msra.mxu0 0
        %2347 = vmatprep.subr.bf16.mxu0 0
        %2348 = vmatpush2.bf16.msra.mxu0 0
        %2349 = vmatprep.subr.bf16.mxu0 0
        %2350 = vmatpush2.bf16.msra.mxu0 0
        %2351 = vmatprep.subr.bf16.mxu0 0
        %2352 = vmatpush2.bf16.msra.mxu0 0
        %2353 = vmatprep.subr.bf16.mxu0 0
        %2354 = vmatpush2.bf16.msra.mxu0 0
        %2355 = vmatprep.mubr.bf16.mxu0 0
        %2356 = vmatmul.mubr.bf16.gmra.mxu0 %v2318
        %v2357 = vpop.f32.mrf.mxu0
        %v2358 = vadd.f32 0.0, %v2357
        %v2359 = vpop.f32.mrf.mxu0
        %v2360 = vpop.f32.mrf.mxu0
        %v2361 = vpop.f32.mrf.mxu0
        %2362 = vdwg.mxu0
        %v2363 = vpack.c.bf16 %v2358, %v2358
        %2364 = vst.msk [vmem:[#allocation2 + $0x4] sm:$0xf] %vm2133, %v2363
        %2366 = vrot.lane.b32.xlu0 %v2010, 64
        %v2367 = vpop.permute.xlu0 %2366
        %2369 = vrot.lane.b32.xlu0 %v2013, 64
        %v2370 = vpop.permute.xlu0 %2369
        %v2372 = vsel %vm2024, %v2367, 0
        %v2375 = vsel %vm2024, %v2370, 0
        %2377 = vmatprep.subr.bf16.mxu0 0
        %2378 = vmatpush1.bf16.xpose.msra.mxu0 0
        %2379 = vmatprep.subr.bf16.mxu0 0
        %2380 = vmatpush1.bf16.xpose.msra.mxu0 0
        %2381 = vmatprep.subr.bf16.mxu0 0
        %2382 = vmatpush1.bf16.xpose.msra.mxu0 0
        %2383 = vmatprep.subr.bf16.mxu0 0
        %2384 = vmatpush1.bf16.xpose.msra.mxu0 0
        %2385 = vmatprep.subr.bf16.mxu0 0
        %2386 = vmatpush1.bf16.xpose.msra.mxu0 0
        %2387 = vmatprep.subr.bf16.mxu0 0
        %2388 = vmatpush1.bf16.xpose.msra.mxu0 0
        %2389 = vmatprep.subr.bf16.mxu0 0
        %2390 = vmatpush1.bf16.xpose.msra.mxu0 0
        %2391 = vmatprep.subr.bf16.mxu0 0
        %2392 = vmatpush1.bf16.xpose.msra.mxu0 %v2375
        %2393 = vmatprep.subr.bf16.mxu0 0
        %2394 = vmatpush2.bf16.xpose.msra.mxu0 0
        %2395 = vmatprep.subr.bf16.mxu0 0
        %2396 = vmatpush2.bf16.xpose.msra.mxu0 0
        %2397 = vmatprep.subr.bf16.mxu0 0
        %2398 = vmatpush2.bf16.xpose.msra.mxu0 0
        %2399 = vmatprep.subr.bf16.mxu0 0
        %2400 = vmatpush2.bf16.xpose.msra.mxu0 0
        %2401 = vmatprep.subr.bf16.mxu0 0
        %2402 = vmatpush2.bf16.xpose.msra.mxu0 0
        %2403 = vmatprep.subr.bf16.mxu0 0
        %2404 = vmatpush2.bf16.xpose.msra.mxu0 0
        %2405 = vmatprep.subr.bf16.mxu0 0
        %2406 = vmatpush2.bf16.xpose.msra.mxu0 0
        %2407 = vmatprep.subr.bf16.mxu0 0
        %2408 = vmatpush2.bf16.xpose.msra.mxu0 0
        %2409 = vmatprep.mubr.bf16.mxu0 0
        %2410 = vmatmul.mubr.bf16.gmra.mxu0 %v2372
        %v2411 = vpop.f32.mrf.mxu0
        %v2412 = vadd.f32 0.0, %v2411
        %v2413 = vpop.f32.mrf.mxu0
        %v2414 = vpop.f32.mrf.mxu0
        %v2415 = vpop.f32.mrf.mxu0
        %2416 = vdwg.mxu0
        %v2417 = vsel %vm2023, %v2412, -inf
        %v2418 = vsel %vm2072, %v2417, -inf
        %2419 = vmax.xlane.f32.xlu0 %v2418
        %v2420 = vpop.xlane.xlu0 %2419
        %v2421 = vsub.f32 %v2417, %v2420
        %v2422 = vmul.f32 %v2421, 1.442695
        %v2423 = vpow.pop %v2422
        %v2424 = vsel %vm2072, %v2423, 0.0
        %2425 = vadd.xlane.f32.xlu0 %v2424
        %v2426 = vpop.xlane.xlu0 %2425
        %v2427 = vrcp.pop %v2426
        %v2428 = vmul.f32 %v2423, %v2427
        %v2429 = vpack.c.bf16 %v2428, %v2428
        %2431 = vrot.lane.b32.xlu0 %v2016, 64
        %v2432 = vpop.permute.xlu0 %2431
        %v2434 = vsel %vm2072, %v2429, 0
        %v2437 = vsel %vm2088, %v2432, 0
        %2439 = vmatprep.subr.bf16.mxu0 0
        %2440 = vmatpush1.bf16.msra.mxu0 0
        %2441 = vmatprep.subr.bf16.mxu0 0
        %2442 = vmatpush1.bf16.msra.mxu0 0
        %2443 = vmatprep.subr.bf16.mxu0 0
        %2444 = vmatpush1.bf16.msra.mxu0 0
        %2445 = vmatprep.subr.bf16.mxu0 0
        %2446 = vmatpush1.bf16.msra.mxu0 0
        %2447 = vmatprep.subr.bf16.mxu0 0
        %2448 = vmatpush1.bf16.msra.mxu0 0
        %2449 = vmatprep.subr.bf16.mxu0 0
        %2450 = vmatpush1.bf16.msra.mxu0 0
        %2451 = vmatprep.subr.bf16.mxu0 0
        %2452 = vmatpush1.bf16.msra.mxu0 0
        %2453 = vmatprep.subr.bf16.mxu0 0
        %2454 = vmatpush1.bf16.msra.mxu0 %v2437
        %2455 = vmatprep.subr.bf16.mxu0 0
        %2456 = vmatpush2.bf16.msra.mxu0 0
        %2457 = vmatprep.subr.bf16.mxu0 0
        %2458 = vmatpush2.bf16.msra.mxu0 0
        %2459 = vmatprep.subr.bf16.mxu0 0
        %2460 = vmatpush2.bf16.msra.mxu0 0
        %2461 = vmatprep.subr.bf16.mxu0 0
        %2462 = vmatpush2.bf16.msra.mxu0 0
        %2463 = vmatprep.subr.bf16.mxu0 0
        %2464 = vmatpush2.bf16.msra.mxu0 0
        %2465 = vmatprep.subr.bf16.mxu0 0
        %2466 = vmatpush2.bf16.msra.mxu0 0
        %2467 = vmatprep.subr.bf16.mxu0 0
        %2468 = vmatpush2.bf16.msra.mxu0 0
        %2469 = vmatprep.subr.bf16.mxu0 0
        %2470 = vmatpush2.bf16.msra.mxu0 0
        %2471 = vmatprep.mubr.bf16.mxu0 0
        %2472 = vmatmul.mubr.bf16.gmra.mxu0 %v2434
        %v2473 = vpop.f32.mrf.mxu0
        %v2474 = vadd.f32 0.0, %v2473
        %v2475 = vpop.f32.mrf.mxu0
        %v2476 = vpop.f32.mrf.mxu0
        %v2477 = vpop.f32.mrf.mxu0
        %2478 = vdwg.mxu0
        %v2479 = vpack.c.bf16 %v2474, %v2474
        %v2481 = vunpack.c.l.b16 %v2479
        %v2482 = vpack.c.b16 %v2481, %v2481
        %2483 = vrot.lane.b32.xlu0 %v2482, 64
        %v2484 = vpop.permute.xlu0 %2483
        %2486 = vst.msk [vmem:[#allocation2 + $0x4] sm:$0xf] %vm2256, %v2484
        %v2488 = vsel %vm2024, %v2011, 0
        %v2491 = vsel %vm2024, %v2014, 0
        %2493 = vmatprep.subr.bf16.mxu0 0
        %2494 = vmatpush1.bf16.xpose.msra.mxu0 0
        %2495 = vmatprep.subr.bf16.mxu0 0
        %2496 = vmatpush1.bf16.xpose.msra.mxu0 0
        %2497 = vmatprep.subr.bf16.mxu0 0
        %2498 = vmatpush1.bf16.xpose.msra.mxu0 0
        %2499 = vmatprep.subr.bf16.mxu0 0
        %2500 = vmatpush1.bf16.xpose.msra.mxu0 0
        %2501 = vmatprep.subr.bf16.mxu0 0
        %2502 = vmatpush1.bf16.xpose.msra.mxu0 0
        %2503 = vmatprep.subr.bf16.mxu0 0
        %2504 = vmatpush1.bf16.xpose.msra.mxu0 0
        %2505 = vmatprep.subr.bf16.mxu0 0
        %2506 = vmatpush1.bf16.xpose.msra.mxu0 0
        %2507 = vmatprep.subr.bf16.mxu0 0
        %2508 = vmatpush1.bf16.xpose.msra.mxu0 %v2491
        %2509 = vmatprep.subr.bf16.mxu0 0
        %2510 = vmatpush2.bf16.xpose.msra.mxu0 0
        %2511 = vmatprep.subr.bf16.mxu0 0
        %2512 = vmatpush2.bf16.xpose.msra.mxu0 0
        %2513 = vmatprep.subr.bf16.mxu0 0
        %2514 = vmatpush2.bf16.xpose.msra.mxu0 0
        %2515 = vmatprep.subr.bf16.mxu0 0
        %2516 = vmatpush2.bf16.xpose.msra.mxu0 0
        %2517 = vmatprep.subr.bf16.mxu0 0
        %2518 = vmatpush2.bf16.xpose.msra.mxu0 0
        %2519 = vmatprep.subr.bf16.mxu0 0
        %2520 = vmatpush2.bf16.xpose.msra.mxu0 0
        %2521 = vmatprep.subr.bf16.mxu0 0
        %2522 = vmatpush2.bf16.xpose.msra.mxu0 0
        %2523 = vmatprep.subr.bf16.mxu0 0
        %2524 = vmatpush2.bf16.xpose.msra.mxu0 0
        %2525 = vmatprep.mubr.bf16.mxu0 0
        %2526 = vmatmul.mubr.bf16.gmra.mxu0 %v2488
        %v2527 = vpop.f32.mrf.mxu0
        %v2528 = vadd.f32 0.0, %v2527
        %v2529 = vpop.f32.mrf.mxu0
        %v2530 = vpop.f32.mrf.mxu0
        %v2531 = vpop.f32.mrf.mxu0
        %2532 = vdwg.mxu0
        %v2533 = vsel %vm2023, %v2528, -inf
        %v2534 = vsel %vm2072, %v2533, -inf
        %2535 = vmax.xlane.f32.xlu0 %v2534
        %v2536 = vpop.xlane.xlu0 %2535
        %v2537 = vsub.f32 %v2533, %v2536
        %v2538 = vmul.f32 %v2537, 1.442695
        %v2539 = vpow.pop %v2538
        %v2540 = vsel %vm2072, %v2539, 0.0
        %2541 = vadd.xlane.f32.xlu0 %v2540
        %v2542 = vpop.xlane.xlu0 %2541
        %v2543 = vrcp.pop %v2542
        %v2544 = vmul.f32 %v2539, %v2543
        %v2545 = vpack.c.bf16 %v2544, %v2544
        %v2547 = vsel %vm2072, %v2545, 0
        %v2550 = vsel %vm2088, %v2017, 0
        %2552 = vmatprep.subr.bf16.mxu0 0
        %2553 = vmatpush1.bf16.msra.mxu0 0
        %2554 = vmatprep.subr.bf16.mxu0 0
        %2555 = vmatpush1.bf16.msra.mxu0 0
        %2556 = vmatprep.subr.bf16.mxu0 0
        %2557 = vmatpush1.bf16.msra.mxu0 0
        %2558 = vmatprep.subr.bf16.mxu0 0
        %2559 = vmatpush1.bf16.msra.mxu0 0
        %2560 = vmatprep.subr.bf16.mxu0 0
        %2561 = vmatpush1.bf16.msra.mxu0 0
        %2562 = vmatprep.subr.bf16.mxu0 0
        %2563 = vmatpush1.bf16.msra.mxu0 0
        %2564 = vmatprep.subr.bf16.mxu0 0
        %2565 = vmatpush1.bf16.msra.mxu0 0
        %2566 = vmatprep.subr.bf16.mxu0 0
        %2567 = vmatpush1.bf16.msra.mxu0 %v2550
        %2568 = vmatprep.subr.bf16.mxu0 0
        %2569 = vmatpush2.bf16.msra.mxu0 0
        %2570 = vmatprep.subr.bf16.mxu0 0
        %2571 = vmatpush2.bf16.msra.mxu0 0
        %2572 = vmatprep.subr.bf16.mxu0 0
        %2573 = vmatpush2.bf16.msra.mxu0 0
        %2574 = vmatprep.subr.bf16.mxu0 0
        %2575 = vmatpush2.bf16.msra.mxu0 0
        %2576 = vmatprep.subr.bf16.mxu0 0
        %2577 = vmatpush2.bf16.msra.mxu0 0
        %2578 = vmatprep.subr.bf16.mxu0 0
        %2579 = vmatpush2.bf16.msra.mxu0 0
        %2580 = vmatprep.subr.bf16.mxu0 0
        %2581 = vmatpush2.bf16.msra.mxu0 0
        %2582 = vmatprep.subr.bf16.mxu0 0
        %2583 = vmatpush2.bf16.msra.mxu0 0
        %2584 = vmatprep.mubr.bf16.mxu0 0
        %2585 = vmatmul.mubr.bf16.gmra.mxu0 %v2547
        %v2586 = vpop.f32.mrf.mxu0
        %v2587 = vadd.f32 0.0, %v2586
        %v2588 = vpop.f32.mrf.mxu0
        %v2589 = vpop.f32.mrf.mxu0
        %v2590 = vpop.f32.mrf.mxu0
        %2591 = vdwg.mxu0
        %v2592 = vpack.c.bf16 %v2587, %v2587
        %2593 = vst.msk [vmem:[#allocation2 + $0x8] sm:$0xf] %vm2133, %v2592
        %2595 = vrot.lane.b32.xlu0 %v2011, 64
        %v2596 = vpop.permute.xlu0 %2595
        %2598 = vrot.lane.b32.xlu0 %v2014, 64
        %v2599 = vpop.permute.xlu0 %2598
        %v2601 = vsel %vm2024, %v2596, 0
        %v2604 = vsel %vm2024, %v2599, 0
        %2606 = vmatprep.subr.bf16.mxu0 0
        %2607 = vmatpush1.bf16.xpose.msra.mxu0 0
        %2608 = vmatprep.subr.bf16.mxu0 0
        %2609 = vmatpush1.bf16.xpose.msra.mxu0 0
        %2610 = vmatprep.subr.bf16.mxu0 0
        %2611 = vmatpush1.bf16.xpose.msra.mxu0 0
        %2612 = vmatprep.subr.bf16.mxu0 0
        %2613 = vmatpush1.bf16.xpose.msra.mxu0 0
        %2614 = vmatprep.subr.bf16.mxu0 0
        %2615 = vmatpush1.bf16.xpose.msra.mxu0 0
        %2616 = vmatprep.subr.bf16.mxu0 0
        %2617 = vmatpush1.bf16.xpose.msra.mxu0 0
        %2618 = vmatprep.subr.bf16.mxu0 0
        %2619 = vmatpush1.bf16.xpose.msra.mxu0 0
        %2620 = vmatprep.subr.bf16.mxu0 0
        %2621 = vmatpush1.bf16.xpose.msra.mxu0 %v2604
        %2622 = vmatprep.subr.bf16.mxu0 0
        %2623 = vmatpush2.bf16.xpose.msra.mxu0 0
        %2624 = vmatprep.subr.bf16.mxu0 0
        %2625 = vmatpush2.bf16.xpose.msra.mxu0 0
        %2626 = vmatprep.subr.bf16.mxu0 0
        %2627 = vmatpush2.bf16.xpose.msra.mxu0 0
        %2628 = vmatprep.subr.bf16.mxu0 0
        %2629 = vmatpush2.bf16.xpose.msra.mxu0 0
        %2630 = vmatprep.subr.bf16.mxu0 0
        %2631 = vmatpush2.bf16.xpose.msra.mxu0 0
        %2632 = vmatprep.subr.bf16.mxu0 0
        %2633 = vmatpush2.bf16.xpose.msra.mxu0 0
        %2634 = vmatprep.subr.bf16.mxu0 0
        %2635 = vmatpush2.bf16.xpose.msra.mxu0 0
        %2636 = vmatprep.subr.bf16.mxu0 0
        %2637 = vmatpush2.bf16.xpose.msra.mxu0 0
        %2638 = vmatprep.mubr.bf16.mxu0 0
        %2639 = vmatmul.mubr.bf16.gmra.mxu0 %v2601
        %v2640 = vpop.f32.mrf.mxu0
        %v2641 = vadd.f32 0.0, %v2640
        %v2642 = vpop.f32.mrf.mxu0
        %v2643 = vpop.f32.mrf.mxu0
        %v2644 = vpop.f32.mrf.mxu0
        %2645 = vdwg.mxu0
        %v2646 = vsel %vm2023, %v2641, -inf
        %v2647 = vsel %vm2072, %v2646, -inf
        %2648 = vmax.xlane.f32.xlu0 %v2647
        %v2649 = vpop.xlane.xlu0 %2648
        %v2650 = vsub.f32 %v2646, %v2649
        %v2651 = vmul.f32 %v2650, 1.442695
        %v2652 = vpow.pop %v2651
        %v2653 = vsel %vm2072, %v2652, 0.0
        %2654 = vadd.xlane.f32.xlu0 %v2653
        %v2655 = vpop.xlane.xlu0 %2654
        %v2656 = vrcp.pop %v2655
        %v2657 = vmul.f32 %v2652, %v2656
        %v2658 = vpack.c.bf16 %v2657, %v2657
        %2660 = vrot.lane.b32.xlu0 %v2017, 64
        %v2661 = vpop.permute.xlu0 %2660
        %v2663 = vsel %vm2072, %v2658, 0
        %v2666 = vsel %vm2088, %v2661, 0
        %2668 = vmatprep.subr.bf16.mxu0 0
        %2669 = vmatpush1.bf16.msra.mxu0 0
        %2670 = vmatprep.subr.bf16.mxu0 0
        %2671 = vmatpush1.bf16.msra.mxu0 0
        %2672 = vmatprep.subr.bf16.mxu0 0
        %2673 = vmatpush1.bf16.msra.mxu0 0
        %2674 = vmatprep.subr.bf16.mxu0 0
        %2675 = vmatpush1.bf16.msra.mxu0 0
        %2676 = vmatprep.subr.bf16.mxu0 0
        %2677 = vmatpush1.bf16.msra.mxu0 0
        %2678 = vmatprep.subr.bf16.mxu0 0
        %2679 = vmatpush1.bf16.msra.mxu0 0
        %2680 = vmatprep.subr.bf16.mxu0 0
        %2681 = vmatpush1.bf16.msra.mxu0 0
        %2682 = vmatprep.subr.bf16.mxu0 0
        %2683 = vmatpush1.bf16.msra.mxu0 %v2666
        %2684 = vmatprep.subr.bf16.mxu0 0
        %2685 = vmatpush2.bf16.msra.mxu0 0
        %2686 = vmatprep.subr.bf16.mxu0 0
        %2687 = vmatpush2.bf16.msra.mxu0 0
        %2688 = vmatprep.subr.bf16.mxu0 0
        %2689 = vmatpush2.bf16.msra.mxu0 0
        %2690 = vmatprep.subr.bf16.mxu0 0
        %2691 = vmatpush2.bf16.msra.mxu0 0
        %2692 = vmatprep.subr.bf16.mxu0 0
        %2693 = vmatpush2.bf16.msra.mxu0 0
        %2694 = vmatprep.subr.bf16.mxu0 0
        %2695 = vmatpush2.bf16.msra.mxu0 0
        %2696 = vmatprep.subr.bf16.mxu0 0
        %2697 = vmatpush2.bf16.msra.mxu0 0
        %2698 = vmatprep.subr.bf16.mxu0 0
        %2699 = vmatpush2.bf16.msra.mxu0 0
        %2700 = vmatprep.mubr.bf16.mxu0 0
        %2701 = vmatmul.mubr.bf16.gmra.mxu0 %v2663
        %v2702 = vpop.f32.mrf.mxu0
        %v2703 = vadd.f32 0.0, %v2702
        %v2704 = vpop.f32.mrf.mxu0
        %v2705 = vpop.f32.mrf.mxu0
        %v2706 = vpop.f32.mrf.mxu0
        %2707 = vdwg.mxu0
        %v2708 = vpack.c.bf16 %v2703, %v2703
        %v2710 = vunpack.c.l.b16 %v2708
        %v2711 = vpack.c.b16 %v2710, %v2710
        %2712 = vrot.lane.b32.xlu0 %v2711, 64
        %v2713 = vpop.permute.xlu0 %2712
        %2715 = vst.msk [vmem:[#allocation2 + $0x8] sm:$0xf] %vm2256, %v2713
        %v2716 = vld [vmem:[#allocation2] sm:$0xff]
        %v2717 = vld [vmem:[#allocation2 + $0x8] sm:$0xf]
        %v2718 = vld [vmem:[#allocation8] sm:$0xff]
        %v2719 = vld [vmem:[#allocation8 + $0x8] sm:$0xf]
        %v2720 = vld [vmem:[#allocation8 + $0xc] sm:$0xff]
        %v2721 = vld [vmem:[#allocation8 + $0x14] sm:$0xf]
        %v2722 = vld [vmem:[#allocation8 + $0x18] sm:$0xff]
        %v2723 = vld [vmem:[#allocation8 + $0x20] sm:$0xf]
        %v2724 = vld [vmem:[#allocation8 + $0x24] sm:$0xff]
        %v2725 = vld [vmem:[#allocation8 + $0x2c] sm:$0xf]
        %v2726 = vld [vmem:[#allocation8 + $0x30] sm:$0xff]
        %v2727 = vld [vmem:[#allocation8 + $0x38] sm:$0xf]
        %v2728 = vld [vmem:[#allocation8 + $0x3c] sm:$0xff]
        %v2729 = vld [vmem:[#allocation8 + $0x44] sm:$0xf]
        %v2730 = vld [vmem:[#allocation8 + $0x48] sm:$0xff]
        %v2731 = vld [vmem:[#allocation8 + $0x50] sm:$0xf]
        %v2732 = vld [vmem:[#allocation8 + $0x54] sm:$0xff]
        %v2733 = vld [vmem:[#allocation8 + $0x5c] sm:$0xf]
        %v2734 = vld [vmem:[#allocation8 + $0x60] sm:$0xff]
        %v2735 = vld [vmem:[#allocation8 + $0x68] sm:$0xf]
        %v2736 = vld [vmem:[#allocation8 + $0x6c] sm:$0xff]
        %v2737 = vld [vmem:[#allocation8 + $0x74] sm:$0xf]
        %v2738 = vld [vmem:[#allocation8 + $0x78] sm:$0xff]
        %v2739 = vld [vmem:[#allocation8 + $0x80] sm:$0xf]
        %v2740 = vld [vmem:[#allocation8 + $0x84] sm:$0xff]
        %v2741 = vld [vmem:[#allocation8 + $0x8c] sm:$0xf]
        %v2742 = vld [vmem:[#allocation8 + $0x90] sm:$0xff]
        %v2743 = vld [vmem:[#allocation8 + $0x98] sm:$0xf]
        %v2744 = vld [vmem:[#allocation8 + $0x9c] sm:$0xff]
        %v2745 = vld [vmem:[#allocation8 + $0xa4] sm:$0xf]
        %v2746 = vld [vmem:[#allocation8 + $0xa8] sm:$0xff]
        %v2747 = vld [vmem:[#allocation8 + $0xb0] sm:$0xf]
        %v2748 = vld [vmem:[#allocation8 + $0xb4] sm:$0xff]
        %v2749 = vld [vmem:[#allocation8 + $0xbc] sm:$0xf]
        %v2750 = vld [vmem:[#allocation8 + $0xc0] sm:$0xff]
        %v2751 = vld [vmem:[#allocation8 + $0xc8] sm:$0xf]
        %v2752 = vld [vmem:[#allocation8 + $0xcc] sm:$0xff]
        %v2753 = vld [vmem:[#allocation8 + $0xd4] sm:$0xf]
        %v2754 = vld [vmem:[#allocation8 + $0xd8] sm:$0xff]
        %v2755 = vld [vmem:[#allocation8 + $0xe0] sm:$0xf]
        %v2756 = vld [vmem:[#allocation8 + $0xe4] sm:$0xff]
        %v2757 = vld [vmem:[#allocation8 + $0xec] sm:$0xf]
        %v2758 = vld [vmem:[#allocation8 + $0xf0] sm:$0xff]
        %v2759 = vld [vmem:[#allocation8 + $0xf8] sm:$0xf]
        %v2760 = vld [vmem:[#allocation8 + $0xfc] sm:$0xff]
        %v2761 = vld [vmem:[#allocation8 + $0x104] sm:$0xf]
        %v2762 = vld [vmem:[#allocation8 + $0x108] sm:$0xff]
        %v2763 = vld [vmem:[#allocation8 + $0x110] sm:$0xf]
        %v2764 = vld [vmem:[#allocation8 + $0x114] sm:$0xff]
        %v2765 = vld [vmem:[#allocation8 + $0x11c] sm:$0xf]
        %v2766 = vld [vmem:[#allocation8 + $0x120] sm:$0xff]
        %v2767 = vld [vmem:[#allocation8 + $0x128] sm:$0xf]
        %v2768 = vld [vmem:[#allocation8 + $0x12c] sm:$0xff]
        %v2769 = vld [vmem:[#allocation8 + $0x134] sm:$0xf]
        %v2770 = vld [vmem:[#allocation8 + $0x138] sm:$0xff]
        %v2771 = vld [vmem:[#allocation8 + $0x140] sm:$0xf]
        %v2772 = vld [vmem:[#allocation8 + $0x144] sm:$0xff]
        %v2773 = vld [vmem:[#allocation8 + $0x14c] sm:$0xf]
        %v2774 = vld [vmem:[#allocation8 + $0x150] sm:$0xff]
        %v2775 = vld [vmem:[#allocation8 + $0x158] sm:$0xf]
        %v2776 = vld [vmem:[#allocation8 + $0x15c] sm:$0xff]
        %v2777 = vld [vmem:[#allocation8 + $0x164] sm:$0xf]
        %v2778 = vld [vmem:[#allocation8 + $0x168] sm:$0xff]
        %v2779 = vld [vmem:[#allocation8 + $0x170] sm:$0xf]
        %v2780 = vld [vmem:[#allocation8 + $0x174] sm:$0xff]
        %v2781 = vld [vmem:[#allocation8 + $0x17c] sm:$0xf]
        %v2782 = vld [vmem:[#allocation8 + $0x180] sm:$0xff]
        %v2783 = vld [vmem:[#allocation8 + $0x188] sm:$0xf]
        %v2784 = vld [vmem:[#allocation8 + $0x18c] sm:$0xff]
        %v2785 = vld [vmem:[#allocation8 + $0x194] sm:$0xf]
        %v2786 = vld [vmem:[#allocation8 + $0x198] sm:$0xff]
        %v2787 = vld [vmem:[#allocation8 + $0x1a0] sm:$0xf]
        %v2788 = vld [vmem:[#allocation8 + $0x1a4] sm:$0xff]
        %v2789 = vld [vmem:[#allocation8 + $0x1ac] sm:$0xf]
        %v2790 = vld [vmem:[#allocation8 + $0x1b0] sm:$0xff]
        %v2791 = vld [vmem:[#allocation8 + $0x1b8] sm:$0xf]
        %v2792 = vld [vmem:[#allocation8 + $0x1bc] sm:$0xff]
        %v2793 = vld [vmem:[#allocation8 + $0x1c4] sm:$0xf]
        %v2794 = vld [vmem:[#allocation8 + $0x1c8] sm:$0xff]
        %v2795 = vld [vmem:[#allocation8 + $0x1d0] sm:$0xf]
        %v2796 = vld [vmem:[#allocation8 + $0x1d4] sm:$0xff]
        %v2797 = vld [vmem:[#allocation8 + $0x1dc] sm:$0xf]
        %v2798 = vld [vmem:[#allocation8 + $0x1e0] sm:$0xff]
        %v2799 = vld [vmem:[#allocation8 + $0x1e8] sm:$0xf]
        %v2800 = vld [vmem:[#allocation8 + $0x1ec] sm:$0xff]
        %v2801 = vld [vmem:[#allocation8 + $0x1f4] sm:$0xf]
        %v2802 = vld [vmem:[#allocation8 + $0x1f8] sm:$0xff]
        %v2803 = vld [vmem:[#allocation8 + $0x200] sm:$0xf]
        %v2804 = vld [vmem:[#allocation8 + $0x204] sm:$0xff]
        %v2805 = vld [vmem:[#allocation8 + $0x20c] sm:$0xf]
        %v2806 = vld [vmem:[#allocation8 + $0x210] sm:$0xff]
        %v2807 = vld [vmem:[#allocation8 + $0x218] sm:$0xf]
        %v2808 = vld [vmem:[#allocation8 + $0x21c] sm:$0xff]
        %v2809 = vld [vmem:[#allocation8 + $0x224] sm:$0xf]
        %v2810 = vld [vmem:[#allocation8 + $0x228] sm:$0xff]
        %v2811 = vld [vmem:[#allocation8 + $0x230] sm:$0xf]
        %v2812 = vld [vmem:[#allocation8 + $0x234] sm:$0xff]
        %v2813 = vld [vmem:[#allocation8 + $0x23c] sm:$0xf]
        %v2815 = vlaneseq
        %v2816 = vshrl.u32 %v2815, 7
        %v2817 = vsub.s32 0, %v2816
        %v2818 = vrot.slane %v2018, %v2817
        %v2819 = vlaneseq
        %v2820 = vshrl.u32 %v2819, 7
        %v2821 = vsub.s32 1, %v2820
        %v2822 = vrot.slane %v2018, %v2821
        %v2823 = vlaneseq
        %v2824 = vshrl.u32 %v2823, 7
        %v2825 = vsub.s32 2, %v2824
        %v2826 = vrot.slane %v2018, %v2825
        %v2832 = vunpack.c.l.b16 %v2716
        %v2833 = vunpack.c.h.b16 %v2716
        %v2834 = vunpack.c.l.b16 %v2717
        %v2835 = vpack.c.b16 %v2832, %v2832
        %v2836 = vpack.c.b16 %v2833, %v2833
        %v2837 = vpack.c.b16 %v2834, %v2834
        %v2937 = vunpack.c.l.b16 %v2718
        %v2938 = vunpack.c.h.b16 %v2718
        %v2939 = vunpack.c.l.b16 %v2719
        %v2940 = vunpack.c.l.b16 %v2720
        %v2941 = vunpack.c.h.b16 %v2720
        %v2942 = vunpack.c.l.b16 %v2721
        %v2943 = vunpack.c.l.b16 %v2722
        %v2944 = vunpack.c.h.b16 %v2722
        %v2945 = vunpack.c.l.b16 %v2723
        %v2946 = vunpack.c.l.b16 %v2724
        %v2947 = vunpack.c.h.b16 %v2724
        %v2948 = vunpack.c.l.b16 %v2725
        %v2949 = vunpack.c.l.b16 %v2726
        %v2950 = vunpack.c.h.b16 %v2726
        %v2951 = vunpack.c.l.b16 %v2727
        %v2952 = vunpack.c.l.b16 %v2728
        %v2953 = vunpack.c.h.b16 %v2728
        %v2954 = vunpack.c.l.b16 %v2729
        %v2955 = vunpack.c.l.b16 %v2730
        %v2956 = vunpack.c.h.b16 %v2730
        %v2957 = vunpack.c.l.b16 %v2731
        %v2958 = vunpack.c.l.b16 %v2732
        %v2959 = vunpack.c.h.b16 %v2732
        %v2960 = vunpack.c.l.b16 %v2733
        %v2961 = vunpack.c.l.b16 %v2734
        %v2962 = vunpack.c.h.b16 %v2734
        %v2963 = vunpack.c.l.b16 %v2735
        %v2964 = vunpack.c.l.b16 %v2736
        %v2965 = vunpack.c.h.b16 %v2736
        %v2966 = vunpack.c.l.b16 %v2737
        %v2967 = vunpack.c.l.b16 %v2738
        %v2968 = vunpack.c.h.b16 %v2738
        %v2969 = vunpack.c.l.b16 %v2739
        %v2970 = vunpack.c.l.b16 %v2740
        %v2971 = vunpack.c.h.b16 %v2740
        %v2972 = vunpack.c.l.b16 %v2741
        %v2973 = vunpack.c.l.b16 %v2742
        %v2974 = vunpack.c.h.b16 %v2742
        %v2975 = vunpack.c.l.b16 %v2743
        %v2976 = vunpack.c.l.b16 %v2744
        %v2977 = vunpack.c.h.b16 %v2744
        %v2978 = vunpack.c.l.b16 %v2745
        %v2979 = vunpack.c.l.b16 %v2746
        %v2980 = vunpack.c.h.b16 %v2746
        %v2981 = vunpack.c.l.b16 %v2747
        %v2982 = vunpack.c.l.b16 %v2748
        %v2983 = vunpack.c.h.b16 %v2748
        %v2984 = vunpack.c.l.b16 %v2749
        %v2985 = vunpack.c.l.b16 %v2750
        %v2986 = vunpack.c.h.b16 %v2750
        %v2987 = vunpack.c.l.b16 %v2751
        %v2988 = vunpack.c.l.b16 %v2752
        %v2989 = vunpack.c.h.b16 %v2752
        %v2990 = vunpack.c.l.b16 %v2753
        %v2991 = vunpack.c.l.b16 %v2754
        %v2992 = vunpack.c.h.b16 %v2754
        %v2993 = vunpack.c.l.b16 %v2755
        %v2994 = vunpack.c.l.b16 %v2756
        %v2995 = vunpack.c.h.b16 %v2756
        %v2996 = vunpack.c.l.b16 %v2757
        %v2997 = vunpack.c.l.b16 %v2758
        %v2998 = vunpack.c.h.b16 %v2758
        %v2999 = vunpack.c.l.b16 %v2759
        %v3000 = vunpack.c.l.b16 %v2760
        %v3001 = vunpack.c.h.b16 %v2760
        %v3002 = vunpack.c.l.b16 %v2761
        %v3003 = vunpack.c.l.b16 %v2762
        %v3004 = vunpack.c.h.b16 %v2762
        %v3005 = vunpack.c.l.b16 %v2763
        %v3006 = vunpack.c.l.b16 %v2764
        %v3007 = vunpack.c.h.b16 %v2764
        %v3008 = vunpack.c.l.b16 %v2765
        %v3009 = vunpack.c.l.b16 %v2766
        %v3010 = vunpack.c.h.b16 %v2766
        %v3011 = vunpack.c.l.b16 %v2767
        %v3012 = vunpack.c.l.b16 %v2768
        %v3013 = vunpack.c.h.b16 %v2768
        %v3014 = vunpack.c.l.b16 %v2769
        %v3015 = vunpack.c.l.b16 %v2770
        %v3016 = vunpack.c.h.b16 %v2770
        %v3017 = vunpack.c.l.b16 %v2771
        %v3018 = vunpack.c.l.b16 %v2772
        %v3019 = vunpack.c.h.b16 %v2772
        %v3020 = vunpack.c.l.b16 %v2773
        %v3021 = vunpack.c.l.b16 %v2774
        %v3022 = vunpack.c.h.b16 %v2774
        %v3023 = vunpack.c.l.b16 %v2775
        %v3024 = vunpack.c.l.b16 %v2776
        %v3025 = vunpack.c.h.b16 %v2776
        %v3026 = vunpack.c.l.b16 %v2777
        %v3027 = vunpack.c.l.b16 %v2778
        %v3028 = vunpack.c.h.b16 %v2778
        %v3029 = vunpack.c.l.b16 %v2779
        %v3030 = vunpack.c.l.b16 %v2780
        %v3031 = vunpack.c.h.b16 %v2780
        %v3032 = vunpack.c.l.b16 %v2781
        %v3033 = vunpack.c.l.b16 %v2782
        %v3034 = vunpack.c.h.b16 %v2782
        %v3035 = vunpack.c.l.b16 %v2783
        %v3036 = vunpack.c.l.b16 %v2784
        %v3037 = vunpack.c.h.b16 %v2784
        %v3038 = vunpack.c.l.b16 %v2785
        %v3039 = vunpack.c.l.b16 %v2786
        %v3040 = vunpack.c.h.b16 %v2786
        %v3041 = vunpack.c.l.b16 %v2787
        %v3042 = vunpack.c.l.b16 %v2788
        %v3043 = vunpack.c.h.b16 %v2788
        %v3044 = vunpack.c.l.b16 %v2789
        %v3045 = vunpack.c.l.b16 %v2790
        %v3046 = vunpack.c.h.b16 %v2790
        %v3047 = vunpack.c.l.b16 %v2791
        %v3048 = vunpack.c.l.b16 %v2792
        %v3049 = vunpack.c.h.b16 %v2792
        %v3050 = vunpack.c.l.b16 %v2793
        %v3051 = vunpack.c.l.b16 %v2794
        %v3052 = vunpack.c.h.b16 %v2794
        %v3053 = vunpack.c.l.b16 %v2795
        %v3054 = vunpack.c.l.b16 %v2796
        %v3055 = vunpack.c.h.b16 %v2796
        %v3056 = vunpack.c.l.b16 %v2797
        %v3057 = vunpack.c.l.b16 %v2798
        %v3058 = vunpack.c.h.b16 %v2798
        %v3059 = vunpack.c.l.b16 %v2799
        %v3060 = vunpack.c.l.b16 %v2800
        %v3061 = vunpack.c.h.b16 %v2800
        %v3062 = vunpack.c.l.b16 %v2801
        %v3063 = vunpack.c.l.b16 %v2802
        %v3064 = vunpack.c.h.b16 %v2802
        %v3065 = vunpack.c.l.b16 %v2803
        %v3066 = vunpack.c.l.b16 %v2804
        %v3067 = vunpack.c.h.b16 %v2804
        %v3068 = vunpack.c.l.b16 %v2805
        %v3069 = vunpack.c.l.b16 %v2806
        %v3070 = vunpack.c.h.b16 %v2806
        %v3071 = vunpack.c.l.b16 %v2807
        %v3072 = vunpack.c.l.b16 %v2808
        %v3073 = vunpack.c.h.b16 %v2808
        %v3074 = vunpack.c.l.b16 %v2809
        %v3075 = vunpack.c.l.b16 %v2810
        %v3076 = vunpack.c.h.b16 %v2810
        %v3077 = vunpack.c.l.b16 %v2811
        %v3078 = vunpack.c.l.b16 %v2812
        %v3079 = vunpack.c.h.b16 %v2812
        %v3080 = vunpack.c.l.b16 %v2813
        %v3081 = vpack.c.b16 %v2940, %v2937
        %v3082 = vpack.c.b16 %v2941, %v2938
        %v3083 = vpack.c.b16 %v2942, %v2939
        %v3084 = vpack.c.b16 %v2946, %v2943
        %v3085 = vpack.c.b16 %v2947, %v2944
        %v3086 = vpack.c.b16 %v2948, %v2945
        %v3087 = vpack.c.b16 %v2952, %v2949
        %v3088 = vpack.c.b16 %v2953, %v2950
        %v3089 = vpack.c.b16 %v2954, %v2951
        %v3090 = vpack.c.b16 %v2958, %v2955
        %v3091 = vpack.c.b16 %v2959, %v2956
        %v3092 = vpack.c.b16 %v2960, %v2957
        %v3093 = vpack.c.b16 %v2964, %v2961
        %v3094 = vpack.c.b16 %v2965, %v2962
        %v3095 = vpack.c.b16 %v2966, %v2963
        %v3096 = vpack.c.b16 %v2970, %v2967
        %v3097 = vpack.c.b16 %v2971, %v2968
        %v3098 = vpack.c.b16 %v2972, %v2969
        %v3099 = vpack.c.b16 %v2976, %v2973
        %v3100 = vpack.c.b16 %v2977, %v2974
        %v3101 = vpack.c.b16 %v2978, %v2975
        %v3102 = vpack.c.b16 %v2982, %v2979
        %v3103 = vpack.c.b16 %v2983, %v2980
        %v3104 = vpack.c.b16 %v2984, %v2981
        %v3105 = vpack.c.b16 %v2988, %v2985
        %v3106 = vpack.c.b16 %v2989, %v2986
        %v3107 = vpack.c.b16 %v2990, %v2987
        %v3108 = vpack.c.b16 %v2994, %v2991
        %v3109 = vpack.c.b16 %v2995, %v2992
        %v3110 = vpack.c.b16 %v2996, %v2993
        %v3111 = vpack.c.b16 %v3000, %v2997
        %v3112 = vpack.c.b16 %v3001, %v2998
        %v3113 = vpack.c.b16 %v3002, %v2999
        %v3114 = vpack.c.b16 %v3006, %v3003
        %v3115 = vpack.c.b16 %v3007, %v3004
        %v3116 = vpack.c.b16 %v3008, %v3005
        %v3117 = vpack.c.b16 %v3012, %v3009
        %v3118 = vpack.c.b16 %v3013, %v3010
        %v3119 = vpack.c.b16 %v3014, %v3011
        %v3120 = vpack.c.b16 %v3018, %v3015
        %v3121 = vpack.c.b16 %v3019, %v3016
        %v3122 = vpack.c.b16 %v3020, %v3017
        %v3123 = vpack.c.b16 %v3024, %v3021
        %v3124 = vpack.c.b16 %v3025, %v3022
        %v3125 = vpack.c.b16 %v3026, %v3023
        %v3126 = vpack.c.b16 %v3030, %v3027
        %v3127 = vpack.c.b16 %v3031, %v3028
        %v3128 = vpack.c.b16 %v3032, %v3029
        %v3129 = vpack.c.b16 %v3036, %v3033
        %v3130 = vpack.c.b16 %v3037, %v3034
        %v3131 = vpack.c.b16 %v3038, %v3035
        %v3132 = vpack.c.b16 %v3042, %v3039
        %v3133 = vpack.c.b16 %v3043, %v3040
        %v3134 = vpack.c.b16 %v3044, %v3041
        %v3135 = vpack.c.b16 %v3048, %v3045
        %v3136 = vpack.c.b16 %v3049, %v3046
        %v3137 = vpack.c.b16 %v3050, %v3047
        %v3138 = vpack.c.b16 %v3054, %v3051
        %v3139 = vpack.c.b16 %v3055, %v3052
        %v3140 = vpack.c.b16 %v3056, %v3053
        %v3141 = vpack.c.b16 %v3060, %v3057
        %v3142 = vpack.c.b16 %v3061, %v3058
        %v3143 = vpack.c.b16 %v3062, %v3059
        %v3144 = vpack.c.b16 %v3066, %v3063
        %v3145 = vpack.c.b16 %v3067, %v3064
        %v3146 = vpack.c.b16 %v3068, %v3065
        %v3147 = vpack.c.b16 %v3072, %v3069
        %v3148 = vpack.c.b16 %v3073, %v3070
        %v3149 = vpack.c.b16 %v3074, %v3071
        %v3150 = vpack.c.b16 %v3078, %v3075
        %v3151 = vpack.c.b16 %v3079, %v3076
        %v3152 = vpack.c.b16 %v3080, %v3077
        %3225 = vmatprep.subr.bf16.mxu0 %v3103
        %3226 = vmatpush1.bf16.msra.mxu0 %v3102
        %3227 = vmatprep.subr.bf16.mxu0 %v3100
        %3228 = vmatpush1.bf16.msra.mxu0 %v3099
        %3229 = vmatprep.subr.bf16.mxu0 %v3097
        %3230 = vmatpush1.bf16.msra.mxu0 %v3096
        %3231 = vmatprep.subr.bf16.mxu0 %v3094
        %3232 = vmatpush1.bf16.msra.mxu0 %v3093
        %3233 = vmatprep.subr.bf16.mxu0 %v3091
        %3234 = vmatpush1.bf16.msra.mxu0 %v3090
        %3235 = vmatprep.subr.bf16.mxu0 %v3088
        %3236 = vmatpush1.bf16.msra.mxu0 %v3087
        %3237 = vmatprep.subr.bf16.mxu0 %v3085
        %3238 = vmatpush1.bf16.msra.mxu0 %v3084
        %3239 = vmatprep.subr.bf16.mxu0 %v3082
        %3240 = vmatpush1.bf16.msra.mxu0 %v3081
        %3241 = vmatprep.subr.bf16.mxu0 %v3127
        %3242 = vmatpush2.bf16.msra.mxu0 %v3126
        %3243 = vmatprep.subr.bf16.mxu0 %v3124
        %3244 = vmatpush2.bf16.msra.mxu0 %v3123
        %3245 = vmatprep.subr.bf16.mxu0 %v3121
        %3246 = vmatpush2.bf16.msra.mxu0 %v3120
        %3247 = vmatprep.subr.bf16.mxu0 %v3118
        %3248 = vmatpush2.bf16.msra.mxu0 %v3117
        %3249 = vmatprep.subr.bf16.mxu0 %v3115
        %3250 = vmatpush2.bf16.msra.mxu0 %v3114
        %3251 = vmatprep.subr.bf16.mxu0 %v3112
        %3252 = vmatpush2.bf16.msra.mxu0 %v3111
        %3253 = vmatprep.subr.bf16.mxu0 %v3109
        %3254 = vmatpush2.bf16.msra.mxu0 %v3108
        %3255 = vmatprep.subr.bf16.mxu0 %v3106
        %3256 = vmatpush2.bf16.msra.mxu0 %v3105
        %3257 = vmatprep.mubr.bf16.mxu0 %v2836
        %3258 = vmatmul.mubr.bf16.gmra.mxu0 %v2835
        %v3259 = vpop.f32.mrf.mxu0
        %v3260 = vadd.f32 %v2818, %v3259
        %v3261 = vpop.f32.mrf.mxu0
        %v3262 = vadd.f32 %v2822, %v3261
        %v3263 = vpop.f32.mrf.mxu0
        %v3264 = vpop.f32.mrf.mxu0
        %3265 = vdwg.mxu0
        %3266 = vmatprep.subr.bf16.mxu0 %v3151
        %3267 = vmatpush1.bf16.msra.mxu0 %v3150
        %3268 = vmatprep.subr.bf16.mxu0 %v3148
        %3269 = vmatpush1.bf16.msra.mxu0 %v3147
        %3270 = vmatprep.subr.bf16.mxu0 %v3145
        %3271 = vmatpush1.bf16.msra.mxu0 %v3144
        %3272 = vmatprep.subr.bf16.mxu0 %v3142
        %3273 = vmatpush1.bf16.msra.mxu0 %v3141
        %3274 = vmatprep.subr.bf16.mxu0 %v3139
        %3275 = vmatpush1.bf16.msra.mxu0 %v3138
        %3276 = vmatprep.subr.bf16.mxu0 %v3136
        %3277 = vmatpush1.bf16.msra.mxu0 %v3135
        %3278 = vmatprep.subr.bf16.mxu0 %v3133
        %3279 = vmatpush1.bf16.msra.mxu0 %v3132
        %3280 = vmatprep.subr.bf16.mxu0 %v3130
        %3281 = vmatpush1.bf16.msra.mxu0 %v3129
        %3282 = vmatprep.subr.bf16.mxu0 0
        %3283 = vmatpush2.bf16.msra.mxu0 0
        %3284 = vmatprep.subr.bf16.mxu0 0
        %3285 = vmatpush2.bf16.msra.mxu0 0
        %3286 = vmatprep.subr.bf16.mxu0 0
        %3287 = vmatpush2.bf16.msra.mxu0 0
        %3288 = vmatprep.subr.bf16.mxu0 0
        %3289 = vmatpush2.bf16.msra.mxu0 0
        %3290 = vmatprep.subr.bf16.mxu0 0
        %3291 = vmatpush2.bf16.msra.mxu0 0
        %3292 = vmatprep.subr.bf16.mxu0 0
        %3293 = vmatpush2.bf16.msra.mxu0 0
        %3294 = vmatprep.subr.bf16.mxu0 0
        %3295 = vmatpush2.bf16.msra.mxu0 0
        %3296 = vmatprep.subr.bf16.mxu0 0
        %3297 = vmatpush2.bf16.msra.mxu0 0
        %3298 = vmatprep.mubr.bf16.mxu0 0
        %3299 = vmatmul.mubr.bf16.gmra.mxu0 %v2837
        %v3300 = vpop.f32.mrf.mxu0
        %v3301 = vadd.f32 %v3260, %v3300
        %v3302 = vpop.f32.mrf.mxu0
        %v3303 = vadd.f32 %v3262, %v3302
        %v3304 = vpop.f32.mrf.mxu0
        %v3305 = vpop.f32.mrf.mxu0
        %3306 = vdwg.mxu0
        %3307 = vmatprep.subr.bf16.mxu0 0
        %3308 = vmatpush1.bf16.msra.mxu0 %v3104
        %3309 = vmatprep.subr.bf16.mxu0 0
        %3310 = vmatpush1.bf16.msra.mxu0 %v3101
        %3311 = vmatprep.subr.bf16.mxu0 0
        %3312 = vmatpush1.bf16.msra.mxu0 %v3098
        %3313 = vmatprep.subr.bf16.mxu0 0
        %3314 = vmatpush1.bf16.msra.mxu0 %v3095
        %3315 = vmatprep.subr.bf16.mxu0 0
        %3316 = vmatpush1.bf16.msra.mxu0 %v3092
        %3317 = vmatprep.subr.bf16.mxu0 0
        %3318 = vmatpush1.bf16.msra.mxu0 %v3089
        %3319 = vmatprep.subr.bf16.mxu0 0
        %3320 = vmatpush1.bf16.msra.mxu0 %v3086
        %3321 = vmatprep.subr.bf16.mxu0 0
        %3322 = vmatpush1.bf16.msra.mxu0 %v3083
        %3323 = vmatprep.subr.bf16.mxu0 0
        %3324 = vmatpush2.bf16.msra.mxu0 %v3128
        %3325 = vmatprep.subr.bf16.mxu0 0
        %3326 = vmatpush2.bf16.msra.mxu0 %v3125
        %3327 = vmatprep.subr.bf16.mxu0 0
        %3328 = vmatpush2.bf16.msra.mxu0 %v3122
        %3329 = vmatprep.subr.bf16.mxu0 0
        %3330 = vmatpush2.bf16.msra.mxu0 %v3119
        %3331 = vmatprep.subr.bf16.mxu0 0
        %3332 = vmatpush2.bf16.msra.mxu0 %v3116
        %3333 = vmatprep.subr.bf16.mxu0 0
        %3334 = vmatpush2.bf16.msra.mxu0 %v3113
        %3335 = vmatprep.subr.bf16.mxu0 0
        %3336 = vmatpush2.bf16.msra.mxu0 %v3110
        %3337 = vmatprep.subr.bf16.mxu0 0
        %3338 = vmatpush2.bf16.msra.mxu0 %v3107
        %3339 = vmatprep.mubr.bf16.mxu0 %v2836
        %3340 = vmatmul.mubr.bf16.gmra.mxu0 %v2835
        %v3341 = vpop.f32.mrf.mxu0
        %v3342 = vadd.f32 %v2826, %v3341
        %v3343 = vpop.f32.mrf.mxu0
        %v3344 = vpop.f32.mrf.mxu0
        %v3345 = vpop.f32.mrf.mxu0
        %3346 = vdwg.mxu0
        %3347 = vmatprep.subr.bf16.mxu0 0
        %3348 = vmatpush1.bf16.msra.mxu0 %v3152
        %3349 = vmatprep.subr.bf16.mxu0 0
        %3350 = vmatpush1.bf16.msra.mxu0 %v3149
        %3351 = vmatprep.subr.bf16.mxu0 0
        %3352 = vmatpush1.bf16.msra.mxu0 %v3146
        %3353 = vmatprep.subr.bf16.mxu0 0
        %3354 = vmatpush1.bf16.msra.mxu0 %v3143
        %3355 = vmatprep.subr.bf16.mxu0 0
        %3356 = vmatpush1.bf16.msra.mxu0 %v3140
        %3357 = vmatprep.subr.bf16.mxu0 0
        %3358 = vmatpush1.bf16.msra.mxu0 %v3137
        %3359 = vmatprep.subr.bf16.mxu0 0
        %3360 = vmatpush1.bf16.msra.mxu0 %v3134
        %3361 = vmatprep.subr.bf16.mxu0 0
        %3362 = vmatpush1.bf16.msra.mxu0 %v3131
        %3363 = vmatprep.subr.bf16.mxu0 0
        %3364 = vmatpush2.bf16.msra.mxu0 0
        %3365 = vmatprep.subr.bf16.mxu0 0
        %3366 = vmatpush2.bf16.msra.mxu0 0
        %3367 = vmatprep.subr.bf16.mxu0 0
        %3368 = vmatpush2.bf16.msra.mxu0 0
        %3369 = vmatprep.subr.bf16.mxu0 0
        %3370 = vmatpush2.bf16.msra.mxu0 0
        %3371 = vmatprep.subr.bf16.mxu0 0
        %3372 = vmatpush2.bf16.msra.mxu0 0
        %3373 = vmatprep.subr.bf16.mxu0 0
        %3374 = vmatpush2.bf16.msra.mxu0 0
        %3375 = vmatprep.subr.bf16.mxu0 0
        %3376 = vmatpush2.bf16.msra.mxu0 0
        %3377 = vmatprep.subr.bf16.mxu0 0
        %3378 = vmatpush2.bf16.msra.mxu0 0
        %3379 = vmatprep.mubr.bf16.mxu0 0
        %3380 = vmatmul.mubr.bf16.gmra.mxu0 %v2837
        %v3381 = vpop.f32.mrf.mxu0
        %v3382 = vadd.f32 %v3342, %v3381
        %v3383 = vpop.f32.mrf.mxu0
        %v3384 = vpop.f32.mrf.mxu0
        %v3385 = vpop.f32.mrf.mxu0
        %3386 = vdwg.mxu0
        %3387 = vst [vmem:[%s242] sm:$0xff] %v3301
        %3388 = vst [vmem:[%s242 + $0x8] sm:$0xff] %v3303
        %3389 = vst [vmem:[%s242 + $0x10] sm:$0xff] %v3382
        %s3390 = sand.u32 %s119, 1
        %s3391 = scalar_lea.sflag [#allocation5], %s3390
        %s3392 = sand.u32 %s119, 1
        %s3393 = smul.addr %s3392, 24
        %s3394 = scalar_lea.vmem [#allocation9], %s3393
        // Predicated region
        $region49: #{tpu_custom_call.1} parent=35 // pred_check
          %p3395 = pneg %p129
        $region50: #{tpu_custom_call.1} parent=35 // pred_check_branch
          %3397 = sbr.rel (%p3395) target = $region52
        $region51: #{tpu_custom_call.1} parent=35 // pred_region
          %s3399 = ssub.s32 384, 384
          %3400 = vsyncadd %s3391, %s3399
          %s3401 = smul.addr %s22, 3
          %s3402 = smul.addr %s3401, 128
          %s3403 = scalar_lea.hbm %s4, %s3402
          %s3405 = sshll.u32 %s3394, 4
          %s3406 = int_to_ptr.vmem [resolvable:$true] %s3405
          %3408 = dma.vmem_to_hbm [thread:$0]  %s3406, 384, %s3403, %s3391
        $region52: #{tpu_custom_call.1} parent=35 // pred_fallthru
          _
      $region36: #{tpu_custom_call.1} parent=5 // pred_fallthru
        _
      %p3409 = scmp.le.s32.totalorder 2, %s17
      // Predicated region
      $region53: #{tpu_custom_call.1} parent=5 // pred_check
        %p3410 = pneg %p3409
      $region54: #{tpu_custom_call.1} parent=5 // pred_check_branch
        %3412 = sbr.rel (%p3410) target = $region56
      $region55: #{tpu_custom_call.1} parent=5 // pred_region
        %s3413 = ssub.s32 %s17, 2
        // Predicated region
        $region57: #{tpu_custom_call.1} parent=55 // pred_check
          %p3414 = pneg %p135
        $region58: #{tpu_custom_call.1} parent=55 // pred_check_branch
          %3416 = sbr.rel (%p3414) target = $region60
        $region59: #{tpu_custom_call.1} parent=55 // pred_region
          %s3417 = sand.u32 %s120, 1
          %s3418 = scalar_lea.sflag [#allocation5], %s3417
          %s3419 = sand.u32 %s120, 1
          %s3420 = smul.addr %s3419, 24
          %s3421 = scalar_lea.vmem [#allocation9], %s3420
          %3422 = dma.done %s3418, 384
        $region60: #{tpu_custom_call.1} parent=55 // pred_fallthru
          _
      $region56: #{tpu_custom_call.1} parent=5 // pred_fallthru
        _
    $region6: #{tpu_custom_call.1} parent=1 // loop_footer
      %s21 = sadd.s32 1, %s17
    $region7: #{tpu_custom_call.1} parent=1 // loop_footer_branch
      %16 = sbr.rel target = $region3
    $region8: #{tpu_custom_call.1} parent=1 // loop_exit
      _
    %3423 = vsyncpa [#allocation4], 1
    %s3424 = scalar_lea.sflag [#allocation4], 1
    %3425 = vsyncpa %s3424, 1
    %3426 = vsyncpa [#allocation7], 1
    %3427 = vsyncpa [#allocation5], 1
    %s3428 = scalar_lea.sflag [#allocation5], 1
    %3429 = vsyncpa %s3428, 1

</llo_original>
